<compile_context>
chip_gen: v7x
topology: tpu7x:2x2x1
jax: 0.10.0
libtpu: 0.0.40
codegen_flags: <defaults>
</compile_context>

<pallas_src>
import functools

import jax
import jax.numpy as jnp
from jax import lax
from jax.experimental import pallas as pl
from jax.experimental.pallas import tpu as pltpu

BN_EPS = 1e-5

# Scoped-VMEM budget: 32 MiB is safe on every generation (v5e default scope is
# 16 MiB, v6e default 32 MiB, v7x physical 64 MiB per TC).  On v6e this can be
# raised to 64-96 MiB together with larger spatial tiles; do NOT port that to
# v7x.
VMEM_LIMIT_BYTES = 32 * 1024 * 1024


# --------------------------------- helpers ---------------------------------- #

def _silu_host(x):
    return x * (1.0 / (1.0 + jnp.exp(-x)))


def _stable_silu(z):
    """Sign-stable SiLU: exp() only ever sees a non-positive argument, and the
    reciprocal argument is in (1, 2] (EUP slot, ~free)."""
    ez = jnp.exp(-jnp.abs(z))
    sig = jnp.where(z >= 0, 1.0, ez) * pl.reciprocal(1.0 + ez, approx=True)
    return z * sig


def _make_patches(xpad, H, W, cin):
    """xpad: (H+2, W+2, cin).  Returns (H*W, 9*cin); K ordered (ky, kx, cin)."""
    slices = [xpad[ky:ky + H, kx:kx + W, :]
              for ky in range(3) for kx in range(3)]
    return jnp.concatenate(slices, axis=-1).reshape(H * W, 9 * cin)


def _partial_stats(acc, hw, ss_ref):
    """Per-image partials for BN: [channel sum, M2 around the per-image mean]."""
    s = jnp.sum(acc, axis=0, keepdims=True)
    mean = s * (1.0 / hw)
    d = acc - mean
    ss_ref[0, 0:1, :] = s
    ss_ref[0, 1:2, :] = jnp.sum(d * d, axis=0, keepdims=True)


# ------------------------------ Pallas kernels ------------------------------ #

def conv3x3_stats_kernel(xp_ref, w_ref, y_ref, ss_ref):
    """Layer 1: 3x3 SAME conv as ONE fused (H*W, 9*Cin) x (9*Cin, Cpad) bf16
    MXU GEMM (f32 accumulation) + per-image BN stat partials."""
    _, hp, wp, cin = xp_ref.shape
    H, W = hp - 2, wp - 2
    patches = _make_patches(xp_ref[0], H, W, cin)            # bf16, no f32 copy
    acc = jnp.dot(patches, w_ref[...], preferred_element_type=jnp.float32)
    y_ref[0] = acc.astype(y_ref.dtype)                       # bf16 pre-BN out
    _partial_stats(acc, H * W, ss_ref)


def act_conv3x3_stats_kernel(H, W, y_ref, scale_ref, shift_ref, w_ref,
                             y2_ref, ss_ref):
    """Layer 2: fused (BN1 scale/shift + temb + SiLU) -> 3x3 SAME conv (fused
    GEMM, in-kernel zero halo AFTER activation) + per-image BN stat partials."""
    _, hw, cin = y_ref.shape
    z = y_ref[0].astype(jnp.float32) * scale_ref[0] + shift_ref[0]   # (hw, cin)
    a = _stable_silu(z).astype(jnp.bfloat16).reshape(H, W, cin)
    # SAME halo must be zero *after* activation -> build padded tile in VMEM.
    zr = jnp.zeros((1, W, cin), jnp.bfloat16)
    a = jnp.concatenate([zr, a, zr], axis=0)                 # (H+2, W,   cin)
    zc = jnp.zeros((H + 2, 1, cin), jnp.bfloat16)
    a = jnp.concatenate([zc, a, zc], axis=1)                 # (H+2, W+2, cin)
    patches = _make_patches(a, H, W, cin)
    acc = jnp.dot(patches, w_ref[...], preferred_element_type=jnp.float32)
    y2_ref[0] = acc.astype(y2_ref.dtype)                     # bf16 pre-BN out
    _partial_stats(acc, hw, ss_ref)


def bn_silu_kernel(y_ref, scale_ref, shift_ref, o_ref):
    """Final BN2 + SiLU: z = y*scale + shift, then sign-stable SiLU."""
    z = y_ref[...].astype(jnp.float32) * scale_ref[...] + shift_ref[...]
    o_ref[...] = _stable_silu(z).astype(o_ref.dtype)


# ------------------------------ Pallas wrappers ------------------------------ #

def _conv_stats(xp_bf16, w_flat):
    B, hp, wp, cin = xp_bf16.shape
    H, W = hp - 2, wp - 2
    hw = H * W
    k, cpad = w_flat.shape
    flops = 2 * B * hw * k * cpad
    bytes_acc = (xp_bf16.size + w_flat.size) * 2 + B * hw * cpad * 2 \
        + B * 2 * cpad * 4
    return pl.pallas_call(
        conv3x3_stats_kernel,
        grid=(B,),
        in_specs=[
            pl.BlockSpec((1, hp, wp, cin), lambda b: (b, 0, 0, 0)),
            pl.BlockSpec((k, cpad), lambda b: (0, 0)),       # resident weights
        ],
        out_specs=[
            pl.BlockSpec((1, hw, cpad), lambda b: (b, 0, 0)),
            pl.BlockSpec((1, 2, cpad), lambda b: (b, 0, 0)),
        ],
        out_shape=[
            jax.ShapeDtypeStruct((B, hw, cpad), jnp.bfloat16),
            jax.ShapeDtypeStruct((B, 2, cpad), jnp.float32),
        ],
        compiler_params=pltpu.CompilerParams(
            dimension_semantics=("parallel",),
            vmem_limit_bytes=VMEM_LIMIT_BYTES),
        cost_estimate=pl.CostEstimate(flops=int(flops), transcendentals=0,
                                      bytes_accessed=int(bytes_acc)),
    )(xp_bf16, w_flat)


def _act_conv_stats(y1, scale, shift_b, w_flat, H, W):
    B, hw, cinp = y1.shape
    k, cpad = w_flat.shape
    flops = 2 * B * hw * k * cpad
    bytes_acc = (y1.size + w_flat.size) * 2 + (B + 1) * cinp * 4 \
        + B * hw * cpad * 2 + B * 2 * cpad * 4
    kern = functools.partial(act_conv3x3_stats_kernel, H, W)
    return pl.pallas_call(
        kern,
        grid=(B,),
        in_specs=[
            pl.BlockSpec((1, hw, cinp), lambda b: (b, 0, 0)),
            pl.BlockSpec((1, 1, cinp), lambda b: (0, 0, 0)),   # BN1 scale (shared)
            pl.BlockSpec((1, 1, cinp), lambda b: (b, 0, 0)),   # shift + temb (per-batch)
            pl.BlockSpec((k, cpad), lambda b: (0, 0)),         # resident weights
        ],
        out_specs=[
            pl.BlockSpec((1, hw, cpad), lambda b: (b, 0, 0)),
            pl.BlockSpec((1, 2, cpad), lambda b: (b, 0, 0)),
        ],
        out_shape=[
            jax.ShapeDtypeStruct((B, hw, cpad), jnp.bfloat16),
            jax.ShapeDtypeStruct((B, 2, cpad), jnp.float32),
        ],
        compiler_params=pltpu.CompilerParams(
            dimension_semantics=("parallel",),
            vmem_limit_bytes=VMEM_LIMIT_BYTES),
        cost_estimate=pl.CostEstimate(flops=int(flops),
                                      transcendentals=int(B * hw * cinp),
                                      bytes_accessed=int(bytes_acc)),
    )(y1, scale.reshape(1, 1, cinp), shift_b.reshape(B, 1, cinp), w_flat)


def _bn_silu(y, scale, shift):
    B, hw, cpad = y.shape
    # Row-tile the purely memory-bound pass so BlockSpec pipelining has >2
    # grid steps even at small batch.
    if hw % 512 == 0:
        thw = 512
    elif hw % 128 == 0:
        thw = 128
    else:
        thw = hw
    n_t = hw // thw
    bytes_acc = y.size * 2 + B * hw * cpad * 4 + 2 * cpad * 4
    return pl.pallas_call(
        bn_silu_kernel,
        grid=(B, n_t),
        in_specs=[
            pl.BlockSpec((1, thw, cpad), lambda b, i: (b, i, 0)),
            pl.BlockSpec((1, 1, cpad), lambda b, i: (0, 0, 0)),
            pl.BlockSpec((1, 1, cpad), lambda b, i: (0, 0, 0)),
        ],
        out_specs=pl.BlockSpec((1, thw, cpad), lambda b, i: (b, i, 0)),
        out_shape=jax.ShapeDtypeStruct((B, hw, cpad), jnp.float32),
        compiler_params=pltpu.CompilerParams(
            dimension_semantics=("parallel", "parallel"),
            vmem_limit_bytes=VMEM_LIMIT_BYTES),
        cost_estimate=pl.CostEstimate(flops=int(4 * B * hw * cpad),
                                      transcendentals=int(B * hw * cpad),
                                      bytes_accessed=int(bytes_acc)),
    )(y, scale.reshape(1, 1, cpad), shift.reshape(1, 1, cpad))


# ------------------------------- Host-side glue ------------------------------ #

def _cpad(c):
    # Lane-dense (x128) padding only pays off at production widths; narrow
    # layers pad just to the 8-sublane granule (avoids 16x traffic at cout=8).
    return -(-c // 128) * 128 if c >= 128 else -(-c // 8) * 8


def _flatten_weight(w_oihw, cin_pad, cpad):
    """(Cout, Cin, 3, 3) -> (9*cin_pad, cpad) bf16, K ordered (ky, kx, cin)."""
    cout, cin = w_oihw.shape[0], w_oihw.shape[1]
    w = jnp.transpose(w_oihw, (2, 3, 1, 0))                  # (3, 3, Cin, Cout)
    w = jnp.pad(w, ((0, 0), (0, 0), (0, cin_pad - cin), (0, cpad - cout)))
    return w.reshape(9 * cin_pad, cpad).astype(jnp.bfloat16)


def _finalize_bn(ss, gamma, beta, n_per_image):
    """Combine per-image (sum, M2-around-image-mean) partials with the parallel
    variance (Chan) formula -- no E[x^2]-E[x]^2 cancellation -- and fold
    gamma/beta into a fused scale/shift."""
    B, _, cpad = ss.shape
    cout = gamma.shape[0]
    sum_b = ss[:, 0, :]                                      # (B, cpad)
    m2_b = ss[:, 1, :]                                       # (B, cpad)
    mean_b = sum_b / n_per_image
    mean = jnp.mean(mean_b, axis=0)                          # equal counts
    m2 = jnp.sum(m2_b, axis=0) + n_per_image * jnp.sum(
        (mean_b - mean[None, :]) ** 2, axis=0)
    var = m2 / (B * n_per_image)                             # biased, as BN uses
    g = jnp.pad(gamma, (0, cpad - cout))
    bta = jnp.pad(beta, (0, cpad - cout))
    scale = g * lax.rsqrt(var + BN_EPS)                      # (cpad,)
    shift = bta - mean * scale                               # (cpad,)
    return scale, shift


def unet_block_forward(x_nchw, t, params):
    x = jnp.transpose(x_nchw, (0, 2, 3, 1))                  # NHWC
    B, H, W, cin = x.shape
    cout1 = params["w1"].shape[0]
    cout2 = params["w2"].shape[0]
    cpad1 = _cpad(cout1)
    cpad2 = _cpad(cout2)

    # Time MLP (SiLU + Linear): tiny (B,T)x(T,Cout) -- plain JAX.
    temb = _silu_host(t) @ params["wt"] + params["bt"]       # (B, cout1)

    # ---- Layer 1: conv3x3 + BN stat partials ----
    # NOTE: conv biases are intentionally not added: a per-channel constant
    # before training-mode BatchNorm is exactly cancelled by mean subtraction.
    xp = jnp.pad(x, ((0, 0), (1, 1), (1, 1), (0, 0))).astype(jnp.bfloat16)
    w1_flat = _flatten_weight(params["w1"], cin, cpad1)
    y1, ss1 = _conv_stats(xp, w1_flat)                       # y1: (B,H*W,cpad1) bf16

    scale1, shift1 = _finalize_bn(ss1, params["g1"], params["beta1"], H * W)
    shift1_b = shift1[None, :] + jnp.pad(temb, ((0, 0), (0, cpad1 - cout1)))

    # ---- Layer 2: fused (BN1 + temb + SiLU) -> conv3x3 + BN stat partials ----
    w2_flat = _flatten_weight(params["w2"], cpad1, cpad2)
    y2, ss2 = _act_conv_stats(y1, scale1, shift1_b, w2_flat, H, W)

    scale2, shift2 = _finalize_bn(ss2, params["g2"], params["beta2"], H * W)

    # ---- BN2 + SiLU ----
    h2 = _bn_silu(y2, scale2, shift2)                        # (B, H*W, cpad2) f32
    out = h2.reshape(B, H, W, cpad2)[..., :cout2]
    return jnp.transpose(out, (0, 3, 1, 2))                  # NCHW


# ------------------------------ Pure-JAX reference --------------------------- #

def _bn_train(y, gamma, beta):
    mean = y.mean(axis=(0, 2, 3), keepdims=True)
    var = ((y - mean) ** 2).mean(axis=(0, 2, 3), keepdims=True)
    return (y - mean) / jnp.sqrt(var + BN_EPS) * gamma.reshape(1, -1, 1, 1) \
        + beta.reshape(1, -1, 1, 1)


def reference_forward(x, t, params):
    dn = ("NCHW", "OIHW", "NCHW")
    y = lax.conv_general_dilated(x, params["w1"], (1, 1), "SAME",
                                 dimension_numbers=dn)
    y = y + params["b1"].reshape(1, -1, 1, 1)
    y = _bn_train(y, params["g1"], params["beta1"])
    temb = _silu_host(t) @ params["wt"] + params["bt"]
    y = y + temb[:, :, None, None]
    y = _silu_host(y)
    y = lax.conv_general_dilated(y, params["w2"], (1, 1), "SAME",
                                 dimension_numbers=dn)
    y = y + params["b2"].reshape(1, -1, 1, 1)
    y = _bn_train(y, params["g2"], params["beta2"])
    return _silu_host(y)


# ------------------------------------ Main ----------------------------------- #

if __name__ == "__main__":
    B, in_ch, out_ch, H, W, T = 2, 4, 8, 16, 16, 32

    key = jax.random.PRNGKey(0)
    ks = jax.random.split(key, 8)
    params = {
        # conv weights in PyTorch OIHW layout; biases kept for module fidelity
        # (they are mathematically cancelled by train-mode BatchNorm).
        "w1": 0.2 * jax.random.normal(ks[0], (out_ch, in_ch, 3, 3), jnp.float32),
        "b1": 0.1 * jax.random.normal(ks[1], (out_ch,), jnp.float32),
        "w2": 0.2 * jax.random.normal(ks[2], (out_ch, out_ch, 3, 3), jnp.float32),
        "b2": 0.1 * jax.random.normal(ks[3], (out_ch,), jnp.float32),
        # time MLP linear stored as (time_emb_dim, out_ch)
        "wt": 0.2 * jax.random.normal(ks[4], (T, out_ch), jnp.float32),
        "bt": 0.1 * jax.random.normal(ks[5], (out_ch,), jnp.float32),
        # BatchNorm affine params (PyTorch init: weight=1, bias=0)
        "g1": jnp.ones((out_ch,), jnp.float32),
        "beta1": jnp.zeros((out_ch,), jnp.float32),
        "g2": jnp.ones((out_ch,), jnp.float32),
        "beta2": jnp.zeros((out_ch,), jnp.float32),
    }

    x = jax.random.normal(ks[6], (B, in_ch, H, W), jnp.float32)
    t = jax.random.normal(ks[7], (B, T), jnp.float32)

    fwd = jax.jit(unet_block_forward)
    out = jax.block_until_ready(fwd(x, t, params))
    ref = jax.block_until_ready(reference_forward(x, t, params))

    assert out.shape == (B, out_ch, H, W), out.shape
    # bf16 MXU operands / bf16 intermediates vs. a pure-f32 reference -> loose
    # tolerance.
    if not jnp.allclose(out, ref, atol=5e-2, rtol=5e-2):
        raise AssertionError(
            f"mismatch: max abs diff = {float(jnp.max(jnp.abs(out - ref)))}")

    print("KERNEL_OK")
</pallas_src>

<mosaic_0001>
module attributes {stable_mosaic.version = 11 : i64} {
  func.func @conv3x3_stats_kernel(%arg0: i32, %arg1: memref<1x18x18x4xbf16, #tpu.memory_space<vmem>>, %arg2: memref<36x8xbf16, #tpu.memory_space<vmem>>, %arg3: memref<1x256x8xbf16, #tpu.memory_space<vmem>>, %arg4: memref<1x2x8xf32, #tpu.memory_space<vmem>>) attributes {dimension_semantics = [#tpu.dimension_semantics<parallel>], iteration_bounds = array<i64: 2>, scalar_prefetch = 0 : i64, scratch_operands = 0 : i64, tpu.core_type = #tpu.core_type<tc>, window_params = [{transform_indices = @transform_0, window_bounds = array<i64: 1, 18, 18, 4>}, {pipeline_mode = #tpu.pipeline_mode<synchronous>, transform_indices = @transform_1, window_bounds = array<i64: 36, 8>}, {transform_indices = @transform_2, window_bounds = array<i64: 1, 256, 8>}, {transform_indices = @transform_3, window_bounds = array<i64: 1, 2, 8>}]} {
    %c0 = arith.constant 0 : index
    %c0_0 = arith.constant 0 : index
    %c0_1 = arith.constant 0 : index
    %c0_2 = arith.constant 0 : index
    %0 = vector.load %arg1[%c0, %c0_0, %c0_1, %c0_2] : memref<1x18x18x4xbf16, #tpu.memory_space<vmem>>, vector<1x18x18x4xbf16>
    %1 = vector.shape_cast %0 : vector<1x18x18x4xbf16> to vector<18x18x4xbf16>
    %2 = vector.extract_strided_slice %1 {offsets = [0, 0, 0], sizes = [16, 16, 4], strides = [1, 1, 1]} : vector<18x18x4xbf16> to vector<16x16x4xbf16>
    %3 = vector.extract_strided_slice %1 {offsets = [0, 1, 0], sizes = [16, 16, 4], strides = [1, 1, 1]} : vector<18x18x4xbf16> to vector<16x16x4xbf16>
    %4 = vector.extract_strided_slice %1 {offsets = [0, 2, 0], sizes = [16, 16, 4], strides = [1, 1, 1]} : vector<18x18x4xbf16> to vector<16x16x4xbf16>
    %5 = vector.extract_strided_slice %1 {offsets = [1, 0, 0], sizes = [16, 16, 4], strides = [1, 1, 1]} : vector<18x18x4xbf16> to vector<16x16x4xbf16>
    %6 = vector.extract_strided_slice %1 {offsets = [1, 1, 0], sizes = [16, 16, 4], strides = [1, 1, 1]} : vector<18x18x4xbf16> to vector<16x16x4xbf16>
    %7 = vector.extract_strided_slice %1 {offsets = [1, 2, 0], sizes = [16, 16, 4], strides = [1, 1, 1]} : vector<18x18x4xbf16> to vector<16x16x4xbf16>
    %8 = vector.extract_strided_slice %1 {offsets = [2, 0, 0], sizes = [16, 16, 4], strides = [1, 1, 1]} : vector<18x18x4xbf16> to vector<16x16x4xbf16>
    %9 = vector.extract_strided_slice %1 {offsets = [2, 1, 0], sizes = [16, 16, 4], strides = [1, 1, 1]} : vector<18x18x4xbf16> to vector<16x16x4xbf16>
    %10 = vector.extract_strided_slice %1 {offsets = [2, 2, 0], sizes = [16, 16, 4], strides = [1, 1, 1]} : vector<18x18x4xbf16> to vector<16x16x4xbf16>
    %11 = tpu.concatenate %2, %3, %4, %5, %6, %7, %8, %9, %10 in 2 : vector<16x16x4xbf16>, vector<16x16x4xbf16>, vector<16x16x4xbf16>, vector<16x16x4xbf16>, vector<16x16x4xbf16>, vector<16x16x4xbf16>, vector<16x16x4xbf16>, vector<16x16x4xbf16>, vector<16x16x4xbf16> -> vector<16x16x36xbf16>
    %12 = vector.shape_cast %11 : vector<16x16x36xbf16> to vector<256x36xbf16>
    %c0_3 = arith.constant 0 : index
    %c0_4 = arith.constant 0 : index
    %13 = vector.load %arg2[%c0_3, %c0_4] : memref<36x8xbf16, #tpu.memory_space<vmem>>, vector<36x8xbf16>
    %cst = arith.constant dense<0.000000e+00> : vector<256x8xf32>
    %14 = tpu.matmul %12, %13, %cst {dimension_numbers = #tpu.dot_dimension_numbers<[1], [0], [0], [1], [0, 0, 1, 1], [], []>} : vector<256x36xbf16>, vector<36x8xbf16>, vector<256x8xf32> -> vector<256x8xf32>
    %15 = arith.truncf %14 : vector<256x8xf32> to vector<256x8xbf16>
    %c0_5 = arith.constant 0 : index
    %c0_6 = arith.constant 0 : index
    %c0_7 = arith.constant 0 : index
    %16 = vector.load %arg3[%c0_5, %c0_6, %c0_7] : memref<1x256x8xbf16, #tpu.memory_space<vmem>>, vector<1x256x8xbf16>
    %17 = vector.shape_cast %16 : vector<1x256x8xbf16> to vector<256x8xbf16>
    %18 = vector.shape_cast %15 : vector<256x8xbf16> to vector<1x256x8xbf16>
    tpu.vector_store %arg3[%c0_5, %c0_6, %c0_7], %18 {strides = array<i32>} : memref<1x256x8xbf16, #tpu.memory_space<vmem>>, vector<1x256x8xbf16>,
    %cst_8 = arith.constant dense<0.000000e+00> : vector<8xf32>
    %19 = vector.multi_reduction <add>, %14, %cst_8 [0] : vector<256x8xf32> to vector<8xf32>
    %20 = vector.shape_cast %19 : vector<8xf32> to vector<1x8xf32>
    %cst_9 = arith.constant 3.906250e-03 : f32
    %21 = vector.broadcast %cst_9 : f32 to vector<1x8xf32>
    %22 = arith.mulf %20, %21 : vector<1x8xf32>
    %23 = vector.broadcast %22 : vector<1x8xf32> to vector<256x8xf32>
    %24 = arith.subf %14, %23 : vector<256x8xf32>
    %c0_10 = arith.constant 0 : index
    %c0_11 = arith.constant 0 : index
    %c0_12 = arith.constant 0 : index
    %25 = vector.load %arg4[%c0_10, %c0_11, %c0_12] : memref<1x2x8xf32, #tpu.memory_space<vmem>>, vector<1x1x8xf32>
    %26 = vector.shape_cast %25 : vector<1x1x8xf32> to vector<1x8xf32>
    %27 = vector.shape_cast %20 : vector<1x8xf32> to vector<1x1x8xf32>
    tpu.vector_store %arg4[%c0_10, %c0_11, %c0_12], %27 {strides = array<i32>} : memref<1x2x8xf32, #tpu.memory_space<vmem>>, vector<1x1x8xf32>,
    %28 = arith.mulf %24, %24 : vector<256x8xf32>
    %cst_13 = arith.constant dense<0.000000e+00> : vector<8xf32>
    %29 = vector.multi_reduction <add>, %28, %cst_13 [0] : vector<256x8xf32> to vector<8xf32>
    %30 = vector.shape_cast %29 : vector<8xf32> to vector<1x8xf32>
    %c0_14 = arith.constant 0 : index
    %c1 = arith.constant 1 : index
    %c0_15 = arith.constant 0 : index
    %31 = vector.load %arg4[%c0_14, %c1, %c0_15] : memref<1x2x8xf32, #tpu.memory_space<vmem>>, vector<1x1x8xf32>
    %32 = vector.shape_cast %31 : vector<1x1x8xf32> to vector<1x8xf32>
    %33 = vector.shape_cast %30 : vector<1x8xf32> to vector<1x1x8xf32>
    tpu.vector_store %arg4[%c0_14, %c1, %c0_15], %33 {strides = array<i32>} : memref<1x2x8xf32, #tpu.memory_space<vmem>>, vector<1x1x8xf32>,
    return
  }
  func.func @transform_0(%arg0: i32) -> (i32, i32, i32, i32) {
    %c0_i32 = arith.constant 0 : i32
    %c0_i32_0 = arith.constant 0 : i32
    %c0_i32_1 = arith.constant 0 : i32
    %c0_i32_2 = arith.constant 0 : i32
    return %arg0, %c0_i32, %c0_i32_0, %c0_i32_1 : i32, i32, i32, i32
  }
  func.func @transform_1(%arg0: i32) -> (i32, i32) {
    %c0_i32 = arith.constant 0 : i32
    %c0_i32_0 = arith.constant 0 : i32
    %c0_i32_1 = arith.constant 0 : i32
    return %c0_i32, %c0_i32_0 : i32, i32
  }
  func.func @transform_2(%arg0: i32) -> (i32, i32, i32) {
    %c0_i32 = arith.constant 0 : i32
    %c0_i32_0 = arith.constant 0 : i32
    %c0_i32_1 = arith.constant 0 : i32
    return %arg0, %c0_i32, %c0_i32_0 : i32, i32, i32
  }
  func.func @transform_3(%arg0: i32) -> (i32, i32, i32) {
    %c0_i32 = arith.constant 0 : i32
    %c0_i32_0 = arith.constant 0 : i32
    %c0_i32_1 = arith.constant 0 : i32
    return %arg0, %c0_i32, %c0_i32_0 : i32, i32, i32
  }
}

module attributes {stable_mosaic.version = 11 : i64} {
  func.func @act_conv3x3_stats_kernel(%arg0: i32, %arg1: memref<1x256x8xbf16, #tpu.memory_space<vmem>>, %arg2: memref<1x1x8xf32, #tpu.memory_space<vmem>>, %arg3: memref<1x1x8xf32, #tpu.memory_space<vmem>>, %arg4: memref<72x8xbf16, #tpu.memory_space<vmem>>, %arg5: memref<1x256x8xbf16, #tpu.memory_space<vmem>>, %arg6: memref<1x2x8xf32, #tpu.memory_space<vmem>>) attributes {dimension_semantics = [#tpu.dimension_semantics<parallel>], iteration_bounds = array<i64: 2>, scalar_prefetch = 0 : i64, scratch_operands = 0 : i64, tpu.core_type = #tpu.core_type<tc>, window_params = [{transform_indices = @transform_0, window_bounds = array<i64: 1, 256, 8>}, {pipeline_mode = #tpu.pipeline_mode<synchronous>, transform_indices = @transform_1, window_bounds = array<i64: 1, 1, 8>}, {transform_indices = @transform_2, window_bounds = array<i64: 1, 1, 8>}, {pipeline_mode = #tpu.pipeline_mode<synchronous>, transform_indices = @transform_3, window_bounds = array<i64: 72, 8>}, {transform_indices = @transform_4, window_bounds = array<i64: 1, 256, 8>}, {transform_indices = @transform_5, window_bounds = array<i64: 1, 2, 8>}]} {
    %c0 = arith.constant 0 : index
    %c0_0 = arith.constant 0 : index
    %c0_1 = arith.constant 0 : index
    %0 = vector.load %arg1[%c0, %c0_0, %c0_1] : memref<1x256x8xbf16, #tpu.memory_space<vmem>>, vector<1x256x8xbf16>
    %1 = vector.shape_cast %0 : vector<1x256x8xbf16> to vector<256x8xbf16>
    %2 = arith.extf %1 : vector<256x8xbf16> to vector<256x8xf32>
    %c0_2 = arith.constant 0 : index
    %c0_3 = arith.constant 0 : index
    %c0_4 = arith.constant 0 : index
    %3 = vector.load %arg2[%c0_2, %c0_3, %c0_4] : memref<1x1x8xf32, #tpu.memory_space<vmem>>, vector<1x1x8xf32>
    %4 = vector.shape_cast %3 : vector<1x1x8xf32> to vector<1x8xf32>
    %5 = vector.broadcast %4 : vector<1x8xf32> to vector<256x8xf32>
    %6 = arith.mulf %2, %5 : vector<256x8xf32>
    %c0_5 = arith.constant 0 : index
    %c0_6 = arith.constant 0 : index
    %c0_7 = arith.constant 0 : index
    %7 = vector.load %arg3[%c0_5, %c0_6, %c0_7] : memref<1x1x8xf32, #tpu.memory_space<vmem>>, vector<1x1x8xf32>
    %8 = vector.shape_cast %7 : vector<1x1x8xf32> to vector<1x8xf32>
    %9 = vector.broadcast %8 : vector<1x8xf32> to vector<256x8xf32>
    %10 = arith.addf %6, %9 : vector<256x8xf32>
    %11 = math.absf %10 : vector<256x8xf32>
    %cst = arith.constant 0.000000e+00 : f32
    %12 = vector.broadcast %cst : f32 to vector<256x8xf32>
    %13 = arith.subf %12, %11 : vector<256x8xf32>
    %14 = math.exp %13 : vector<256x8xf32>
    %cst_8 = arith.constant 0.000000e+00 : f32
    %15 = vector.broadcast %cst_8 : f32 to vector<256x8xf32>
    %16 = arith.cmpf oge, %10, %15 : vector<256x8xf32>
    %cst_9 = arith.constant 1.000000e+00 : f32
    %17 = vector.broadcast %cst_9 : f32 to vector<256x8xf32>
    %18 = arith.select %16, %17, %14 : vector<256x8xi1>, vector<256x8xf32>
    %cst_10 = arith.constant 1.000000e+00 : f32
    %19 = vector.broadcast %cst_10 : f32 to vector<256x8xf32>
    %20 = arith.addf %19, %14 : vector<256x8xf32>
    %21 = tpu.reciprocal %20 {approx = true} : vector<256x8xf32> -> vector<256x8xf32>
    %22 = arith.mulf %18, %21 : vector<256x8xf32>
    %23 = arith.mulf %10, %22 : vector<256x8xf32>
    %24 = arith.truncf %23 : vector<256x8xf32> to vector<256x8xbf16>
    %25 = vector.shape_cast %24 : vector<256x8xbf16> to vector<16x16x8xbf16>
    %cst_11 = arith.constant 0.000000e+00 : bf16
    %26 = vector.broadcast %cst_11 : bf16 to vector<1x16x8xbf16>
    %27 = tpu.concatenate %26, %25, %26 in 0 : vector<1x16x8xbf16>, vector<16x16x8xbf16>, vector<1x16x8xbf16> -> vector<18x16x8xbf16>
    %cst_12 = arith.constant 0.000000e+00 : bf16
    %28 = vector.broadcast %cst_12 : bf16 to vector<18x1x8xbf16>
    %29 = tpu.concatenate %28, %27, %28 in 1 : vector<18x1x8xbf16>, vector<18x16x8xbf16>, vector<18x1x8xbf16> -> vector<18x18x8xbf16>
    %30 = vector.extract_strided_slice %29 {offsets = [0, 0, 0], sizes = [16, 16, 8], strides = [1, 1, 1]} : vector<18x18x8xbf16> to vector<16x16x8xbf16>
    %31 = vector.extract_strided_slice %29 {offsets = [0, 1, 0], sizes = [16, 16, 8], strides = [1, 1, 1]} : vector<18x18x8xbf16> to vector<16x16x8xbf16>
    %32 = vector.extract_strided_slice %29 {offsets = [0, 2, 0], sizes = [16, 16, 8], strides = [1, 1, 1]} : vector<18x18x8xbf16> to vector<16x16x8xbf16>
    %33 = vector.extract_strided_slice %29 {offsets = [1, 0, 0], sizes = [16, 16, 8], strides = [1, 1, 1]} : vector<18x18x8xbf16> to vector<16x16x8xbf16>
    %34 = vector.extract_strided_slice %29 {offsets = [1, 1, 0], sizes = [16, 16, 8], strides = [1, 1, 1]} : vector<18x18x8xbf16> to vector<16x16x8xbf16>
    %35 = vector.extract_strided_slice %29 {offsets = [1, 2, 0], sizes = [16, 16, 8], strides = [1, 1, 1]} : vector<18x18x8xbf16> to vector<16x16x8xbf16>
    %36 = vector.extract_strided_slice %29 {offsets = [2, 0, 0], sizes = [16, 16, 8], strides = [1, 1, 1]} : vector<18x18x8xbf16> to vector<16x16x8xbf16>
    %37 = vector.extract_strided_slice %29 {offsets = [2, 1, 0], sizes = [16, 16, 8], strides = [1, 1, 1]} : vector<18x18x8xbf16> to vector<16x16x8xbf16>
    %38 = vector.extract_strided_slice %29 {offsets = [2, 2, 0], sizes = [16, 16, 8], strides = [1, 1, 1]} : vector<18x18x8xbf16> to vector<16x16x8xbf16>
    %39 = tpu.concatenate %30, %31, %32, %33, %34, %35, %36, %37, %38 in 2 : vector<16x16x8xbf16>, vector<16x16x8xbf16>, vector<16x16x8xbf16>, vector<16x16x8xbf16>, vector<16x16x8xbf16>, vector<16x16x8xbf16>, vector<16x16x8xbf16>, vector<16x16x8xbf16>, vector<16x16x8xbf16> -> vector<16x16x72xbf16>
    %40 = vector.shape_cast %39 : vector<16x16x72xbf16> to vector<256x72xbf16>
    %c0_13 = arith.constant 0 : index
    %c0_14 = arith.constant 0 : index
    %41 = vector.load %arg4[%c0_13, %c0_14] : memref<72x8xbf16, #tpu.memory_space<vmem>>, vector<72x8xbf16>
    %cst_15 = arith.constant dense<0.000000e+00> : vector<256x8xf32>
    %42 = tpu.matmul %40, %41, %cst_15 {dimension_numbers = #tpu.dot_dimension_numbers<[1], [0], [0], [1], [0, 0, 1, 1], [], []>} : vector<256x72xbf16>, vector<72x8xbf16>, vector<256x8xf32> -> vector<256x8xf32>
    %43 = arith.truncf %42 : vector<256x8xf32> to vector<256x8xbf16>
    %c0_16 = arith.constant 0 : index
    %c0_17 = arith.constant 0 : index
    %c0_18 = arith.constant 0 : index
    %44 = vector.load %arg5[%c0_16, %c0_17, %c0_18] : memref<1x256x8xbf16, #tpu.memory_space<vmem>>, vector<1x256x8xbf16>
    %45 = vector.shape_cast %44 : vector<1x256x8xbf16> to vector<256x8xbf16>
    %46 = vector.shape_cast %43 : vector<256x8xbf16> to vector<1x256x8xbf16>
    tpu.vector_store %arg5[%c0_16, %c0_17, %c0_18], %46 {strides = array<i32>} : memref<1x256x8xbf16, #tpu.memory_space<vmem>>, vector<1x256x8xbf16>,
    %cst_19 = arith.constant dense<0.000000e+00> : vector<8xf32>
    %47 = vector.multi_reduction <add>, %42, %cst_19 [0] : vector<256x8xf32> to vector<8xf32>
    %48 = vector.shape_cast %47 : vector<8xf32> to vector<1x8xf32>
    %cst_20 = arith.constant 3.906250e-03 : f32
    %49 = vector.broadcast %cst_20 : f32 to vector<1x8xf32>
    %50 = arith.mulf %48, %49 : vector<1x8xf32>
    %51 = vector.broadcast %50 : vector<1x8xf32> to vector<256x8xf32>
    %52 = arith.subf %42, %51 : vector<256x8xf32>
    %c0_21 = arith.constant 0 : index
    %c0_22 = arith.constant 0 : index
    %c0_23 = arith.constant 0 : index
    %53 = vector.load %arg6[%c0_21, %c0_22, %c0_23] : memref<1x2x8xf32, #tpu.memory_space<vmem>>, vector<1x1x8xf32>
    %54 = vector.shape_cast %53 : vector<1x1x8xf32> to vector<1x8xf32>
    %55 = vector.shape_cast %48 : vector<1x8xf32> to vector<1x1x8xf32>
    tpu.vector_store %arg6[%c0_21, %c0_22, %c0_23], %55 {strides = array<i32>} : memref<1x2x8xf32, #tpu.memory_space<vmem>>, vector<1x1x8xf32>,
    %56 = arith.mulf %52, %52 : vector<256x8xf32>
    %cst_24 = arith.constant dense<0.000000e+00> : vector<8xf32>
    %57 = vector.multi_reduction <add>, %56, %cst_24 [0] : vector<256x8xf32> to vector<8xf32>
    %58 = vector.shape_cast %57 : vector<8xf32> to vector<1x8xf32>
    %c0_25 = arith.constant 0 : index
    %c1 = arith.constant 1 : index
    %c0_26 = arith.constant 0 : index
    %59 = vector.load %arg6[%c0_25, %c1, %c0_26] : memref<1x2x8xf32, #tpu.memory_space<vmem>>, vector<1x1x8xf32>
    %60 = vector.shape_cast %59 : vector<1x1x8xf32> to vector<1x8xf32>
    %61 = vector.shape_cast %58 : vector<1x8xf32> to vector<1x1x8xf32>
    tpu.vector_store %arg6[%c0_25, %c1, %c0_26], %61 {strides = array<i32>} : memref<1x2x8xf32, #tpu.memory_space<vmem>>, vector<1x1x8xf32>,
    return
  }
  func.func @transform_0(%arg0: i32) -> (i32, i32, i32) {
    %c0_i32 = arith.constant 0 : i32
    %c0_i32_0 = arith.constant 0 : i32
    %c0_i32_1 = arith.constant 0 : i32
    return %arg0, %c0_i32, %c0_i32_0 : i32, i32, i32
  }
  func.func @transform_1(%arg0: i32) -> (i32, i32, i32) {
    %c0_i32 = arith.constant 0 : i32
    %c0_i32_0 = arith.constant 0 : i32
    %c0_i32_1 = arith.constant 0 : i32
    %c0_i32_2 = arith.constant 0 : i32
    return %c0_i32, %c0_i32_0, %c0_i32_1 : i32, i32, i32
  }
  func.func @transform_2(%arg0: i32) -> (i32, i32, i32) {
    %c0_i32 = arith.constant 0 : i32
    %c0_i32_0 = arith.constant 0 : i32
    %c0_i32_1 = arith.constant 0 : i32
    return %arg0, %c0_i32, %c0_i32_0 : i32, i32, i32
  }
  func.func @transform_3(%arg0: i32) -> (i32, i32) {
    %c0_i32 = arith.constant 0 : i32
    %c0_i32_0 = arith.constant 0 : i32
    %c0_i32_1 = arith.constant 0 : i32
    return %c0_i32, %c0_i32_0 : i32, i32
  }
  func.func @transform_4(%arg0: i32) -> (i32, i32, i32) {
    %c0_i32 = arith.constant 0 : i32
    %c0_i32_0 = arith.constant 0 : i32
    %c0_i32_1 = arith.constant 0 : i32
    return %arg0, %c0_i32, %c0_i32_0 : i32, i32, i32
  }
  func.func @transform_5(%arg0: i32) -> (i32, i32, i32) {
    %c0_i32 = arith.constant 0 : i32
    %c0_i32_0 = arith.constant 0 : i32
    %c0_i32_1 = arith.constant 0 : i32
    return %arg0, %c0_i32, %c0_i32_0 : i32, i32, i32
  }
}

module attributes {stable_mosaic.version = 11 : i64} {
  func.func @bn_silu_kernel(%arg0: i32, %arg1: i32, %arg2: memref<1x128x8xbf16, #tpu.memory_space<vmem>>, %arg3: memref<1x1x8xf32, #tpu.memory_space<vmem>>, %arg4: memref<1x1x8xf32, #tpu.memory_space<vmem>>, %arg5: memref<1x128x8xf32, #tpu.memory_space<vmem>>) attributes {dimension_semantics = [#tpu.dimension_semantics<parallel>, #tpu.dimension_semantics<parallel>], iteration_bounds = array<i64: 2, 2>, scalar_prefetch = 0 : i64, scratch_operands = 0 : i64, tpu.core_type = #tpu.core_type<tc>, window_params = [{transform_indices = @transform_0, window_bounds = array<i64: 1, 128, 8>}, {pipeline_mode = #tpu.pipeline_mode<synchronous>, transform_indices = @transform_1, window_bounds = array<i64: 1, 1, 8>}, {pipeline_mode = #tpu.pipeline_mode<synchronous>, transform_indices = @transform_2, window_bounds = array<i64: 1, 1, 8>}, {transform_indices = @transform_3, window_bounds = array<i64: 1, 128, 8>}]} {
    %c0 = arith.constant 0 : index
    %c0_0 = arith.constant 0 : index
    %c0_1 = arith.constant 0 : index
    %0 = vector.load %arg2[%c0, %c0_0, %c0_1] : memref<1x128x8xbf16, #tpu.memory_space<vmem>>, vector<1x128x8xbf16>
    %1 = arith.extf %0 : vector<1x128x8xbf16> to vector<1x128x8xf32>
    %c0_2 = arith.constant 0 : index
    %c0_3 = arith.constant 0 : index
    %c0_4 = arith.constant 0 : index
    %2 = vector.load %arg3[%c0_2, %c0_3, %c0_4] : memref<1x1x8xf32, #tpu.memory_space<vmem>>, vector<1x1x8xf32>
    %3 = vector.broadcast %2 : vector<1x1x8xf32> to vector<1x128x8xf32>
    %4 = arith.mulf %1, %3 : vector<1x128x8xf32>
    %c0_5 = arith.constant 0 : index
    %c0_6 = arith.constant 0 : index
    %c0_7 = arith.constant 0 : index
    %5 = vector.load %arg4[%c0_5, %c0_6, %c0_7] : memref<1x1x8xf32, #tpu.memory_space<vmem>>, vector<1x1x8xf32>
    %6 = vector.broadcast %5 : vector<1x1x8xf32> to vector<1x128x8xf32>
    %7 = arith.addf %4, %6 : vector<1x128x8xf32>
    %8 = math.absf %7 : vector<1x128x8xf32>
    %cst = arith.constant 0.000000e+00 : f32
    %9 = vector.broadcast %cst : f32 to vector<1x128x8xf32>
    %10 = arith.subf %9, %8 : vector<1x128x8xf32>
    %11 = math.exp %10 : vector<1x128x8xf32>
    %cst_8 = arith.constant 0.000000e+00 : f32
    %12 = vector.broadcast %cst_8 : f32 to vector<1x128x8xf32>
    %13 = arith.cmpf oge, %7, %12 : vector<1x128x8xf32>
    %cst_9 = arith.constant 1.000000e+00 : f32
    %14 = vector.broadcast %cst_9 : f32 to vector<1x128x8xf32>
    %15 = arith.select %13, %14, %11 : vector<1x128x8xi1>, vector<1x128x8xf32>
    %cst_10 = arith.constant 1.000000e+00 : f32
    %16 = vector.broadcast %cst_10 : f32 to vector<1x128x8xf32>
    %17 = arith.addf %16, %11 : vector<1x128x8xf32>
    %18 = tpu.reciprocal %17 {approx = true} : vector<1x128x8xf32> -> vector<1x128x8xf32>
    %19 = arith.mulf %15, %18 : vector<1x128x8xf32>
    %20 = arith.mulf %7, %19 : vector<1x128x8xf32>
    %c0_11 = arith.constant 0 : index
    %c0_12 = arith.constant 0 : index
    %c0_13 = arith.constant 0 : index
    %21 = vector.load %arg5[%c0_11, %c0_12, %c0_13] : memref<1x128x8xf32, #tpu.memory_space<vmem>>, vector<1x128x8xf32>
    tpu.vector_store %arg5[%c0_11, %c0_12, %c0_13], %20 {strides = array<i32>} : memref<1x128x8xf32, #tpu.memory_space<vmem>>, vector<1x128x8xf32>,
    return
  }
  func.func @transform_0(%arg0: i32, %arg1: i32) -> (i32, i32, i32) {
    %c0_i32 = arith.constant 0 : i32
    %c0_i32_0 = arith.constant 0 : i32
    return %arg0, %arg1, %c0_i32 : i32, i32, i32
  }
  func.func @transform_1(%arg0: i32, %arg1: i32) -> (i32, i32, i32) {
    %c0_i32 = arith.constant 0 : i32
    %c0_i32_0 = arith.constant 0 : i32
    %c0_i32_1 = arith.constant 0 : i32
    %c0_i32_2 = arith.constant 0 : i32
    return %c0_i32, %c0_i32_0, %c0_i32_1 : i32, i32, i32
  }
  func.func @transform_2(%arg0: i32, %arg1: i32) -> (i32, i32, i32) {
    %c0_i32 = arith.constant 0 : i32
    %c0_i32_0 = arith.constant 0 : i32
    %c0_i32_1 = arith.constant 0 : i32
    %c0_i32_2 = arith.constant 0 : i32
    return %c0_i32, %c0_i32_0, %c0_i32_1 : i32, i32, i32
  }
  func.func @transform_3(%arg0: i32, %arg1: i32) -> (i32, i32, i32) {
    %c0_i32 = arith.constant 0 : i32
    %c0_i32_0 = arith.constant 0 : i32
    return %arg0, %arg1, %c0_i32 : i32, i32, i32
  }
}

</mosaic_0001>

<llo_original>
// kernel: unet_block_forward.5
$region0: #{unet_block_forward.5}
  #allocation0 [shape = 'u32[]', space=smem, size = 0x4, offset = 0x4, fixed_abs, tag = 'smem constant byte address 0x4 - core index']
  #allocation1 [shape = 'u32[144,128]{1,0:T(1,128)}', space=vmem, size = 0x12000, scoped, tag = 'internal scratch']
  %s0 = inlined_call_operand.vmem [shape: bf16[2,256,8], index: 0, kind: input, shape index: {}]
  %s1 = inlined_call_operand.vmem [shape: f32[1,1,8], index: 1, kind: input, shape index: {}]
  %s2 = inlined_call_operand.vmem [shape: f32[1,1,8], index: 2, kind: input, shape index: {}]
  %s3 = inlined_call_operand.vmem [shape: f32[2,256,8], index: 3, kind: output, shape index: {}]
  %s4 = sld [smem:[#allocation0]]
  $region45: #{unet_block_forward.5} parent=0
    _
  %s6 = ssub.s32 1, %s4
  %s7 = scalar_select 0, %s6, %s4
  loop: start=0, step=1, limit=6
  $region2: #{unet_block_forward.5} parent=0 // loop_pre_header
    _
  $region3: #{unet_block_forward.5} parent=0 // loop_header
    %s9 = sphi 0, %s13
    %p10 = scmp.ge.s32.totalorder %s9, 6
    %s16 = sphi 0, %s28
    %s17 = sphi 0, %s24
    %s18 = sphi 0, %s16
    %s19 = sphi 0, %s17
    %s20 = sphi 0, %s18
    %s21 = sphi 0, %s19
    %s33 = sphi 0, %s35
    %s36 = sphi 0, %s33
    %s37 = sphi 0, %s36
    %s53 = sphi 0, %s37
    %s57 = sphi 0, %s57
    %s59 = sphi 0, %s57
    %s60 = sphi 0, %s59
    %s74 = sphi 0, %s60
    %s78 = sphi 0, %s78
    %s80 = sphi 0, %s78
    %s81 = sphi 0, %s80
    %s95 = sphi 0, %s81
    %s103 = sphi 0, %s105
    %s106 = sphi 0, %s103
    %s107 = sphi 0, %s106
    %s123 = sphi 0, %s107
  $region4: #{unet_block_forward.5} parent=0 // loop_header_branch
    %12 = sbr.rel (%p10) target = $region8
  $region5: #{unet_block_forward.5} parent=0 // loop_body
    %s14 = ssub.s32 %s9, 1
    %s15 = ssub.s32 %s9, 2
    %s22 = sadd.s32 1, %s17
    %p23 = scmp.ge.s32.totalorder %s22, 2
    %s24 = scalar_select %p23, 0, %s22
    %s25 = sadd.s32 1, %s16
    %s26 = scalar_select %p23, %s25, %s16
    %p27 = scmp.ge.s32.totalorder %s26, 2
    %s28 = scalar_select %p27, 0, %s26
    %s29 = ssub.s32 %s16, %s28
    %s30 = ssub.s32 %s17, %s24
    %s31 = sor.u32 %s29, %s30
    %p32 = scmp.eq.s32.totalorder %s31, 0
    %s34 = sadd.s32 %s33, 1
    %s35 = scalar_select %p32, %s33, %s34
    %p38 = pneg %p32
    %p39 = scmp.eq.s32.totalorder %s9, 3
    %p40 = por %p38, %p39
    %p41 = scmp.ne.s32.totalorder %s33, %s36
    %p42 = scmp.eq.s32.totalorder %s9, 0
    %p43 = por %p41, %p42
    %p44 = scmp.ne.s32.totalorder %s33, %s36
    %p45 = scmp.eq.s32.totalorder %s14, 3
    %p46 = por %p44, %p45
    %p47 = scmp.ne.s32.totalorder %s36, %s37
    %p48 = scmp.eq.s32.totalorder %s14, 0
    %p49 = por %p47, %p48
    %p50 = scmp.ne.s32.totalorder %s36, %s37
    %p51 = scmp.eq.s32.totalorder %s15, 3
    %p52 = por %p50, %p51
    %p54 = scmp.ne.s32.totalorder %s37, %s53
    %p55 = scmp.eq.s32.totalorder %s15, 0
    %p56 = por %p54, %p55
    %s58 = sadd.s32 %s57, 1
    %p61 = scmp.eq.s32.totalorder %s9, 3
    %p62 = scmp.ne.s32.totalorder %s57, %s59
    %p63 = scmp.eq.s32.totalorder %s9, 0
    %p64 = por %p62, %p63
    %p65 = scmp.ne.s32.totalorder %s57, %s59
    %p66 = scmp.eq.s32.totalorder %s14, 3
    %p67 = por %p65, %p66
    %p68 = scmp.ne.s32.totalorder %s59, %s60
    %p69 = scmp.eq.s32.totalorder %s14, 0
    %p70 = por %p68, %p69
    %p71 = scmp.ne.s32.totalorder %s59, %s60
    %p72 = scmp.eq.s32.totalorder %s15, 3
    %p73 = por %p71, %p72
    %p75 = scmp.ne.s32.totalorder %s60, %s74
    %p76 = scmp.eq.s32.totalorder %s15, 0
    %p77 = por %p75, %p76
    %s79 = sadd.s32 %s78, 1
    %p82 = scmp.eq.s32.totalorder %s9, 3
    %p83 = scmp.ne.s32.totalorder %s78, %s80
    %p84 = scmp.eq.s32.totalorder %s9, 0
    %p85 = por %p83, %p84
    %p86 = scmp.ne.s32.totalorder %s78, %s80
    %p87 = scmp.eq.s32.totalorder %s14, 3
    %p88 = por %p86, %p87
    %p89 = scmp.ne.s32.totalorder %s80, %s81
    %p90 = scmp.eq.s32.totalorder %s14, 0
    %p91 = por %p89, %p90
    %p92 = scmp.ne.s32.totalorder %s80, %s81
    %p93 = scmp.eq.s32.totalorder %s15, 3
    %p94 = por %p92, %p93
    %p96 = scmp.ne.s32.totalorder %s81, %s95
    %p97 = scmp.eq.s32.totalorder %s15, 0
    %p98 = por %p96, %p97
    %s99 = ssub.s32 %s16, %s28
    %s100 = ssub.s32 %s17, %s24
    %s101 = sor.u32 %s99, %s100
    %p102 = scmp.eq.s32.totalorder %s101, 0
    %s104 = sadd.s32 %s103, 1
    %s105 = scalar_select %p102, %s103, %s104
    %p108 = pneg %p102
    %p109 = scmp.eq.s32.totalorder %s9, 3
    %p110 = por %p108, %p109
    %p111 = scmp.ne.s32.totalorder %s103, %s106
    %p112 = scmp.eq.s32.totalorder %s9, 0
    %p113 = por %p111, %p112
    %p114 = scmp.ne.s32.totalorder %s103, %s106
    %p115 = scmp.eq.s32.totalorder %s14, 3
    %p116 = por %p114, %p115
    %p117 = scmp.ne.s32.totalorder %s106, %s107
    %p118 = scmp.eq.s32.totalorder %s14, 0
    %p119 = por %p117, %p118
    %p120 = scmp.ne.s32.totalorder %s106, %s107
    %p121 = scmp.eq.s32.totalorder %s15, 3
    %p122 = por %p120, %p121
    %p124 = scmp.ne.s32.totalorder %s107, %s123
    %p125 = scmp.eq.s32.totalorder %s15, 0
    %p126 = por %p124, %p125
    %p127 = scmp.le.s32.totalorder 1, %s9
    %p128 = scmp.lt.s32.totalorder %s9, 5
    %p129 = pnand %p127, %p128
    %p130 = pneg %p129
    // Predicated region
    $region9: #{unet_block_forward.5} parent=5 // pred_check
      _
    $region10: #{unet_block_forward.5} parent=5 // pred_check_branch
      %132 = sbr.rel (%p129) target = $region12
    $region11: #{unet_block_forward.5} parent=5 // pred_region
      %s133 = ssub.s32 %s9, 1
      // Predicated region
      $region13: #{unet_block_forward.5} parent=11 // pred_check
        %p134 = pneg %p70
      $region14: #{unet_block_forward.5} parent=11 // pred_check_branch
        %136 = sbr.rel (%p134) target = $region16
      $region15: #{unet_block_forward.5} parent=11 // pred_region
        _
      $region16: #{unet_block_forward.5} parent=11 // pred_fallthru
        _
      // Predicated region
      $region17: #{unet_block_forward.5} parent=11 // pred_check
        %p137 = pneg %p91
      $region18: #{unet_block_forward.5} parent=11 // pred_check_branch
        %139 = sbr.rel (%p137) target = $region20
      $region19: #{unet_block_forward.5} parent=11 // pred_region
        _
      $region20: #{unet_block_forward.5} parent=11 // pred_fallthru
        _
    $region12: #{unet_block_forward.5} parent=5 // pred_fallthru
      _
    %p140 = scmp.lt.s32.totalorder %s9, 4
    // Predicated region
    $region21: #{unet_block_forward.5} parent=5 // pred_check
      %p141 = pneg %p140
    $region22: #{unet_block_forward.5} parent=5 // pred_check_branch
      %143 = sbr.rel (%p141) target = $region24
    $region23: #{unet_block_forward.5} parent=5 // pred_region
      // Predicated region
      $region25: #{unet_block_forward.5} parent=23 // pred_check
        %p144 = pneg %p43
      $region26: #{unet_block_forward.5} parent=23 // pred_check_branch
        %146 = sbr.rel (%p144) target = $region28
      $region27: #{unet_block_forward.5} parent=23 // pred_region
        %s147 = smul.u32 16, %s17
        %p148 = scmp.lt.s32.totalorder %s16, 1
        %s149 = scalar_select %p148, %s16, 1
        %p150 = scmp.lt.s32.totalorder %s147, 31
        %s151 = scalar_select %p150, %s147, 31
        %s152 = smul.addr %s149, 32
        %s153 = sadd.s32 %s151, %s152
        %s154 = smul.addr %s153, 4
        %s155 = scalar_lea.vmem %s0, %s154
        %s156 = smul.u32 16, %s17
      $region28: #{unet_block_forward.5} parent=23 // pred_fallthru
        _
    $region24: #{unet_block_forward.5} parent=5 // pred_fallthru
      _
    %p157 = scmp.le.s32.totalorder 1, %s9
    %p158 = scmp.lt.s32.totalorder %s9, 5
    %p159 = pnand %p157, %p158
    %p160 = pneg %p159
    // Predicated region
    $region29: #{unet_block_forward.5} parent=5 // pred_check
      _
    $region30: #{unet_block_forward.5} parent=5 // pred_check_branch
      %162 = sbr.rel (%p159) target = $region32
    $region31: #{unet_block_forward.5} parent=5 // pred_region
      %s163 = ssub.s32 %s9, 1
      %s164 = smul.u32 16, %s19
      %p165 = scmp.lt.s32.totalorder %s18, 1
      %s166 = scalar_select %p165, %s18, 1
      %p167 = scmp.lt.s32.totalorder %s164, 31
      %s168 = scalar_select %p167, %s164, 31
      %s169 = smul.addr %s166, 32
      %s170 = sadd.s32 %s168, %s169
      %s171 = smul.addr %s170, 4
      %s172 = scalar_lea.vmem %s0, %s171
      %p173 = pneg %p49
      %p174 = pneg %p46
      %p175 = pneg %p70
      %p176 = pneg %p67
      %p177 = pneg %p91
      %p178 = pneg %p88
      %p179 = pneg %p119
      %p180 = pneg %p116
      %s181 = smul.u32 16, %s19
      %p182 = scmp.lt.s32.totalorder %s18, 1
      %s183 = scalar_select %p182, %s18, 1
      %p184 = scmp.lt.s32.totalorder %s181, 31
      %s185 = scalar_select %p184, %s181, 31
      %s186 = smul.addr %s183, 32
      %s187 = sadd.s32 %s185, %s186
      %s188 = smul.addr %s187, 8
      %s189 = scalar_lea.vmem %s3, %s188
      %s190 = smul.u32 16, %s19
      %p191 = scmp.lt.s32.totalorder %s18, 1
      %s192 = scalar_select %p191, %s18, 1
      %p193 = scmp.lt.s32.totalorder %s190, 31
      %s194 = scalar_select %p193, %s190, 31
      %s195 = smul.addr %s192, 32
      %s196 = sadd.s32 %s194, %s195
      %s197 = smul.addr %s196, 4
      %s198 = scalar_lea.vmem %s0, %s197
      %s199 = smul.u32 16, %s19
      %s200 = smul.u32 16, %s19
      %p201 = scmp.lt.s32.totalorder %s18, 1
      %s202 = scalar_select %p201, %s18, 1
      %p203 = scmp.lt.s32.totalorder %s200, 31
      %s204 = scalar_select %p203, %s200, 31
      %s205 = smul.addr %s202, 32
      %s206 = sadd.s32 %s204, %s205
      %s207 = smul.addr %s206, 8
      %s208 = scalar_lea.vmem %s3, %s207
      %s209 = smul.u32 16, %s19
      %v210 = vld [vmem:[%s198] sm:$0xf]
      %v211 = vld [vmem:[%s198 + $0x4] sm:$0xf]
      %v212 = vld [vmem:[%s198 + $0x8] sm:$0xf]
      %v213 = vld [vmem:[%s198 + $0xc] sm:$0xf]
      %v214 = vld [vmem:[%s198 + $0x10] sm:$0xf]
      %v215 = vld [vmem:[%s198 + $0x14] sm:$0xf]
      %v216 = vld [vmem:[%s198 + $0x18] sm:$0xf]
      %v217 = vld [vmem:[%s198 + $0x1c] sm:$0xf]
      %v218 = vld [vmem:[%s198 + $0x20] sm:$0xf]
      %v219 = vld [vmem:[%s198 + $0x24] sm:$0xf]
      %v220 = vld [vmem:[%s198 + $0x28] sm:$0xf]
      %v221 = vld [vmem:[%s198 + $0x2c] sm:$0xf]
      %v222 = vld [vmem:[%s198 + $0x30] sm:$0xf]
      %v223 = vld [vmem:[%s198 + $0x34] sm:$0xf]
      %v224 = vld [vmem:[%s198 + $0x38] sm:$0xf]
      %v225 = vld [vmem:[%s198 + $0x3c] sm:$0xf]
      %v226 = vunpack.c.l.bf16 %v210
      %v227 = vunpack.c.l.bf16 %v211
      %v228 = vunpack.c.l.bf16 %v212
      %v229 = vunpack.c.l.bf16 %v213
      %v230 = vunpack.c.l.bf16 %v214
      %v231 = vunpack.c.l.bf16 %v215
      %v232 = vunpack.c.l.bf16 %v216
      %v233 = vunpack.c.l.bf16 %v217
      %v234 = vunpack.c.l.bf16 %v218
      %v235 = vunpack.c.l.bf16 %v219
      %v236 = vunpack.c.l.bf16 %v220
      %v237 = vunpack.c.l.bf16 %v221
      %v238 = vunpack.c.l.bf16 %v222
      %v239 = vunpack.c.l.bf16 %v223
      %v240 = vunpack.c.l.bf16 %v224
      %v241 = vunpack.c.l.bf16 %v225
      %v242 = vld [vmem:[%s1] sm:$0x1]
      %v244 = vlaneseq
      %v245 = vshrl.u32 %v244, 7
      %v246 = vsub.s32 0, %v245
      %v247 = vrot.slane %v242, %v246
      %v249 = vmul.f32 %v226, %v247
      %v250 = vmul.f32 %v227, %v247
      %v251 = vmul.f32 %v228, %v247
      %v252 = vmul.f32 %v229, %v247
      %v253 = vmul.f32 %v230, %v247
      %v254 = vmul.f32 %v231, %v247
      %v255 = vmul.f32 %v232, %v247
      %v256 = vmul.f32 %v233, %v247
      %v257 = vmul.f32 %v234, %v247
      %v258 = vmul.f32 %v235, %v247
      %v259 = vmul.f32 %v236, %v247
      %v260 = vmul.f32 %v237, %v247
      %v261 = vmul.f32 %v238, %v247
      %v262 = vmul.f32 %v239, %v247
      %v263 = vmul.f32 %v240, %v247
      %v264 = vmul.f32 %v241, %v247
      %v265 = vld [vmem:[%s2] sm:$0x1]
      %v267 = vlaneseq
      %v268 = vshrl.u32 %v267, 7
      %v269 = vsub.s32 0, %v268
      %v270 = vrot.slane %v265, %v269
      %v272 = vadd.f32 %v249, %v270
      %v273 = vadd.f32 %v250, %v270
      %v274 = vadd.f32 %v251, %v270
      %v275 = vadd.f32 %v252, %v270
      %v276 = vadd.f32 %v253, %v270
      %v277 = vadd.f32 %v254, %v270
      %v278 = vadd.f32 %v255, %v270
      %v279 = vadd.f32 %v256, %v270
      %v280 = vadd.f32 %v257, %v270
      %v281 = vadd.f32 %v258, %v270
      %v282 = vadd.f32 %v259, %v270
      %v283 = vadd.f32 %v260, %v270
      %v284 = vadd.f32 %v261, %v270
      %v285 = vadd.f32 %v262, %v270
      %v286 = vadd.f32 %v263, %v270
      %v287 = vadd.f32 %v264, %v270
      %v288 = vand.u32 2147483647, %v272
      %v289 = vand.u32 2147483647, %v273
      %v290 = vand.u32 2147483647, %v274
      %v291 = vand.u32 2147483647, %v275
      %v292 = vand.u32 2147483647, %v276
      %v293 = vand.u32 2147483647, %v277
      %v294 = vand.u32 2147483647, %v278
      %v295 = vand.u32 2147483647, %v279
      %v296 = vand.u32 2147483647, %v280
      %v297 = vand.u32 2147483647, %v281
      %v298 = vand.u32 2147483647, %v282
      %v299 = vand.u32 2147483647, %v283
      %v300 = vand.u32 2147483647, %v284
      %v301 = vand.u32 2147483647, %v285
      %v302 = vand.u32 2147483647, %v286
      %v303 = vand.u32 2147483647, %v287
      %v304 = vsub.f32 0.0, %v288
      %v305 = vsub.f32 0.0, %v289
      %v306 = vsub.f32 0.0, %v290
      %v307 = vsub.f32 0.0, %v291
      %v308 = vsub.f32 0.0, %v292
      %v309 = vsub.f32 0.0, %v293
      %v310 = vsub.f32 0.0, %v294
      %v311 = vsub.f32 0.0, %v295
      %v312 = vsub.f32 0.0, %v296
      %v313 = vsub.f32 0.0, %v297
      %v314 = vsub.f32 0.0, %v298
      %v315 = vsub.f32 0.0, %v299
      %v316 = vsub.f32 0.0, %v300
      %v317 = vsub.f32 0.0, %v301
      %v318 = vsub.f32 0.0, %v302
      %v319 = vsub.f32 0.0, %v303
      %v320 = vmul.f32 %v304, 1.442695
      %v321 = vpow.pop %v320
      %v322 = vmul.f32 %v305, 1.442695
      %v323 = vpow.pop %v322
      %v324 = vmul.f32 %v306, 1.442695
      %v325 = vpow.pop %v324
      %v326 = vmul.f32 %v307, 1.442695
      %v327 = vpow.pop %v326
      %v328 = vmul.f32 %v308, 1.442695
      %v329 = vpow.pop %v328
      %v330 = vmul.f32 %v309, 1.442695
      %v331 = vpow.pop %v330
      %v332 = vmul.f32 %v310, 1.442695
      %v333 = vpow.pop %v332
      %v334 = vmul.f32 %v311, 1.442695
      %v335 = vpow.pop %v334
      %v336 = vmul.f32 %v312, 1.442695
      %v337 = vpow.pop %v336
      %v338 = vmul.f32 %v313, 1.442695
      %v339 = vpow.pop %v338
      %v340 = vmul.f32 %v314, 1.442695
      %v341 = vpow.pop %v340
      %v342 = vmul.f32 %v315, 1.442695
      %v343 = vpow.pop %v342
      %v344 = vmul.f32 %v316, 1.442695
      %v345 = vpow.pop %v344
      %v346 = vmul.f32 %v317, 1.442695
      %v347 = vpow.pop %v346
      %v348 = vmul.f32 %v318, 1.442695
      %v349 = vpow.pop %v348
      %v350 = vmul.f32 %v319, 1.442695
      %v351 = vpow.pop %v350
      %vm352 = vcmp.ge.f32.partialorder %v272, 0.0
      %vm353 = vcmp.ge.f32.partialorder %v273, 0.0
      %vm354 = vcmp.ge.f32.partialorder %v274, 0.0
      %vm355 = vcmp.ge.f32.partialorder %v275, 0.0
      %vm356 = vcmp.ge.f32.partialorder %v276, 0.0
      %vm357 = vcmp.ge.f32.partialorder %v277, 0.0
      %vm358 = vcmp.ge.f32.partialorder %v278, 0.0
      %vm359 = vcmp.ge.f32.partialorder %v279, 0.0
      %vm360 = vcmp.ge.f32.partialorder %v280, 0.0
      %vm361 = vcmp.ge.f32.partialorder %v281, 0.0
      %vm362 = vcmp.ge.f32.partialorder %v282, 0.0
      %vm363 = vcmp.ge.f32.partialorder %v283, 0.0
      %vm364 = vcmp.ge.f32.partialorder %v284, 0.0
      %vm365 = vcmp.ge.f32.partialorder %v285, 0.0
      %vm366 = vcmp.ge.f32.partialorder %v286, 0.0
      %vm367 = vcmp.ge.f32.partialorder %v287, 0.0
      %v368 = vsel %vm352, 1.0, %v321
      %v369 = vsel %vm353, 1.0, %v323
      %v370 = vsel %vm354, 1.0, %v325
      %v371 = vsel %vm355, 1.0, %v327
      %v372 = vsel %vm356, 1.0, %v329
      %v373 = vsel %vm357, 1.0, %v331
      %v374 = vsel %vm358, 1.0, %v333
      %v375 = vsel %vm359, 1.0, %v335
      %v376 = vsel %vm360, 1.0, %v337
      %v377 = vsel %vm361, 1.0, %v339
      %v378 = vsel %vm362, 1.0, %v341
      %v379 = vsel %vm363, 1.0, %v343
      %v380 = vsel %vm364, 1.0, %v345
      %v381 = vsel %vm365, 1.0, %v347
      %v382 = vsel %vm366, 1.0, %v349
      %v383 = vsel %vm367, 1.0, %v351
      %v384 = vadd.f32 %v321, 1.0
      %v385 = vadd.f32 %v323, 1.0
      %v386 = vadd.f32 %v325, 1.0
      %v387 = vadd.f32 %v327, 1.0
      %v388 = vadd.f32 %v329, 1.0
      %v389 = vadd.f32 %v331, 1.0
      %v390 = vadd.f32 %v333, 1.0
      %v391 = vadd.f32 %v335, 1.0
      %v392 = vadd.f32 %v337, 1.0
      %v393 = vadd.f32 %v339, 1.0
      %v394 = vadd.f32 %v341, 1.0
      %v395 = vadd.f32 %v343, 1.0
      %v396 = vadd.f32 %v345, 1.0
      %v397 = vadd.f32 %v347, 1.0
      %v398 = vadd.f32 %v349, 1.0
      %v399 = vadd.f32 %v351, 1.0
      %v400 = vrcp.pop %v384
      %v401 = vrcp.pop %v385
      %v402 = vrcp.pop %v386
      %v403 = vrcp.pop %v387
      %v404 = vrcp.pop %v388
      %v405 = vrcp.pop %v389
      %v406 = vrcp.pop %v390
      %v407 = vrcp.pop %v391
      %v408 = vrcp.pop %v392
      %v409 = vrcp.pop %v393
      %v410 = vrcp.pop %v394
      %v411 = vrcp.pop %v395
      %v412 = vrcp.pop %v396
      %v413 = vrcp.pop %v397
      %v414 = vrcp.pop %v398
      %v415 = vrcp.pop %v399
      %v416 = vmul.f32 %v368, %v400
      %v417 = vmul.f32 %v369, %v401
      %v418 = vmul.f32 %v370, %v402
      %v419 = vmul.f32 %v371, %v403
      %v420 = vmul.f32 %v372, %v404
      %v421 = vmul.f32 %v373, %v405
      %v422 = vmul.f32 %v374, %v406
      %v423 = vmul.f32 %v375, %v407
      %v424 = vmul.f32 %v376, %v408
      %v425 = vmul.f32 %v377, %v409
      %v426 = vmul.f32 %v378, %v410
      %v427 = vmul.f32 %v379, %v411
      %v428 = vmul.f32 %v380, %v412
      %v429 = vmul.f32 %v381, %v413
      %v430 = vmul.f32 %v382, %v414
      %v431 = vmul.f32 %v383, %v415
      %v432 = vmul.f32 %v272, %v416
      %v433 = vmul.f32 %v273, %v417
      %v434 = vmul.f32 %v274, %v418
      %v435 = vmul.f32 %v275, %v419
      %v436 = vmul.f32 %v276, %v420
      %v437 = vmul.f32 %v277, %v421
      %v438 = vmul.f32 %v278, %v422
      %v439 = vmul.f32 %v279, %v423
      %v440 = vmul.f32 %v280, %v424
      %v441 = vmul.f32 %v281, %v425
      %v442 = vmul.f32 %v282, %v426
      %v443 = vmul.f32 %v283, %v427
      %v444 = vmul.f32 %v284, %v428
      %v445 = vmul.f32 %v285, %v429
      %v446 = vmul.f32 %v286, %v430
      %v447 = vmul.f32 %v287, %v431
      %vm448 = vcmask 64512
      %449 = vst.msk [vmem:[%s208] sm:$0xff] %vm448, %v432
      %450 = vst.msk [vmem:[%s208 + $0x8] sm:$0xff] %vm448, %v433
      %451 = vst.msk [vmem:[%s208 + $0x10] sm:$0xff] %vm448, %v434
      %452 = vst.msk [vmem:[%s208 + $0x18] sm:$0xff] %vm448, %v435
      %453 = vst.msk [vmem:[%s208 + $0x20] sm:$0xff] %vm448, %v436
      %454 = vst.msk [vmem:[%s208 + $0x28] sm:$0xff] %vm448, %v437
      %455 = vst.msk [vmem:[%s208 + $0x30] sm:$0xff] %vm448, %v438
      %456 = vst.msk [vmem:[%s208 + $0x38] sm:$0xff] %vm448, %v439
      %457 = vst.msk [vmem:[%s208 + $0x40] sm:$0xff] %vm448, %v440
      %458 = vst.msk [vmem:[%s208 + $0x48] sm:$0xff] %vm448, %v441
      %459 = vst.msk [vmem:[%s208 + $0x50] sm:$0xff] %vm448, %v442
      %460 = vst.msk [vmem:[%s208 + $0x58] sm:$0xff] %vm448, %v443
      %461 = vst.msk [vmem:[%s208 + $0x60] sm:$0xff] %vm448, %v444
      %462 = vst.msk [vmem:[%s208 + $0x68] sm:$0xff] %vm448, %v445
      %463 = vst.msk [vmem:[%s208 + $0x70] sm:$0xff] %vm448, %v446
      %464 = vst.msk [vmem:[%s208 + $0x78] sm:$0xff] %vm448, %v447
      %s465 = smul.u32 16, %s19
      %p466 = scmp.lt.s32.totalorder %s18, 1
      %s467 = scalar_select %p466, %s18, 1
      %p468 = scmp.lt.s32.totalorder %s465, 31
      %s469 = scalar_select %p468, %s465, 31
      %s470 = smul.addr %s467, 32
      %s471 = sadd.s32 %s469, %s470
      %s472 = smul.addr %s471, 8
      %s473 = scalar_lea.vmem %s3, %s472
      // Predicated region
      $region33: #{unet_block_forward.5} parent=31 // pred_check
        %p474 = pneg %p116
      $region34: #{unet_block_forward.5} parent=31 // pred_check_branch
        %476 = sbr.rel (%p474) target = $region36
      $region35: #{unet_block_forward.5} parent=31 // pred_region
        %s477 = smul.u32 16, %s19
      $region36: #{unet_block_forward.5} parent=31 // pred_fallthru
        _
    $region32: #{unet_block_forward.5} parent=5 // pred_fallthru
      _
    %p478 = scmp.le.s32.totalorder 2, %s9
    // Predicated region
    $region37: #{unet_block_forward.5} parent=5 // pred_check
      %p479 = pneg %p478
    $region38: #{unet_block_forward.5} parent=5 // pred_check_branch
      %481 = sbr.rel (%p479) target = $region40
    $region39: #{unet_block_forward.5} parent=5 // pred_region
      %s482 = ssub.s32 %s9, 2
      // Predicated region
      $region41: #{unet_block_forward.5} parent=39 // pred_check
        %p483 = pneg %p122
      $region42: #{unet_block_forward.5} parent=39 // pred_check_branch
        %485 = sbr.rel (%p483) target = $region44
      $region43: #{unet_block_forward.5} parent=39 // pred_region
        %s486 = smul.u32 16, %s21
        %p487 = scmp.lt.s32.totalorder %s20, 1
        %s488 = scalar_select %p487, %s20, 1
        %p489 = scmp.lt.s32.totalorder %s486, 31
        %s490 = scalar_select %p489, %s486, 31
        %s491 = smul.addr %s488, 32
        %s492 = sadd.s32 %s490, %s491
        %s493 = smul.addr %s492, 8
        %s494 = scalar_lea.vmem %s3, %s493
      $region44: #{unet_block_forward.5} parent=39 // pred_fallthru
        _
    $region40: #{unet_block_forward.5} parent=5 // pred_fallthru
      _
  $region6: #{unet_block_forward.5} parent=0 // loop_footer
    %s13 = sadd.s32 1, %s9
  $region7: #{unet_block_forward.5} parent=0 // loop_footer_branch
    %8 = sbr.rel target = $region3
  $region8: #{unet_block_forward.5} parent=0 // loop_exit
    _

// kernel: unet_block_forward.3
$region0: #{unet_block_forward.3}
  #allocation0 [shape = 'u32[]', space=smem, size = 0x4, offset = 0x4, fixed_abs, tag = 'smem constant byte address 0x4 - core index']
  #allocation1 [shape = 'u32[144,128]{1,0:T(1,128)}', space=vmem, size = 0x12000, scoped, tag = 'internal scratch']
  %s0 = inlined_call_operand.vmem [shape: bf16[2,18,18,4], index: 0, kind: input, shape index: {}]
  %s1 = inlined_call_operand.vmem [shape: bf16[36,8], index: 1, kind: input, shape index: {}]
  %s2 = inlined_call_operand.vmem [shape: bf16[2,256,8], index: 2, kind: output, shape index: {0}]
  %s3 = inlined_call_operand.vmem [shape: f32[2,2,8], index: 3, kind: output, shape index: {1}]
  %4 = xla_tuple %s2, %s3
  %s5 = sld [smem:[#allocation0]]
  $region49: #{unet_block_forward.3} parent=0
    _
  %s7 = ssub.s32 1, %s5
  %s8 = scalar_select 0, %s7, %s5
  loop: start=0, step=1, limit=4
  $region2: #{unet_block_forward.3} parent=0 // loop_pre_header
    _
  $region3: #{unet_block_forward.3} parent=0 // loop_header
    %s10 = sphi 0, %s14
    %p11 = scmp.ge.s32.totalorder %s10, 4
    %s20 = sphi 0, %s22
    %s23 = sphi 0, %s20
    %s24 = sphi 0, %s23
    %s40 = sphi 0, %s24
    %s44 = sphi 0, %s44
    %s46 = sphi 0, %s44
    %s47 = sphi 0, %s46
    %s61 = sphi 0, %s47
    %s67 = sphi 0, %s69
    %s70 = sphi 0, %s67
    %s71 = sphi 0, %s70
    %s87 = sphi 0, %s71
    %s93 = sphi 0, %s95
    %s96 = sphi 0, %s93
    %s97 = sphi 0, %s96
    %s113 = sphi 0, %s97
  $region4: #{unet_block_forward.3} parent=0 // loop_header_branch
    %13 = sbr.rel (%p11) target = $region8
  $region5: #{unet_block_forward.3} parent=0 // loop_body
    %s15 = ssub.s32 %s10, 1
    %s16 = ssub.s32 %s10, 2
    %s17 = sadd.s32 %s10, 1
    %s18 = ssub.s32 %s10, %s17
    %p19 = scmp.eq.s32.totalorder %s18, 0
    %s21 = sadd.s32 %s20, 1
    %s22 = scalar_select %p19, %s20, %s21
    %p25 = pneg %p19
    %p26 = scmp.eq.s32.totalorder %s10, 1
    %p27 = por %p25, %p26
    %p28 = scmp.ne.s32.totalorder %s20, %s23
    %p29 = scmp.eq.s32.totalorder %s10, 0
    %p30 = por %p28, %p29
    %p31 = scmp.ne.s32.totalorder %s20, %s23
    %p32 = scmp.eq.s32.totalorder %s15, 1
    %p33 = por %p31, %p32
    %p34 = scmp.ne.s32.totalorder %s23, %s24
    %p35 = scmp.eq.s32.totalorder %s15, 0
    %p36 = por %p34, %p35
    %p37 = scmp.ne.s32.totalorder %s23, %s24
    %p38 = scmp.eq.s32.totalorder %s16, 1
    %p39 = por %p37, %p38
    %p41 = scmp.ne.s32.totalorder %s24, %s40
    %p42 = scmp.eq.s32.totalorder %s16, 0
    %p43 = por %p41, %p42
    %s45 = sadd.s32 %s44, 1
    %p48 = scmp.eq.s32.totalorder %s10, 1
    %p49 = scmp.ne.s32.totalorder %s44, %s46
    %p50 = scmp.eq.s32.totalorder %s10, 0
    %p51 = por %p49, %p50
    %p52 = scmp.ne.s32.totalorder %s44, %s46
    %p53 = scmp.eq.s32.totalorder %s15, 1
    %p54 = por %p52, %p53
    %p55 = scmp.ne.s32.totalorder %s46, %s47
    %p56 = scmp.eq.s32.totalorder %s15, 0
    %p57 = por %p55, %p56
    %p58 = scmp.ne.s32.totalorder %s46, %s47
    %p59 = scmp.eq.s32.totalorder %s16, 1
    %p60 = por %p58, %p59
    %p62 = scmp.ne.s32.totalorder %s47, %s61
    %p63 = scmp.eq.s32.totalorder %s16, 0
    %p64 = por %p62, %p63
    %s65 = ssub.s32 %s10, %s17
    %p66 = scmp.eq.s32.totalorder %s65, 0
    %s68 = sadd.s32 %s67, 1
    %s69 = scalar_select %p66, %s67, %s68
    %p72 = pneg %p66
    %p73 = scmp.eq.s32.totalorder %s10, 1
    %p74 = por %p72, %p73
    %p75 = scmp.ne.s32.totalorder %s67, %s70
    %p76 = scmp.eq.s32.totalorder %s10, 0
    %p77 = por %p75, %p76
    %p78 = scmp.ne.s32.totalorder %s67, %s70
    %p79 = scmp.eq.s32.totalorder %s15, 1
    %p80 = por %p78, %p79
    %p81 = scmp.ne.s32.totalorder %s70, %s71
    %p82 = scmp.eq.s32.totalorder %s15, 0
    %p83 = por %p81, %p82
    %p84 = scmp.ne.s32.totalorder %s70, %s71
    %p85 = scmp.eq.s32.totalorder %s16, 1
    %p86 = por %p84, %p85
    %p88 = scmp.ne.s32.totalorder %s71, %s87
    %p89 = scmp.eq.s32.totalorder %s16, 0
    %p90 = por %p88, %p89
    %s91 = ssub.s32 %s10, %s17
    %p92 = scmp.eq.s32.totalorder %s91, 0
    %s94 = sadd.s32 %s93, 1
    %s95 = scalar_select %p92, %s93, %s94
    %p98 = pneg %p92
    %p99 = scmp.eq.s32.totalorder %s10, 1
    %p100 = por %p98, %p99
    %p101 = scmp.ne.s32.totalorder %s93, %s96
    %p102 = scmp.eq.s32.totalorder %s10, 0
    %p103 = por %p101, %p102
    %p104 = scmp.ne.s32.totalorder %s93, %s96
    %p105 = scmp.eq.s32.totalorder %s15, 1
    %p106 = por %p104, %p105
    %p107 = scmp.ne.s32.totalorder %s96, %s97
    %p108 = scmp.eq.s32.totalorder %s15, 0
    %p109 = por %p107, %p108
    %p110 = scmp.ne.s32.totalorder %s96, %s97
    %p111 = scmp.eq.s32.totalorder %s16, 1
    %p112 = por %p110, %p111
    %p114 = scmp.ne.s32.totalorder %s97, %s113
    %p115 = scmp.eq.s32.totalorder %s16, 0
    %p116 = por %p114, %p115
    %p117 = scmp.le.s32.totalorder 1, %s10
    %p118 = scmp.lt.s32.totalorder %s10, 3
    %p119 = pnand %p117, %p118
    %p120 = pneg %p119
    // Predicated region
    $region9: #{unet_block_forward.3} parent=5 // pred_check
      _
    $region10: #{unet_block_forward.3} parent=5 // pred_check_branch
      %122 = sbr.rel (%p119) target = $region12
    $region11: #{unet_block_forward.3} parent=5 // pred_region
      %s123 = ssub.s32 %s10, 1
      // Predicated region
      $region13: #{unet_block_forward.3} parent=11 // pred_check
        %p124 = pneg %p57
      $region14: #{unet_block_forward.3} parent=11 // pred_check_branch
        %126 = sbr.rel (%p124) target = $region16
      $region15: #{unet_block_forward.3} parent=11 // pred_region
        _
      $region16: #{unet_block_forward.3} parent=11 // pred_fallthru
        _
    $region12: #{unet_block_forward.3} parent=5 // pred_fallthru
      _
    %p127 = scmp.lt.s32.totalorder %s10, 2
    // Predicated region
    $region17: #{unet_block_forward.3} parent=5 // pred_check
      %p128 = pneg %p127
    $region18: #{unet_block_forward.3} parent=5 // pred_check_branch
      %130 = sbr.rel (%p128) target = $region20
    $region19: #{unet_block_forward.3} parent=5 // pred_region
      // Predicated region
      $region21: #{unet_block_forward.3} parent=19 // pred_check
        %p131 = pneg %p30
      $region22: #{unet_block_forward.3} parent=19 // pred_check_branch
        %133 = sbr.rel (%p131) target = $region24
      $region23: #{unet_block_forward.3} parent=19 // pred_region
        %p134 = scmp.lt.s32.totalorder %s10, 1
        %s135 = scalar_select %p134, %s10, 1
        %s136 = smul.addr %s135, 54
        %s137 = smul.addr %s136, 4
        %s138 = scalar_lea.vmem %s0, %s137
      $region24: #{unet_block_forward.3} parent=19 // pred_fallthru
        _
    $region20: #{unet_block_forward.3} parent=5 // pred_fallthru
      _
    %p139 = scmp.le.s32.totalorder 1, %s10
    %p140 = scmp.lt.s32.totalorder %s10, 3
    %p141 = pnand %p139, %p140
    %p142 = pneg %p141
    // Predicated region
    $region25: #{unet_block_forward.3} parent=5 // pred_check
      _
    $region26: #{unet_block_forward.3} parent=5 // pred_check_branch
      %144 = sbr.rel (%p141) target = $region28
    $region27: #{unet_block_forward.3} parent=5 // pred_region
      %s145 = ssub.s32 %s10, 1
      %p146 = scmp.lt.s32.totalorder %s15, 1
      %s147 = scalar_select %p146, %s15, 1
      %s148 = smul.addr %s147, 54
      %s149 = smul.addr %s148, 4
      %s150 = scalar_lea.vmem %s0, %s149
      %p151 = pneg %p36
      %p152 = pneg %p33
      %p153 = pneg %p57
      %p154 = pneg %p54
      %p155 = pneg %p83
      %p156 = pneg %p80
      %p157 = scmp.lt.s32.totalorder %s15, 1
      %s158 = scalar_select %p157, %s15, 1
      %s159 = smul.addr %s158, 32
      %s160 = smul.addr %s159, 4
      %s161 = scalar_lea.vmem %s2, %s160
      %p162 = pneg %p109
      %p163 = pneg %p106
      %p164 = scmp.lt.s32.totalorder %s15, 1
      %s165 = scalar_select %p164, %s15, 1
      %s166 = smul.addr %s165, 2
      %s167 = scalar_lea.vmem %s3, %s166
      %p168 = scmp.lt.s32.totalorder %s15, 1
      %s169 = scalar_select %p168, %s15, 1
      %s170 = smul.addr %s169, 54
      %s171 = smul.addr %s170, 4
      %s172 = scalar_lea.vmem %s0, %s171
      %p173 = scmp.lt.s32.totalorder %s15, 1
      %s174 = scalar_select %p173, %s15, 1
      %s175 = smul.addr %s174, 32
      %s176 = smul.addr %s175, 4
      %s177 = scalar_lea.vmem %s2, %s176
      %p178 = scmp.lt.s32.totalorder %s15, 1
      %s179 = scalar_select %p178, %s15, 1
      %s180 = smul.addr %s179, 2
      %s181 = scalar_lea.vmem %s3, %s180
      %v183 = vld [vmem:[%s172] sm:$0xf]
      %v184 = vld [vmem:[%s172 + $0x4] sm:$0xf]
      %v185 = vld [vmem:[%s172 + $0x8] sm:$0x1]
      %v186 = vld [vmem:[%s172 + $0xc] sm:$0xf]
      %v187 = vld [vmem:[%s172 + $0x10] sm:$0xf]
      %v188 = vld [vmem:[%s172 + $0x14] sm:$0x1]
      %v189 = vld [vmem:[%s172 + $0x18] sm:$0xf]
      %v190 = vld [vmem:[%s172 + $0x1c] sm:$0xf]
      %v191 = vld [vmem:[%s172 + $0x20] sm:$0x1]
      %v192 = vld [vmem:[%s172 + $0x24] sm:$0xf]
      %v193 = vld [vmem:[%s172 + $0x28] sm:$0xf]
      %v194 = vld [vmem:[%s172 + $0x2c] sm:$0x1]
      %v195 = vld [vmem:[%s172 + $0x30] sm:$0xf]
      %v196 = vld [vmem:[%s172 + $0x34] sm:$0xf]
      %v197 = vld [vmem:[%s172 + $0x38] sm:$0x1]
      %v198 = vld [vmem:[%s172 + $0x3c] sm:$0xf]
      %v199 = vld [vmem:[%s172 + $0x40] sm:$0xf]
      %v200 = vld [vmem:[%s172 + $0x44] sm:$0x1]
      %v201 = vld [vmem:[%s172 + $0x48] sm:$0xf]
      %v202 = vld [vmem:[%s172 + $0x4c] sm:$0xf]
      %v203 = vld [vmem:[%s172 + $0x50] sm:$0x1]
      %v204 = vld [vmem:[%s172 + $0x54] sm:$0xf]
      %v205 = vld [vmem:[%s172 + $0x58] sm:$0xf]
      %v206 = vld [vmem:[%s172 + $0x5c] sm:$0x1]
      %v207 = vld [vmem:[%s172 + $0x60] sm:$0xf]
      %v208 = vld [vmem:[%s172 + $0x64] sm:$0xf]
      %v209 = vld [vmem:[%s172 + $0x68] sm:$0x1]
      %v210 = vld [vmem:[%s172 + $0x6c] sm:$0xf]
      %v211 = vld [vmem:[%s172 + $0x70] sm:$0xf]
      %v212 = vld [vmem:[%s172 + $0x74] sm:$0x1]
      %v213 = vld [vmem:[%s172 + $0x78] sm:$0xf]
      %v214 = vld [vmem:[%s172 + $0x7c] sm:$0xf]
      %v215 = vld [vmem:[%s172 + $0x80] sm:$0x1]
      %v216 = vld [vmem:[%s172 + $0x84] sm:$0xf]
      %v217 = vld [vmem:[%s172 + $0x88] sm:$0xf]
      %v218 = vld [vmem:[%s172 + $0x8c] sm:$0x1]
      %v219 = vld [vmem:[%s172 + $0x90] sm:$0xf]
      %v220 = vld [vmem:[%s172 + $0x94] sm:$0xf]
      %v221 = vld [vmem:[%s172 + $0x98] sm:$0x1]
      %v222 = vld [vmem:[%s172 + $0x9c] sm:$0xf]
      %v223 = vld [vmem:[%s172 + $0xa0] sm:$0xf]
      %v224 = vld [vmem:[%s172 + $0xa4] sm:$0x1]
      %v225 = vld [vmem:[%s172 + $0xa8] sm:$0xf]
      %v226 = vld [vmem:[%s172 + $0xac] sm:$0xf]
      %v227 = vld [vmem:[%s172 + $0xb0] sm:$0x1]
      %v228 = vld [vmem:[%s172 + $0xb4] sm:$0xf]
      %v229 = vld [vmem:[%s172 + $0xb8] sm:$0xf]
      %v230 = vld [vmem:[%s172 + $0xbc] sm:$0x1]
      %v231 = vld [vmem:[%s172 + $0xc0] sm:$0xf]
      %v232 = vld [vmem:[%s172 + $0xc4] sm:$0xf]
      %v233 = vld [vmem:[%s172 + $0xc8] sm:$0x1]
      %v234 = vld [vmem:[%s172 + $0xcc] sm:$0xf]
      %v235 = vld [vmem:[%s172 + $0xd0] sm:$0xf]
      %v236 = vld [vmem:[%s172 + $0xd4] sm:$0x1]
      %v269 = vunpack.c.l.b16 %v183
      %v270 = vunpack.c.l.b16 %v184
      %v271 = vunpack.c.l.b16 %v186
      %v272 = vunpack.c.l.b16 %v187
      %v273 = vunpack.c.l.b16 %v189
      %v274 = vunpack.c.l.b16 %v190
      %v275 = vunpack.c.l.b16 %v192
      %v276 = vunpack.c.l.b16 %v193
      %v277 = vunpack.c.l.b16 %v195
      %v278 = vunpack.c.l.b16 %v196
      %v279 = vunpack.c.l.b16 %v198
      %v280 = vunpack.c.l.b16 %v199
      %v281 = vunpack.c.l.b16 %v201
      %v282 = vunpack.c.l.b16 %v202
      %v283 = vunpack.c.l.b16 %v204
      %v284 = vunpack.c.l.b16 %v205
      %v285 = vunpack.c.l.b16 %v207
      %v286 = vunpack.c.l.b16 %v208
      %v287 = vunpack.c.l.b16 %v210
      %v288 = vunpack.c.l.b16 %v211
      %v289 = vunpack.c.l.b16 %v213
      %v290 = vunpack.c.l.b16 %v214
      %v291 = vunpack.c.l.b16 %v216
      %v292 = vunpack.c.l.b16 %v217
      %v293 = vunpack.c.l.b16 %v219
      %v294 = vunpack.c.l.b16 %v220
      %v295 = vunpack.c.l.b16 %v222
      %v296 = vunpack.c.l.b16 %v223
      %v297 = vunpack.c.l.b16 %v225
      %v298 = vunpack.c.l.b16 %v226
      %v299 = vunpack.c.l.b16 %v228
      %v300 = vunpack.c.l.b16 %v229
      %v301 = vpack.c.b16 %v270, %v269
      %v302 = vpack.c.b16 %v272, %v271
      %v303 = vpack.c.b16 %v274, %v273
      %v304 = vpack.c.b16 %v276, %v275
      %v305 = vpack.c.b16 %v278, %v277
      %v306 = vpack.c.b16 %v280, %v279
      %v307 = vpack.c.b16 %v282, %v281
      %v308 = vpack.c.b16 %v284, %v283
      %v309 = vpack.c.b16 %v286, %v285
      %v310 = vpack.c.b16 %v288, %v287
      %v311 = vpack.c.b16 %v290, %v289
      %v312 = vpack.c.b16 %v292, %v291
      %v313 = vpack.c.b16 %v294, %v293
      %v314 = vpack.c.b16 %v296, %v295
      %v315 = vpack.c.b16 %v298, %v297
      %v316 = vpack.c.b16 %v300, %v299
      %v333 = vunpack.c.l.b16 %v185
      %v334 = vunpack.c.l.b16 %v188
      %v335 = vunpack.c.l.b16 %v191
      %v336 = vunpack.c.l.b16 %v194
      %v337 = vunpack.c.l.b16 %v197
      %v338 = vunpack.c.l.b16 %v200
      %v339 = vunpack.c.l.b16 %v203
      %v340 = vunpack.c.l.b16 %v206
      %v341 = vunpack.c.l.b16 %v209
      %v342 = vunpack.c.l.b16 %v212
      %v343 = vunpack.c.l.b16 %v215
      %v344 = vunpack.c.l.b16 %v218
      %v345 = vunpack.c.l.b16 %v221
      %v346 = vunpack.c.l.b16 %v224
      %v347 = vunpack.c.l.b16 %v227
      %v348 = vunpack.c.l.b16 %v230
      %v349 = vpack.c.b16 %v333, %v333
      %v350 = vpack.c.b16 %v334, %v334
      %v351 = vpack.c.b16 %v335, %v335
      %v352 = vpack.c.b16 %v336, %v336
      %v353 = vpack.c.b16 %v337, %v337
      %v354 = vpack.c.b16 %v338, %v338
      %v355 = vpack.c.b16 %v339, %v339
      %v356 = vpack.c.b16 %v340, %v340
      %v357 = vpack.c.b16 %v341, %v341
      %v358 = vpack.c.b16 %v342, %v342
      %v359 = vpack.c.b16 %v343, %v343
      %v360 = vpack.c.b16 %v344, %v344
      %v361 = vpack.c.b16 %v345, %v345
      %v362 = vpack.c.b16 %v346, %v346
      %v363 = vpack.c.b16 %v347, %v347
      %v364 = vpack.c.b16 %v348, %v348
      %vm365 = vsmask.f32 7424
      %v367 = vshrl.u32 %v301, 16
      %v369 = vshll.u32 %v301, 16
      %v371 = vrot.slane %v369, 1
      %v372 = vor.u32 %v367, %v371
      %v374 = vshll.u32 %v349, 16
      %v376 = vrot.slane %v374, 1
      %v377 = vsel %vm365, %v372, %v376
      %v379 = vshrl.u32 %v302, 16
      %v381 = vshll.u32 %v302, 16
      %v383 = vrot.slane %v381, 1
      %v384 = vor.u32 %v379, %v383
      %v386 = vshll.u32 %v350, 16
      %v388 = vrot.slane %v386, 1
      %v389 = vsel %vm365, %v384, %v388
      %v391 = vshrl.u32 %v303, 16
      %v393 = vshll.u32 %v303, 16
      %v395 = vrot.slane %v393, 1
      %v396 = vor.u32 %v391, %v395
      %v398 = vshll.u32 %v351, 16
      %v400 = vrot.slane %v398, 1
      %v401 = vsel %vm365, %v396, %v400
      %v403 = vshrl.u32 %v304, 16
      %v405 = vshll.u32 %v304, 16
      %v407 = vrot.slane %v405, 1
      %v408 = vor.u32 %v403, %v407
      %v410 = vshll.u32 %v352, 16
      %v412 = vrot.slane %v410, 1
      %v413 = vsel %vm365, %v408, %v412
      %v415 = vshrl.u32 %v305, 16
      %v417 = vshll.u32 %v305, 16
      %v419 = vrot.slane %v417, 1
      %v420 = vor.u32 %v415, %v419
      %v422 = vshll.u32 %v353, 16
      %v424 = vrot.slane %v422, 1
      %v425 = vsel %vm365, %v420, %v424
      %v427 = vshrl.u32 %v306, 16
      %v429 = vshll.u32 %v306, 16
      %v431 = vrot.slane %v429, 1
      %v432 = vor.u32 %v427, %v431
      %v434 = vshll.u32 %v354, 16
      %v436 = vrot.slane %v434, 1
      %v437 = vsel %vm365, %v432, %v436
      %v439 = vshrl.u32 %v307, 16
      %v441 = vshll.u32 %v307, 16
      %v443 = vrot.slane %v441, 1
      %v444 = vor.u32 %v439, %v443
      %v446 = vshll.u32 %v355, 16
      %v448 = vrot.slane %v446, 1
      %v449 = vsel %vm365, %v444, %v448
      %v451 = vshrl.u32 %v308, 16
      %v453 = vshll.u32 %v308, 16
      %v455 = vrot.slane %v453, 1
      %v456 = vor.u32 %v451, %v455
      %v458 = vshll.u32 %v356, 16
      %v460 = vrot.slane %v458, 1
      %v461 = vsel %vm365, %v456, %v460
      %v463 = vshrl.u32 %v309, 16
      %v465 = vshll.u32 %v309, 16
      %v467 = vrot.slane %v465, 1
      %v468 = vor.u32 %v463, %v467
      %v470 = vshll.u32 %v357, 16
      %v472 = vrot.slane %v470, 1
      %v473 = vsel %vm365, %v468, %v472
      %v475 = vshrl.u32 %v310, 16
      %v477 = vshll.u32 %v310, 16
      %v479 = vrot.slane %v477, 1
      %v480 = vor.u32 %v475, %v479
      %v482 = vshll.u32 %v358, 16
      %v484 = vrot.slane %v482, 1
      %v485 = vsel %vm365, %v480, %v484
      %v487 = vshrl.u32 %v311, 16
      %v489 = vshll.u32 %v311, 16
      %v491 = vrot.slane %v489, 1
      %v492 = vor.u32 %v487, %v491
      %v494 = vshll.u32 %v359, 16
      %v496 = vrot.slane %v494, 1
      %v497 = vsel %vm365, %v492, %v496
      %v499 = vshrl.u32 %v312, 16
      %v501 = vshll.u32 %v312, 16
      %v503 = vrot.slane %v501, 1
      %v504 = vor.u32 %v499, %v503
      %v506 = vshll.u32 %v360, 16
      %v508 = vrot.slane %v506, 1
      %v509 = vsel %vm365, %v504, %v508
      %v511 = vshrl.u32 %v313, 16
      %v513 = vshll.u32 %v313, 16
      %v515 = vrot.slane %v513, 1
      %v516 = vor.u32 %v511, %v515
      %v518 = vshll.u32 %v361, 16
      %v520 = vrot.slane %v518, 1
      %v521 = vsel %vm365, %v516, %v520
      %v523 = vshrl.u32 %v314, 16
      %v525 = vshll.u32 %v314, 16
      %v527 = vrot.slane %v525, 1
      %v528 = vor.u32 %v523, %v527
      %v530 = vshll.u32 %v362, 16
      %v532 = vrot.slane %v530, 1
      %v533 = vsel %vm365, %v528, %v532
      %v535 = vshrl.u32 %v315, 16
      %v537 = vshll.u32 %v315, 16
      %v539 = vrot.slane %v537, 1
      %v540 = vor.u32 %v535, %v539
      %v542 = vshll.u32 %v363, 16
      %v544 = vrot.slane %v542, 1
      %v545 = vsel %vm365, %v540, %v544
      %v547 = vshrl.u32 %v316, 16
      %v549 = vshll.u32 %v316, 16
      %v551 = vrot.slane %v549, 1
      %v552 = vor.u32 %v547, %v551
      %v554 = vshll.u32 %v364, 16
      %v556 = vrot.slane %v554, 1
      %v557 = vsel %vm365, %v552, %v556
      %558 = vrot.lane.b32.xlu0 %v377, 4
      %v559 = vpop.permute.xlu0 %558
      %560 = vrot.lane.b32.xlu0 %v389, 4
      %v561 = vpop.permute.xlu0 %560
      %562 = vrot.lane.b32.xlu0 %v401, 4
      %v563 = vpop.permute.xlu0 %562
      %564 = vrot.lane.b32.xlu0 %v413, 4
      %v565 = vpop.permute.xlu0 %564
      %566 = vrot.lane.b32.xlu0 %v425, 4
      %v567 = vpop.permute.xlu0 %566
      %568 = vrot.lane.b32.xlu0 %v437, 4
      %v569 = vpop.permute.xlu0 %568
      %570 = vrot.lane.b32.xlu0 %v449, 4
      %v571 = vpop.permute.xlu0 %570
      %572 = vrot.lane.b32.xlu0 %v461, 4
      %v573 = vpop.permute.xlu0 %572
      %574 = vrot.lane.b32.xlu0 %v473, 4
      %v575 = vpop.permute.xlu0 %574
      %576 = vrot.lane.b32.xlu0 %v485, 4
      %v577 = vpop.permute.xlu0 %576
      %578 = vrot.lane.b32.xlu0 %v497, 4
      %v579 = vpop.permute.xlu0 %578
      %580 = vrot.lane.b32.xlu0 %v509, 4
      %v581 = vpop.permute.xlu0 %580
      %582 = vrot.lane.b32.xlu0 %v521, 4
      %v583 = vpop.permute.xlu0 %582
      %584 = vrot.lane.b32.xlu0 %v533, 4
      %v585 = vpop.permute.xlu0 %584
      %586 = vrot.lane.b32.xlu0 %v545, 4
      %v587 = vpop.permute.xlu0 %586
      %588 = vrot.lane.b32.xlu0 %v557, 4
      %v589 = vpop.permute.xlu0 %588
      %vm590 = vcmask 1046528
      %v591 = vrot.slane %v301, 1
      %v592 = vrot.slane %v349, 1
      %v593 = vsel %vm590, %v591, %v592
      %v594 = vrot.slane %v302, 1
      %v595 = vrot.slane %v350, 1
      %v596 = vsel %vm590, %v594, %v595
      %v597 = vrot.slane %v303, 1
      %v598 = vrot.slane %v351, 1
      %v599 = vsel %vm590, %v597, %v598
      %v600 = vrot.slane %v304, 1
      %v601 = vrot.slane %v352, 1
      %v602 = vsel %vm590, %v600, %v601
      %v603 = vrot.slane %v305, 1
      %v604 = vrot.slane %v353, 1
      %v605 = vsel %vm590, %v603, %v604
      %v606 = vrot.slane %v306, 1
      %v607 = vrot.slane %v354, 1
      %v608 = vsel %vm590, %v606, %v607
      %v609 = vrot.slane %v307, 1
      %v610 = vrot.slane %v355, 1
      %v611 = vsel %vm590, %v609, %v610
      %v612 = vrot.slane %v308, 1
      %v613 = vrot.slane %v356, 1
      %v614 = vsel %vm590, %v612, %v613
      %v615 = vrot.slane %v309, 1
      %v616 = vrot.slane %v357, 1
      %v617 = vsel %vm590, %v615, %v616
      %v618 = vrot.slane %v310, 1
      %v619 = vrot.slane %v358, 1
      %v620 = vsel %vm590, %v618, %v619
      %v621 = vrot.slane %v311, 1
      %v622 = vrot.slane %v359, 1
      %v623 = vsel %vm590, %v621, %v622
      %v624 = vrot.slane %v312, 1
      %v625 = vrot.slane %v360, 1
      %v626 = vsel %vm590, %v624, %v625
      %v627 = vrot.slane %v313, 1
      %v628 = vrot.slane %v361, 1
      %v629 = vsel %vm590, %v627, %v628
      %v630 = vrot.slane %v314, 1
      %v631 = vrot.slane %v362, 1
      %v632 = vsel %vm590, %v630, %v631
      %v633 = vrot.slane %v315, 1
      %v634 = vrot.slane %v363, 1
      %v635 = vsel %vm590, %v633, %v634
      %v636 = vrot.slane %v316, 1
      %v637 = vrot.slane %v364, 1
      %v638 = vsel %vm590, %v636, %v637
      %639 = vrot.lane.b32.xlu0 %v593, 8
      %v640 = vpop.permute.xlu0 %639
      %641 = vrot.lane.b32.xlu0 %v596, 8
      %v642 = vpop.permute.xlu0 %641
      %643 = vrot.lane.b32.xlu0 %v599, 8
      %v644 = vpop.permute.xlu0 %643
      %645 = vrot.lane.b32.xlu0 %v602, 8
      %v646 = vpop.permute.xlu0 %645
      %647 = vrot.lane.b32.xlu0 %v605, 8
      %v648 = vpop.permute.xlu0 %647
      %649 = vrot.lane.b32.xlu0 %v608, 8
      %v650 = vpop.permute.xlu0 %649
      %651 = vrot.lane.b32.xlu0 %v611, 8
      %v652 = vpop.permute.xlu0 %651
      %653 = vrot.lane.b32.xlu0 %v614, 8
      %v654 = vpop.permute.xlu0 %653
      %655 = vrot.lane.b32.xlu0 %v617, 8
      %v656 = vpop.permute.xlu0 %655
      %657 = vrot.lane.b32.xlu0 %v620, 8
      %v658 = vpop.permute.xlu0 %657
      %659 = vrot.lane.b32.xlu0 %v623, 8
      %v660 = vpop.permute.xlu0 %659
      %661 = vrot.lane.b32.xlu0 %v626, 8
      %v662 = vpop.permute.xlu0 %661
      %663 = vrot.lane.b32.xlu0 %v629, 8
      %v664 = vpop.permute.xlu0 %663
      %665 = vrot.lane.b32.xlu0 %v632, 8
      %v666 = vpop.permute.xlu0 %665
      %667 = vrot.lane.b32.xlu0 %v635, 8
      %v668 = vpop.permute.xlu0 %667
      %669 = vrot.lane.b32.xlu0 %v638, 8
      %v670 = vpop.permute.xlu0 %669
      %v673 = vunpack.c.l.b16 %v231
      %v674 = vunpack.c.l.b16 %v232
      %v675 = vpack.c.b16 %v674, %v673
      %676 = vrot.lane.b32.xlu0 %v302, 12
      %v677 = vpop.permute.xlu0 %676
      %678 = vrot.lane.b32.xlu0 %v303, 12
      %v679 = vpop.permute.xlu0 %678
      %680 = vrot.lane.b32.xlu0 %v304, 12
      %v681 = vpop.permute.xlu0 %680
      %682 = vrot.lane.b32.xlu0 %v305, 12
      %v683 = vpop.permute.xlu0 %682
      %684 = vrot.lane.b32.xlu0 %v306, 12
      %v685 = vpop.permute.xlu0 %684
      %686 = vrot.lane.b32.xlu0 %v307, 12
      %v687 = vpop.permute.xlu0 %686
      %688 = vrot.lane.b32.xlu0 %v308, 12
      %v689 = vpop.permute.xlu0 %688
      %690 = vrot.lane.b32.xlu0 %v309, 12
      %v691 = vpop.permute.xlu0 %690
      %692 = vrot.lane.b32.xlu0 %v310, 12
      %v693 = vpop.permute.xlu0 %692
      %694 = vrot.lane.b32.xlu0 %v311, 12
      %v695 = vpop.permute.xlu0 %694
      %696 = vrot.lane.b32.xlu0 %v312, 12
      %v697 = vpop.permute.xlu0 %696
      %698 = vrot.lane.b32.xlu0 %v313, 12
      %v699 = vpop.permute.xlu0 %698
      %700 = vrot.lane.b32.xlu0 %v314, 12
      %v701 = vpop.permute.xlu0 %700
      %702 = vrot.lane.b32.xlu0 %v315, 12
      %v703 = vpop.permute.xlu0 %702
      %704 = vrot.lane.b32.xlu0 %v316, 12
      %v705 = vpop.permute.xlu0 %704
      %706 = vrot.lane.b32.xlu0 %v675, 12
      %v707 = vpop.permute.xlu0 %706
      %v709 = vunpack.c.l.b16 %v233
      %v710 = vpack.c.b16 %v709, %v709
      %v712 = vshrl.u32 %v675, 16
      %v714 = vshll.u32 %v675, 16
      %v716 = vrot.slane %v714, 1
      %v717 = vor.u32 %v712, %v716
      %v719 = vshll.u32 %v710, 16
      %v721 = vrot.slane %v719, 1
      %v722 = vsel %vm365, %v717, %v721
      %723 = vrot.lane.b32.xlu0 %v389, 16
      %v724 = vpop.permute.xlu0 %723
      %725 = vrot.lane.b32.xlu0 %v401, 16
      %v726 = vpop.permute.xlu0 %725
      %727 = vrot.lane.b32.xlu0 %v413, 16
      %v728 = vpop.permute.xlu0 %727
      %729 = vrot.lane.b32.xlu0 %v425, 16
      %v730 = vpop.permute.xlu0 %729
      %731 = vrot.lane.b32.xlu0 %v437, 16
      %v732 = vpop.permute.xlu0 %731
      %733 = vrot.lane.b32.xlu0 %v449, 16
      %v734 = vpop.permute.xlu0 %733
      %735 = vrot.lane.b32.xlu0 %v461, 16
      %v736 = vpop.permute.xlu0 %735
      %737 = vrot.lane.b32.xlu0 %v473, 16
      %v738 = vpop.permute.xlu0 %737
      %739 = vrot.lane.b32.xlu0 %v485, 16
      %v740 = vpop.permute.xlu0 %739
      %741 = vrot.lane.b32.xlu0 %v497, 16
      %v742 = vpop.permute.xlu0 %741
      %743 = vrot.lane.b32.xlu0 %v509, 16
      %v744 = vpop.permute.xlu0 %743
      %745 = vrot.lane.b32.xlu0 %v521, 16
      %v746 = vpop.permute.xlu0 %745
      %747 = vrot.lane.b32.xlu0 %v533, 16
      %v748 = vpop.permute.xlu0 %747
      %749 = vrot.lane.b32.xlu0 %v545, 16
      %v750 = vpop.permute.xlu0 %749
      %751 = vrot.lane.b32.xlu0 %v557, 16
      %v752 = vpop.permute.xlu0 %751
      %753 = vrot.lane.b32.xlu0 %v722, 16
      %v754 = vpop.permute.xlu0 %753
      %v755 = vrot.slane %v675, 1
      %v756 = vrot.slane %v710, 1
      %v757 = vsel %vm590, %v755, %v756
      %758 = vrot.lane.b32.xlu0 %v596, 20
      %v759 = vpop.permute.xlu0 %758
      %760 = vrot.lane.b32.xlu0 %v599, 20
      %v761 = vpop.permute.xlu0 %760
      %762 = vrot.lane.b32.xlu0 %v602, 20
      %v763 = vpop.permute.xlu0 %762
      %764 = vrot.lane.b32.xlu0 %v605, 20
      %v765 = vpop.permute.xlu0 %764
      %766 = vrot.lane.b32.xlu0 %v608, 20
      %v767 = vpop.permute.xlu0 %766
      %768 = vrot.lane.b32.xlu0 %v611, 20
      %v769 = vpop.permute.xlu0 %768
      %770 = vrot.lane.b32.xlu0 %v614, 20
      %v771 = vpop.permute.xlu0 %770
      %772 = vrot.lane.b32.xlu0 %v617, 20
      %v773 = vpop.permute.xlu0 %772
      %774 = vrot.lane.b32.xlu0 %v620, 20
      %v775 = vpop.permute.xlu0 %774
      %776 = vrot.lane.b32.xlu0 %v623, 20
      %v777 = vpop.permute.xlu0 %776
      %778 = vrot.lane.b32.xlu0 %v626, 20
      %v779 = vpop.permute.xlu0 %778
      %780 = vrot.lane.b32.xlu0 %v629, 20
      %v781 = vpop.permute.xlu0 %780
      %782 = vrot.lane.b32.xlu0 %v632, 20
      %v783 = vpop.permute.xlu0 %782
      %784 = vrot.lane.b32.xlu0 %v635, 20
      %v785 = vpop.permute.xlu0 %784
      %786 = vrot.lane.b32.xlu0 %v638, 20
      %v787 = vpop.permute.xlu0 %786
      %788 = vrot.lane.b32.xlu0 %v757, 20
      %v789 = vpop.permute.xlu0 %788
      %v792 = vunpack.c.l.b16 %v234
      %v793 = vunpack.c.l.b16 %v235
      %v794 = vpack.c.b16 %v793, %v792
      %795 = vrot.lane.b32.xlu0 %v303, 24
      %v796 = vpop.permute.xlu0 %795
      %797 = vrot.lane.b32.xlu0 %v304, 24
      %v798 = vpop.permute.xlu0 %797
      %799 = vrot.lane.b32.xlu0 %v305, 24
      %v800 = vpop.permute.xlu0 %799
      %801 = vrot.lane.b32.xlu0 %v306, 24
      %v802 = vpop.permute.xlu0 %801
      %803 = vrot.lane.b32.xlu0 %v307, 24
      %v804 = vpop.permute.xlu0 %803
      %805 = vrot.lane.b32.xlu0 %v308, 24
      %v806 = vpop.permute.xlu0 %805
      %807 = vrot.lane.b32.xlu0 %v309, 24
      %v808 = vpop.permute.xlu0 %807
      %809 = vrot.lane.b32.xlu0 %v310, 24
      %v810 = vpop.permute.xlu0 %809
      %811 = vrot.lane.b32.xlu0 %v311, 24
      %v812 = vpop.permute.xlu0 %811
      %813 = vrot.lane.b32.xlu0 %v312, 24
      %v814 = vpop.permute.xlu0 %813
      %815 = vrot.lane.b32.xlu0 %v313, 24
      %v816 = vpop.permute.xlu0 %815
      %817 = vrot.lane.b32.xlu0 %v314, 24
      %v818 = vpop.permute.xlu0 %817
      %819 = vrot.lane.b32.xlu0 %v315, 24
      %v820 = vpop.permute.xlu0 %819
      %821 = vrot.lane.b32.xlu0 %v316, 24
      %v822 = vpop.permute.xlu0 %821
      %823 = vrot.lane.b32.xlu0 %v675, 24
      %v824 = vpop.permute.xlu0 %823
      %825 = vrot.lane.b32.xlu0 %v794, 24
      %v826 = vpop.permute.xlu0 %825
      %v828 = vunpack.c.l.b16 %v236
      %v829 = vpack.c.b16 %v828, %v828
      %v831 = vshrl.u32 %v794, 16
      %v833 = vshll.u32 %v794, 16
      %v835 = vrot.slane %v833, 1
      %v836 = vor.u32 %v831, %v835
      %v838 = vshll.u32 %v829, 16
      %v840 = vrot.slane %v838, 1
      %v841 = vsel %vm365, %v836, %v840
      %842 = vrot.lane.b32.xlu0 %v401, 28
      %v843 = vpop.permute.xlu0 %842
      %844 = vrot.lane.b32.xlu0 %v413, 28
      %v845 = vpop.permute.xlu0 %844
      %846 = vrot.lane.b32.xlu0 %v425, 28
      %v847 = vpop.permute.xlu0 %846
      %848 = vrot.lane.b32.xlu0 %v437, 28
      %v849 = vpop.permute.xlu0 %848
      %850 = vrot.lane.b32.xlu0 %v449, 28
      %v851 = vpop.permute.xlu0 %850
      %852 = vrot.lane.b32.xlu0 %v461, 28
      %v853 = vpop.permute.xlu0 %852
      %854 = vrot.lane.b32.xlu0 %v473, 28
      %v855 = vpop.permute.xlu0 %854
      %856 = vrot.lane.b32.xlu0 %v485, 28
      %v857 = vpop.permute.xlu0 %856
      %858 = vrot.lane.b32.xlu0 %v497, 28
      %v859 = vpop.permute.xlu0 %858
      %860 = vrot.lane.b32.xlu0 %v509, 28
      %v861 = vpop.permute.xlu0 %860
      %862 = vrot.lane.b32.xlu0 %v521, 28
      %v863 = vpop.permute.xlu0 %862
      %864 = vrot.lane.b32.xlu0 %v533, 28
      %v865 = vpop.permute.xlu0 %864
      %866 = vrot.lane.b32.xlu0 %v545, 28
      %v867 = vpop.permute.xlu0 %866
      %868 = vrot.lane.b32.xlu0 %v557, 28
      %v869 = vpop.permute.xlu0 %868
      %870 = vrot.lane.b32.xlu0 %v722, 28
      %v871 = vpop.permute.xlu0 %870
      %872 = vrot.lane.b32.xlu0 %v841, 28
      %v873 = vpop.permute.xlu0 %872
      %v874 = vrot.slane %v794, 1
      %v875 = vrot.slane %v829, 1
      %v876 = vsel %vm590, %v874, %v875
      %877 = vrot.lane.b32.xlu0 %v599, 32
      %v878 = vpop.permute.xlu0 %877
      %879 = vrot.lane.b32.xlu0 %v602, 32
      %v880 = vpop.permute.xlu0 %879
      %881 = vrot.lane.b32.xlu0 %v605, 32
      %v882 = vpop.permute.xlu0 %881
      %883 = vrot.lane.b32.xlu0 %v608, 32
      %v884 = vpop.permute.xlu0 %883
      %885 = vrot.lane.b32.xlu0 %v611, 32
      %v886 = vpop.permute.xlu0 %885
      %887 = vrot.lane.b32.xlu0 %v614, 32
      %v888 = vpop.permute.xlu0 %887
      %889 = vrot.lane.b32.xlu0 %v617, 32
      %v890 = vpop.permute.xlu0 %889
      %891 = vrot.lane.b32.xlu0 %v620, 32
      %v892 = vpop.permute.xlu0 %891
      %893 = vrot.lane.b32.xlu0 %v623, 32
      %v894 = vpop.permute.xlu0 %893
      %895 = vrot.lane.b32.xlu0 %v626, 32
      %v896 = vpop.permute.xlu0 %895
      %897 = vrot.lane.b32.xlu0 %v629, 32
      %v898 = vpop.permute.xlu0 %897
      %899 = vrot.lane.b32.xlu0 %v632, 32
      %v900 = vpop.permute.xlu0 %899
      %901 = vrot.lane.b32.xlu0 %v635, 32
      %v902 = vpop.permute.xlu0 %901
      %903 = vrot.lane.b32.xlu0 %v638, 32
      %v904 = vpop.permute.xlu0 %903
      %905 = vrot.lane.b32.xlu0 %v757, 32
      %v906 = vpop.permute.xlu0 %905
      %907 = vrot.lane.b32.xlu0 %v876, 32
      %v908 = vpop.permute.xlu0 %907
      %vm909 = vcmask 31744
      %v911 = vsel %vm909, %v301, %v559
      %v913 = vsel %vm909, %v302, %v561
      %v915 = vsel %vm909, %v303, %v563
      %v917 = vsel %vm909, %v304, %v565
      %v919 = vsel %vm909, %v305, %v567
      %v921 = vsel %vm909, %v306, %v569
      %v923 = vsel %vm909, %v307, %v571
      %v925 = vsel %vm909, %v308, %v573
      %v927 = vsel %vm909, %v309, %v575
      %v929 = vsel %vm909, %v310, %v577
      %v931 = vsel %vm909, %v311, %v579
      %v933 = vsel %vm909, %v312, %v581
      %v935 = vsel %vm909, %v313, %v583
      %v937 = vsel %vm909, %v314, %v585
      %v939 = vsel %vm909, %v315, %v587
      %v941 = vsel %vm909, %v316, %v589
      %vm942 = vcmask 64512
      %v944 = vsel %vm942, %v911, %v640
      %v946 = vsel %vm942, %v913, %v642
      %v948 = vsel %vm942, %v915, %v644
      %v950 = vsel %vm942, %v917, %v646
      %v952 = vsel %vm942, %v919, %v648
      %v954 = vsel %vm942, %v921, %v650
      %v956 = vsel %vm942, %v923, %v652
      %v958 = vsel %vm942, %v925, %v654
      %v960 = vsel %vm942, %v927, %v656
      %v962 = vsel %vm942, %v929, %v658
      %v964 = vsel %vm942, %v931, %v660
      %v966 = vsel %vm942, %v933, %v662
      %v968 = vsel %vm942, %v935, %v664
      %v970 = vsel %vm942, %v937, %v666
      %v972 = vsel %vm942, %v939, %v668
      %v974 = vsel %vm942, %v941, %v670
      %vm975 = vcmask 97280
      %v977 = vsel %vm975, %v944, %v677
      %v979 = vsel %vm975, %v946, %v679
      %v981 = vsel %vm975, %v948, %v681
      %v983 = vsel %vm975, %v950, %v683
      %v985 = vsel %vm975, %v952, %v685
      %v987 = vsel %vm975, %v954, %v687
      %v989 = vsel %vm975, %v956, %v689
      %v991 = vsel %vm975, %v958, %v691
      %v993 = vsel %vm975, %v960, %v693
      %v995 = vsel %vm975, %v962, %v695
      %v997 = vsel %vm975, %v964, %v697
      %v999 = vsel %vm975, %v966, %v699
      %v1001 = vsel %vm975, %v968, %v701
      %v1003 = vsel %vm975, %v970, %v703
      %v1005 = vsel %vm975, %v972, %v705
      %v1007 = vsel %vm975, %v974, %v707
      %vm1008 = vcmask 130048
      %v1010 = vsel %vm1008, %v977, %v724
      %v1012 = vsel %vm1008, %v979, %v726
      %v1014 = vsel %vm1008, %v981, %v728
      %v1016 = vsel %vm1008, %v983, %v730
      %v1018 = vsel %vm1008, %v985, %v732
      %v1020 = vsel %vm1008, %v987, %v734
      %v1022 = vsel %vm1008, %v989, %v736
      %v1024 = vsel %vm1008, %v991, %v738
      %v1026 = vsel %vm1008, %v993, %v740
      %v1028 = vsel %vm1008, %v995, %v742
      %v1030 = vsel %vm1008, %v997, %v744
      %v1032 = vsel %vm1008, %v999, %v746
      %v1034 = vsel %vm1008, %v1001, %v748
      %v1036 = vsel %vm1008, %v1003, %v750
      %v1038 = vsel %vm1008, %v1005, %v752
      %v1040 = vsel %vm1008, %v1007, %v754
      %vm1041 = vcmask 162816
      %v1043 = vsel %vm1041, %v1010, %v759
      %v1045 = vsel %vm1041, %v1012, %v761
      %v1047 = vsel %vm1041, %v1014, %v763
      %v1049 = vsel %vm1041, %v1016, %v765
      %v1051 = vsel %vm1041, %v1018, %v767
      %v1053 = vsel %vm1041, %v1020, %v769
      %v1055 = vsel %vm1041, %v1022, %v771
      %v1057 = vsel %vm1041, %v1024, %v773
      %v1059 = vsel %vm1041, %v1026, %v775
      %v1061 = vsel %vm1041, %v1028, %v777
      %v1063 = vsel %vm1041, %v1030, %v779
      %v1065 = vsel %vm1041, %v1032, %v781
      %v1067 = vsel %vm1041, %v1034, %v783
      %v1069 = vsel %vm1041, %v1036, %v785
      %v1071 = vsel %vm1041, %v1038, %v787
      %v1073 = vsel %vm1041, %v1040, %v789
      %vm1074 = vcmask 195584
      %v1076 = vsel %vm1074, %v1043, %v796
      %v1078 = vsel %vm1074, %v1045, %v798
      %v1080 = vsel %vm1074, %v1047, %v800
      %v1082 = vsel %vm1074, %v1049, %v802
      %v1084 = vsel %vm1074, %v1051, %v804
      %v1086 = vsel %vm1074, %v1053, %v806
      %v1088 = vsel %vm1074, %v1055, %v808
      %v1090 = vsel %vm1074, %v1057, %v810
      %v1092 = vsel %vm1074, %v1059, %v812
      %v1094 = vsel %vm1074, %v1061, %v814
      %v1096 = vsel %vm1074, %v1063, %v816
      %v1098 = vsel %vm1074, %v1065, %v818
      %v1100 = vsel %vm1074, %v1067, %v820
      %v1102 = vsel %vm1074, %v1069, %v822
      %v1104 = vsel %vm1074, %v1071, %v824
      %v1106 = vsel %vm1074, %v1073, %v826
      %vm1107 = vcmask 228352
      %v1109 = vsel %vm1107, %v1076, %v843
      %v1111 = vsel %vm1107, %v1078, %v845
      %v1113 = vsel %vm1107, %v1080, %v847
      %v1115 = vsel %vm1107, %v1082, %v849
      %v1117 = vsel %vm1107, %v1084, %v851
      %v1119 = vsel %vm1107, %v1086, %v853
      %v1121 = vsel %vm1107, %v1088, %v855
      %v1123 = vsel %vm1107, %v1090, %v857
      %v1125 = vsel %vm1107, %v1092, %v859
      %v1127 = vsel %vm1107, %v1094, %v861
      %v1129 = vsel %vm1107, %v1096, %v863
      %v1131 = vsel %vm1107, %v1098, %v865
      %v1133 = vsel %vm1107, %v1100, %v867
      %v1135 = vsel %vm1107, %v1102, %v869
      %v1137 = vsel %vm1107, %v1104, %v871
      %v1139 = vsel %vm1107, %v1106, %v873
      %vm1140 = vcmask 261120
      %v1142 = vsel %vm1140, %v1109, %v878
      %v1144 = vsel %vm1140, %v1111, %v880
      %v1146 = vsel %vm1140, %v1113, %v882
      %v1148 = vsel %vm1140, %v1115, %v884
      %v1150 = vsel %vm1140, %v1117, %v886
      %v1152 = vsel %vm1140, %v1119, %v888
      %v1154 = vsel %vm1140, %v1121, %v890
      %v1156 = vsel %vm1140, %v1123, %v892
      %v1158 = vsel %vm1140, %v1125, %v894
      %v1160 = vsel %vm1140, %v1127, %v896
      %v1162 = vsel %vm1140, %v1129, %v898
      %v1164 = vsel %vm1140, %v1131, %v900
      %v1166 = vsel %vm1140, %v1133, %v902
      %v1168 = vsel %vm1140, %v1135, %v904
      %v1170 = vsel %vm1140, %v1137, %v906
      %v1172 = vsel %vm1140, %v1139, %v908
      %v1173 = vld [vmem:[%s1] sm:$0xf]
      %v1174 = vld [vmem:[%s1 + $0x4] sm:$0xf]
      %v1175 = vld [vmem:[%s1 + $0x8] sm:$0xf]
      %v1176 = vld [vmem:[%s1 + $0xc] sm:$0xf]
      %v1177 = vld [vmem:[%s1 + $0x10] sm:$0x3]
      %v1183 = vunpack.c.l.b16 %v1173
      %v1184 = vunpack.c.l.b16 %v1174
      %v1185 = vunpack.c.l.b16 %v1175
      %v1186 = vunpack.c.l.b16 %v1176
      %v1187 = vunpack.c.l.b16 %v1177
      %v1188 = vpack.c.b16 %v1184, %v1183
      %v1189 = vpack.c.b16 %v1186, %v1185
      %v1190 = vpack.c.b16 %v1187, %v1187
      %vm1193 = vcmask 293888
      %v1194 = vsel %vm1193, %v1142, 0
      %v1196 = vsel %vm1193, %v1144, 0
      %v1198 = vsel %vm1193, %v1146, 0
      %v1200 = vsel %vm1193, %v1148, 0
      %v1202 = vsel %vm1193, %v1150, 0
      %v1204 = vsel %vm1193, %v1152, 0
      %v1206 = vsel %vm1193, %v1154, 0
      %v1208 = vsel %vm1193, %v1156, 0
      %v1210 = vsel %vm1193, %v1158, 0
      %v1212 = vsel %vm1193, %v1160, 0
      %v1214 = vsel %vm1193, %v1162, 0
      %v1216 = vsel %vm1193, %v1164, 0
      %v1218 = vsel %vm1193, %v1166, 0
      %v1220 = vsel %vm1193, %v1168, 0
      %v1222 = vsel %vm1193, %v1170, 0
      %v1224 = vsel %vm1193, %v1172, 0
      %vm1226 = vcmask 1041408
      %v1228 = vsel %vm1226, %v1190, 0
      %1230 = vmatprep.subr.bf16.mxu0 0
      %1231 = vmatpush1.bf16.msra.mxu0 %v1188
      %1232 = vmatprep.subr.bf16.mxu0 0
      %1233 = vmatpush1.bf16.msra.mxu0 %v1189
      %1234 = vmatprep.subr.bf16.mxu0 0
      %1235 = vmatpush1.bf16.msra.mxu0 %v1228
      %1236 = vmatprep.subr.bf16.mxu0 0
      %1237 = vmatpush1.bf16.msra.mxu0 0
      %1238 = vmatprep.subr.bf16.mxu0 0
      %1239 = vmatpush1.bf16.msra.mxu0 0
      %1240 = vmatprep.subr.bf16.mxu0 0
      %1241 = vmatpush1.bf16.msra.mxu0 0
      %1242 = vmatprep.subr.bf16.mxu0 0
      %1243 = vmatpush1.bf16.msra.mxu0 0
      %1244 = vmatprep.subr.bf16.mxu0 0
      %1245 = vmatpush1.bf16.msra.mxu0 0
      %1246 = vmatprep.subr.bf16.mxu0 0
      %1247 = vmatpush1.bf16.msra.mxu0 0
      %1248 = vmatprep.subr.bf16.mxu0 0
      %1249 = vmatpush1.bf16.msra.mxu0 0
      %1250 = vmatprep.subr.bf16.mxu0 0
      %1251 = vmatpush1.bf16.msra.mxu0 0
      %1252 = vmatprep.subr.bf16.mxu0 0
      %1253 = vmatpush1.bf16.msra.mxu0 0
      %1254 = vmatprep.subr.bf16.mxu0 0
      %1255 = vmatpush1.bf16.msra.mxu0 0
      %1256 = vmatprep.subr.bf16.mxu0 0
      %1257 = vmatpush1.bf16.msra.mxu0 0
      %1258 = vmatprep.subr.bf16.mxu0 0
      %1259 = vmatpush1.bf16.msra.mxu0 0
      %1260 = vmatprep.subr.bf16.mxu0 0
      %1261 = vmatpush1.bf16.msra.mxu0 0
      %1262 = vmatprep.mubr.bf16.mxu0 0
      %1263 = vmatmul.mubr.bf16.gmra.mrb[0].mxu0 %v1194
      %v1264 = vpop.f32.mrb[0].mxu0
      %v1265 = vadd.f32 0.0, %v1264
      %v1266 = vpop.f32.mrb[0].mxu0
      %v1267 = vpop.f32.mrb[0].mxu0
      %v1268 = vadd.f32 0.0, %v1267
      %v1269 = vpop.f32.mrb[0].mxu0
      %1270 = vmatprep.mubr.bf16.mxu0 0
      %1271 = vmatmul.mubr.bf16.gmra.mrb[0].mxu0 %v1196
      %v1272 = vpop.f32.mrb[0].mxu0
      %v1273 = vadd.f32 0.0, %v1272
      %v1274 = vpop.f32.mrb[0].mxu0
      %v1275 = vpop.f32.mrb[0].mxu0
      %v1276 = vadd.f32 0.0, %v1275
      %v1277 = vpop.f32.mrb[0].mxu0
      %1278 = vmatprep.mubr.bf16.mxu0 0
      %1279 = vmatmul.mubr.bf16.gmra.mrb[0].mxu0 %v1198
      %v1280 = vpop.f32.mrb[0].mxu0
      %v1281 = vadd.f32 0.0, %v1280
      %v1282 = vpop.f32.mrb[0].mxu0
      %v1283 = vpop.f32.mrb[0].mxu0
      %v1284 = vadd.f32 0.0, %v1283
      %v1285 = vpop.f32.mrb[0].mxu0
      %1286 = vmatprep.mubr.bf16.mxu0 0
      %1287 = vmatmul.mubr.bf16.gmra.mrb[0].mxu0 %v1200
      %v1288 = vpop.f32.mrb[0].mxu0
      %v1289 = vadd.f32 0.0, %v1288
      %v1290 = vpop.f32.mrb[0].mxu0
      %v1291 = vpop.f32.mrb[0].mxu0
      %v1292 = vadd.f32 0.0, %v1291
      %v1293 = vpop.f32.mrb[0].mxu0
      %1294 = vmatprep.mubr.bf16.mxu0 0
      %1295 = vmatmul.mubr.bf16.gmra.mrb[0].mxu0 %v1202
      %v1296 = vpop.f32.mrb[0].mxu0
      %v1297 = vadd.f32 0.0, %v1296
      %v1298 = vpop.f32.mrb[0].mxu0
      %v1299 = vpop.f32.mrb[0].mxu0
      %v1300 = vadd.f32 0.0, %v1299
      %v1301 = vpop.f32.mrb[0].mxu0
      %1302 = vmatprep.mubr.bf16.mxu0 0
      %1303 = vmatmul.mubr.bf16.gmra.mrb[0].mxu0 %v1204
      %v1304 = vpop.f32.mrb[0].mxu0
      %v1305 = vadd.f32 0.0, %v1304
      %v1306 = vpop.f32.mrb[0].mxu0
      %v1307 = vpop.f32.mrb[0].mxu0
      %v1308 = vadd.f32 0.0, %v1307
      %v1309 = vpop.f32.mrb[0].mxu0
      %1310 = vmatprep.mubr.bf16.mxu0 0
      %1311 = vmatmul.mubr.bf16.gmra.mrb[0].mxu0 %v1206
      %v1312 = vpop.f32.mrb[0].mxu0
      %v1313 = vadd.f32 0.0, %v1312
      %v1314 = vpop.f32.mrb[0].mxu0
      %v1315 = vpop.f32.mrb[0].mxu0
      %v1316 = vadd.f32 0.0, %v1315
      %v1317 = vpop.f32.mrb[0].mxu0
      %1318 = vmatprep.mubr.bf16.mxu0 0
      %1319 = vmatmul.mubr.bf16.gmra.mrb[0].mxu0 %v1208
      %v1320 = vpop.f32.mrb[0].mxu0
      %v1321 = vadd.f32 0.0, %v1320
      %v1322 = vpop.f32.mrb[0].mxu0
      %v1323 = vpop.f32.mrb[0].mxu0
      %v1324 = vadd.f32 0.0, %v1323
      %v1325 = vpop.f32.mrb[0].mxu0
      %1326 = vmatprep.mubr.bf16.mxu0 0
      %1327 = vmatmul.mubr.bf16.gmra.mrb[0].mxu0 %v1210
      %v1328 = vpop.f32.mrb[0].mxu0
      %v1329 = vadd.f32 0.0, %v1328
      %v1330 = vpop.f32.mrb[0].mxu0
      %v1331 = vpop.f32.mrb[0].mxu0
      %v1332 = vadd.f32 0.0, %v1331
      %v1333 = vpop.f32.mrb[0].mxu0
      %1334 = vmatprep.mubr.bf16.mxu0 0
      %1335 = vmatmul.mubr.bf16.gmra.mrb[0].mxu0 %v1212
      %v1336 = vpop.f32.mrb[0].mxu0
      %v1337 = vadd.f32 0.0, %v1336
      %v1338 = vpop.f32.mrb[0].mxu0
      %v1339 = vpop.f32.mrb[0].mxu0
      %v1340 = vadd.f32 0.0, %v1339
      %v1341 = vpop.f32.mrb[0].mxu0
      %1342 = vmatprep.mubr.bf16.mxu0 0
      %1343 = vmatmul.mubr.bf16.gmra.mrb[0].mxu0 %v1214
      %v1344 = vpop.f32.mrb[0].mxu0
      %v1345 = vadd.f32 0.0, %v1344
      %v1346 = vpop.f32.mrb[0].mxu0
      %v1347 = vpop.f32.mrb[0].mxu0
      %v1348 = vadd.f32 0.0, %v1347
      %v1349 = vpop.f32.mrb[0].mxu0
      %1350 = vmatprep.mubr.bf16.mxu0 0
      %1351 = vmatmul.mubr.bf16.gmra.mrb[0].mxu0 %v1216
      %v1352 = vpop.f32.mrb[0].mxu0
      %v1353 = vadd.f32 0.0, %v1352
      %v1354 = vpop.f32.mrb[0].mxu0
      %v1355 = vpop.f32.mrb[0].mxu0
      %v1356 = vadd.f32 0.0, %v1355
      %v1357 = vpop.f32.mrb[0].mxu0
      %1358 = vmatprep.mubr.bf16.mxu0 0
      %1359 = vmatmul.mubr.bf16.gmra.mrb[0].mxu0 %v1218
      %v1360 = vpop.f32.mrb[0].mxu0
      %v1361 = vadd.f32 0.0, %v1360
      %v1362 = vpop.f32.mrb[0].mxu0
      %v1363 = vpop.f32.mrb[0].mxu0
      %v1364 = vadd.f32 0.0, %v1363
      %v1365 = vpop.f32.mrb[0].mxu0
      %1366 = vmatprep.mubr.bf16.mxu0 0
      %1367 = vmatmul.mubr.bf16.gmra.mrb[0].mxu0 %v1220
      %v1368 = vpop.f32.mrb[0].mxu0
      %v1369 = vadd.f32 0.0, %v1368
      %v1370 = vpop.f32.mrb[0].mxu0
      %v1371 = vpop.f32.mrb[0].mxu0
      %v1372 = vadd.f32 0.0, %v1371
      %v1373 = vpop.f32.mrb[0].mxu0
      %1374 = vmatprep.mubr.bf16.mxu0 0
      %1375 = vmatmul.mubr.bf16.gmra.mrb[0].mxu0 %v1222
      %v1376 = vpop.f32.mrb[0].mxu0
      %v1377 = vadd.f32 0.0, %v1376
      %v1378 = vpop.f32.mrb[0].mxu0
      %v1379 = vpop.f32.mrb[0].mxu0
      %v1380 = vadd.f32 0.0, %v1379
      %v1381 = vpop.f32.mrb[0].mxu0
      %1382 = vmatprep.mubr.bf16.mxu0 0
      %1383 = vmatmul.mubr.bf16.gmra.mrb[0].mxu0 %v1224
      %v1384 = vpop.f32.mrb[0].mxu0
      %v1385 = vadd.f32 0.0, %v1384
      %v1386 = vpop.f32.mrb[0].mxu0
      %v1387 = vpop.f32.mrb[0].mxu0
      %v1388 = vadd.f32 0.0, %v1387
      %v1389 = vpop.f32.mrb[0].mxu0
      %1390 = vdwg.mxu0
      %v1391 = vpack.c.bf16 %v1268, %v1265
      %v1392 = vpack.c.bf16 %v1276, %v1273
      %v1393 = vpack.c.bf16 %v1284, %v1281
      %v1394 = vpack.c.bf16 %v1292, %v1289
      %v1395 = vpack.c.bf16 %v1300, %v1297
      %v1396 = vpack.c.bf16 %v1308, %v1305
      %v1397 = vpack.c.bf16 %v1316, %v1313
      %v1398 = vpack.c.bf16 %v1324, %v1321
      %v1399 = vpack.c.bf16 %v1332, %v1329
      %v1400 = vpack.c.bf16 %v1340, %v1337
      %v1401 = vpack.c.bf16 %v1348, %v1345
      %v1402 = vpack.c.bf16 %v1356, %v1353
      %v1403 = vpack.c.bf16 %v1364, %v1361
      %v1404 = vpack.c.bf16 %v1372, %v1369
      %v1405 = vpack.c.bf16 %v1380, %v1377
      %v1406 = vpack.c.bf16 %v1388, %v1385
      %v1423 = vunpack.c.l.b16 %v1391
      %v1424 = vunpack.c.h.b16 %v1391
      %v1425 = vunpack.c.l.b16 %v1392
      %v1426 = vunpack.c.h.b16 %v1392
      %v1427 = vunpack.c.l.b16 %v1393
      %v1428 = vunpack.c.h.b16 %v1393
      %v1429 = vunpack.c.l.b16 %v1394
      %v1430 = vunpack.c.h.b16 %v1394
      %v1431 = vunpack.c.l.b16 %v1395
      %v1432 = vunpack.c.h.b16 %v1395
      %v1433 = vunpack.c.l.b16 %v1396
      %v1434 = vunpack.c.h.b16 %v1396
      %v1435 = vunpack.c.l.b16 %v1397
      %v1436 = vunpack.c.h.b16 %v1397
      %v1437 = vunpack.c.l.b16 %v1398
      %v1438 = vunpack.c.h.b16 %v1398
      %v1439 = vunpack.c.l.b16 %v1399
      %v1440 = vunpack.c.h.b16 %v1399
      %v1441 = vunpack.c.l.b16 %v1400
      %v1442 = vunpack.c.h.b16 %v1400
      %v1443 = vunpack.c.l.b16 %v1401
      %v1444 = vunpack.c.h.b16 %v1401
      %v1445 = vunpack.c.l.b16 %v1402
      %v1446 = vunpack.c.h.b16 %v1402
      %v1447 = vunpack.c.l.b16 %v1403
      %v1448 = vunpack.c.h.b16 %v1403
      %v1449 = vunpack.c.l.b16 %v1404
      %v1450 = vunpack.c.h.b16 %v1404
      %v1451 = vunpack.c.l.b16 %v1405
      %v1452 = vunpack.c.h.b16 %v1405
      %v1453 = vunpack.c.l.b16 %v1406
      %v1454 = vunpack.c.h.b16 %v1406
      %v1455 = vpack.c.b16 %v1423, %v1423
      %v1456 = vpack.c.b16 %v1424, %v1424
      %v1457 = vpack.c.b16 %v1425, %v1425
      %v1458 = vpack.c.b16 %v1426, %v1426
      %v1459 = vpack.c.b16 %v1427, %v1427
      %v1460 = vpack.c.b16 %v1428, %v1428
      %v1461 = vpack.c.b16 %v1429, %v1429
      %v1462 = vpack.c.b16 %v1430, %v1430
      %v1463 = vpack.c.b16 %v1431, %v1431
      %v1464 = vpack.c.b16 %v1432, %v1432
      %v1465 = vpack.c.b16 %v1433, %v1433
      %v1466 = vpack.c.b16 %v1434, %v1434
      %v1467 = vpack.c.b16 %v1435, %v1435
      %v1468 = vpack.c.b16 %v1436, %v1436
      %v1469 = vpack.c.b16 %v1437, %v1437
      %v1470 = vpack.c.b16 %v1438, %v1438
      %v1471 = vpack.c.b16 %v1439, %v1439
      %v1472 = vpack.c.b16 %v1440, %v1440
      %v1473 = vpack.c.b16 %v1441, %v1441
      %v1474 = vpack.c.b16 %v1442, %v1442
      %v1475 = vpack.c.b16 %v1443, %v1443
      %v1476 = vpack.c.b16 %v1444, %v1444
      %v1477 = vpack.c.b16 %v1445, %v1445
      %v1478 = vpack.c.b16 %v1446, %v1446
      %v1479 = vpack.c.b16 %v1447, %v1447
      %v1480 = vpack.c.b16 %v1448, %v1448
      %v1481 = vpack.c.b16 %v1449, %v1449
      %v1482 = vpack.c.b16 %v1450, %v1450
      %v1483 = vpack.c.b16 %v1451, %v1451
      %v1484 = vpack.c.b16 %v1452, %v1452
      %v1485 = vpack.c.b16 %v1453, %v1453
      %v1486 = vpack.c.b16 %v1454, %v1454
      %vm1519 = vcmask 60416
      %1520 = vst.msk [vmem:[%s177] sm:$0xf] %vm1519, %v1455
      %1521 = vst.msk [vmem:[%s177 + $0x4] sm:$0xf] %vm1519, %v1456
      %1522 = vst.msk [vmem:[%s177 + $0x8] sm:$0xf] %vm1519, %v1457
      %1523 = vst.msk [vmem:[%s177 + $0xc] sm:$0xf] %vm1519, %v1458
      %1524 = vst.msk [vmem:[%s177 + $0x10] sm:$0xf] %vm1519, %v1459
      %1525 = vst.msk [vmem:[%s177 + $0x14] sm:$0xf] %vm1519, %v1460
      %1526 = vst.msk [vmem:[%s177 + $0x18] sm:$0xf] %vm1519, %v1461
      %1527 = vst.msk [vmem:[%s177 + $0x1c] sm:$0xf] %vm1519, %v1462
      %1528 = vst.msk [vmem:[%s177 + $0x20] sm:$0xf] %vm1519, %v1463
      %1529 = vst.msk [vmem:[%s177 + $0x24] sm:$0xf] %vm1519, %v1464
      %1530 = vst.msk [vmem:[%s177 + $0x28] sm:$0xf] %vm1519, %v1465
      %1531 = vst.msk [vmem:[%s177 + $0x2c] sm:$0xf] %vm1519, %v1466
      %1532 = vst.msk [vmem:[%s177 + $0x30] sm:$0xf] %vm1519, %v1467
      %1533 = vst.msk [vmem:[%s177 + $0x34] sm:$0xf] %vm1519, %v1468
      %1534 = vst.msk [vmem:[%s177 + $0x38] sm:$0xf] %vm1519, %v1469
      %1535 = vst.msk [vmem:[%s177 + $0x3c] sm:$0xf] %vm1519, %v1470
      %1536 = vst.msk [vmem:[%s177 + $0x40] sm:$0xf] %vm1519, %v1471
      %1537 = vst.msk [vmem:[%s177 + $0x44] sm:$0xf] %vm1519, %v1472
      %1538 = vst.msk [vmem:[%s177 + $0x48] sm:$0xf] %vm1519, %v1473
      %1539 = vst.msk [vmem:[%s177 + $0x4c] sm:$0xf] %vm1519, %v1474
      %1540 = vst.msk [vmem:[%s177 + $0x50] sm:$0xf] %vm1519, %v1475
      %1541 = vst.msk [vmem:[%s177 + $0x54] sm:$0xf] %vm1519, %v1476
      %1542 = vst.msk [vmem:[%s177 + $0x58] sm:$0xf] %vm1519, %v1477
      %1543 = vst.msk [vmem:[%s177 + $0x5c] sm:$0xf] %vm1519, %v1478
      %1544 = vst.msk [vmem:[%s177 + $0x60] sm:$0xf] %vm1519, %v1479
      %1545 = vst.msk [vmem:[%s177 + $0x64] sm:$0xf] %vm1519, %v1480
      %1546 = vst.msk [vmem:[%s177 + $0x68] sm:$0xf] %vm1519, %v1481
      %1547 = vst.msk [vmem:[%s177 + $0x6c] sm:$0xf] %vm1519, %v1482
      %1548 = vst.msk [vmem:[%s177 + $0x70] sm:$0xf] %vm1519, %v1483
      %1549 = vst.msk [vmem:[%s177 + $0x74] sm:$0xf] %vm1519, %v1484
      %1550 = vst.msk [vmem:[%s177 + $0x78] sm:$0xf] %vm1519, %v1485
      %1551 = vst.msk [vmem:[%s177 + $0x7c] sm:$0xf] %vm1519, %v1486
      %v1552 = vsel %vm942, %v1265, 0.0
      %v1553 = vsel %vm942, %v1268, 0.0
      %v1554 = vadd.f32 %v1552, %v1553
      %v1555 = vsel %vm942, %v1273, 0.0
      %v1556 = vadd.f32 %v1554, %v1555
      %v1557 = vsel %vm942, %v1276, 0.0
      %v1558 = vadd.f32 %v1556, %v1557
      %v1559 = vsel %vm942, %v1281, 0.0
      %v1560 = vadd.f32 %v1558, %v1559
      %v1561 = vsel %vm942, %v1284, 0.0
      %v1562 = vadd.f32 %v1560, %v1561
      %v1563 = vsel %vm942, %v1289, 0.0
      %v1564 = vadd.f32 %v1562, %v1563
      %v1565 = vsel %vm942, %v1292, 0.0
      %v1566 = vadd.f32 %v1564, %v1565
      %v1567 = vsel %vm942, %v1297, 0.0
      %v1568 = vadd.f32 %v1566, %v1567
      %v1569 = vsel %vm942, %v1300, 0.0
      %v1570 = vadd.f32 %v1568, %v1569
      %v1571 = vsel %vm942, %v1305, 0.0
      %v1572 = vadd.f32 %v1570, %v1571
      %v1573 = vsel %vm942, %v1308, 0.0
      %v1574 = vadd.f32 %v1572, %v1573
      %v1575 = vsel %vm942, %v1313, 0.0
      %v1576 = vadd.f32 %v1574, %v1575
      %v1577 = vsel %vm942, %v1316, 0.0
      %v1578 = vadd.f32 %v1576, %v1577
      %v1579 = vsel %vm942, %v1321, 0.0
      %v1580 = vadd.f32 %v1578, %v1579
      %v1581 = vsel %vm942, %v1324, 0.0
      %v1582 = vadd.f32 %v1580, %v1581
      %v1583 = vsel %vm942, %v1329, 0.0
      %v1584 = vadd.f32 %v1582, %v1583
      %v1585 = vsel %vm942, %v1332, 0.0
      %v1586 = vadd.f32 %v1584, %v1585
      %v1587 = vsel %vm942, %v1337, 0.0
      %v1588 = vadd.f32 %v1586, %v1587
      %v1589 = vsel %vm942, %v1340, 0.0
      %v1590 = vadd.f32 %v1588, %v1589
      %v1591 = vsel %vm942, %v1345, 0.0
      %v1592 = vadd.f32 %v1590, %v1591
      %v1593 = vsel %vm942, %v1348, 0.0
      %v1594 = vadd.f32 %v1592, %v1593
      %v1595 = vsel %vm942, %v1353, 0.0
      %v1596 = vadd.f32 %v1594, %v1595
      %v1597 = vsel %vm942, %v1356, 0.0
      %v1598 = vadd.f32 %v1596, %v1597
      %v1599 = vsel %vm942, %v1361, 0.0
      %v1600 = vadd.f32 %v1598, %v1599
      %v1601 = vsel %vm942, %v1364, 0.0
      %v1602 = vadd.f32 %v1600, %v1601
      %v1603 = vsel %vm942, %v1369, 0.0
      %v1604 = vadd.f32 %v1602, %v1603
      %v1605 = vsel %vm942, %v1372, 0.0
      %v1606 = vadd.f32 %v1604, %v1605
      %v1607 = vsel %vm942, %v1377, 0.0
      %v1608 = vadd.f32 %v1606, %v1607
      %v1609 = vsel %vm942, %v1380, 0.0
      %v1610 = vadd.f32 %v1608, %v1609
      %v1611 = vsel %vm942, %v1385, 0.0
      %v1612 = vadd.f32 %v1610, %v1611
      %v1613 = vsel %vm942, %v1388, 0.0
      %v1614 = vadd.f32 %v1612, %v1613
      %v1615 = vrot.slane %v1614, 4
      %v1616 = vadd.f32 %v1614, %v1615
      %v1617 = vrot.slane %v1616, 2
      %v1618 = vadd.f32 %v1616, %v1617
      %v1619 = vrot.slane %v1618, 1
      %v1620 = vadd.f32 %v1618, %v1619
      %v1621 = vmul.f32 %v1620, 0.00390625
      %v1622 = vsub.f32 %v1265, %v1621
      %v1623 = vsub.f32 %v1268, %v1621
      %v1624 = vsub.f32 %v1273, %v1621
      %v1625 = vsub.f32 %v1276, %v1621
      %v1626 = vsub.f32 %v1281, %v1621
      %v1627 = vsub.f32 %v1284, %v1621
      %v1628 = vsub.f32 %v1289, %v1621
      %v1629 = vsub.f32 %v1292, %v1621
      %v1630 = vsub.f32 %v1297, %v1621
      %v1631 = vsub.f32 %v1300, %v1621
      %v1632 = vsub.f32 %v1305, %v1621
      %v1633 = vsub.f32 %v1308, %v1621
      %v1634 = vsub.f32 %v1313, %v1621
      %v1635 = vsub.f32 %v1316, %v1621
      %v1636 = vsub.f32 %v1321, %v1621
      %v1637 = vsub.f32 %v1324, %v1621
      %v1638 = vsub.f32 %v1329, %v1621
      %v1639 = vsub.f32 %v1332, %v1621
      %v1640 = vsub.f32 %v1337, %v1621
      %v1641 = vsub.f32 %v1340, %v1621
      %v1642 = vsub.f32 %v1345, %v1621
      %v1643 = vsub.f32 %v1348, %v1621
      %v1644 = vsub.f32 %v1353, %v1621
      %v1645 = vsub.f32 %v1356, %v1621
      %v1646 = vsub.f32 %v1361, %v1621
      %v1647 = vsub.f32 %v1364, %v1621
      %v1648 = vsub.f32 %v1369, %v1621
      %v1649 = vsub.f32 %v1372, %v1621
      %v1650 = vsub.f32 %v1377, %v1621
      %v1651 = vsub.f32 %v1380, %v1621
      %v1652 = vsub.f32 %v1385, %v1621
      %v1653 = vsub.f32 %v1388, %v1621
      %vm1654 = vcmask 57344
      %1655 = vst.msk [vmem:[%s181] sm:$0x1] %vm1654, %v1620
      %v1656 = vmul.f32 %v1622, %v1622
      %v1657 = vmul.f32 %v1623, %v1623
      %v1658 = vmul.f32 %v1624, %v1624
      %v1659 = vmul.f32 %v1625, %v1625
      %v1660 = vmul.f32 %v1626, %v1626
      %v1661 = vmul.f32 %v1627, %v1627
      %v1662 = vmul.f32 %v1628, %v1628
      %v1663 = vmul.f32 %v1629, %v1629
      %v1664 = vmul.f32 %v1630, %v1630
      %v1665 = vmul.f32 %v1631, %v1631
      %v1666 = vmul.f32 %v1632, %v1632
      %v1667 = vmul.f32 %v1633, %v1633
      %v1668 = vmul.f32 %v1634, %v1634
      %v1669 = vmul.f32 %v1635, %v1635
      %v1670 = vmul.f32 %v1636, %v1636
      %v1671 = vmul.f32 %v1637, %v1637
      %v1672 = vmul.f32 %v1638, %v1638
      %v1673 = vmul.f32 %v1639, %v1639
      %v1674 = vmul.f32 %v1640, %v1640
      %v1675 = vmul.f32 %v1641, %v1641
      %v1676 = vmul.f32 %v1642, %v1642
      %v1677 = vmul.f32 %v1643, %v1643
      %v1678 = vmul.f32 %v1644, %v1644
      %v1679 = vmul.f32 %v1645, %v1645
      %v1680 = vmul.f32 %v1646, %v1646
      %v1681 = vmul.f32 %v1647, %v1647
      %v1682 = vmul.f32 %v1648, %v1648
      %v1683 = vmul.f32 %v1649, %v1649
      %v1684 = vmul.f32 %v1650, %v1650
      %v1685 = vmul.f32 %v1651, %v1651
      %v1686 = vmul.f32 %v1652, %v1652
      %v1687 = vmul.f32 %v1653, %v1653
      %v1688 = vsel %vm942, %v1656, 0.0
      %v1689 = vsel %vm942, %v1657, 0.0
      %v1690 = vadd.f32 %v1688, %v1689
      %v1691 = vsel %vm942, %v1658, 0.0
      %v1692 = vadd.f32 %v1690, %v1691
      %v1693 = vsel %vm942, %v1659, 0.0
      %v1694 = vadd.f32 %v1692, %v1693
      %v1695 = vsel %vm942, %v1660, 0.0
      %v1696 = vadd.f32 %v1694, %v1695
      %v1697 = vsel %vm942, %v1661, 0.0
      %v1698 = vadd.f32 %v1696, %v1697
      %v1699 = vsel %vm942, %v1662, 0.0
      %v1700 = vadd.f32 %v1698, %v1699
      %v1701 = vsel %vm942, %v1663, 0.0
      %v1702 = vadd.f32 %v1700, %v1701
      %v1703 = vsel %vm942, %v1664, 0.0
      %v1704 = vadd.f32 %v1702, %v1703
      %v1705 = vsel %vm942, %v1665, 0.0
      %v1706 = vadd.f32 %v1704, %v1705
      %v1707 = vsel %vm942, %v1666, 0.0
      %v1708 = vadd.f32 %v1706, %v1707
      %v1709 = vsel %vm942, %v1667, 0.0
      %v1710 = vadd.f32 %v1708, %v1709
      %v1711 = vsel %vm942, %v1668, 0.0
      %v1712 = vadd.f32 %v1710, %v1711
      %v1713 = vsel %vm942, %v1669, 0.0
      %v1714 = vadd.f32 %v1712, %v1713
      %v1715 = vsel %vm942, %v1670, 0.0
      %v1716 = vadd.f32 %v1714, %v1715
      %v1717 = vsel %vm942, %v1671, 0.0
      %v1718 = vadd.f32 %v1716, %v1717
      %v1719 = vsel %vm942, %v1672, 0.0
      %v1720 = vadd.f32 %v1718, %v1719
      %v1721 = vsel %vm942, %v1673, 0.0
      %v1722 = vadd.f32 %v1720, %v1721
      %v1723 = vsel %vm942, %v1674, 0.0
      %v1724 = vadd.f32 %v1722, %v1723
      %v1725 = vsel %vm942, %v1675, 0.0
      %v1726 = vadd.f32 %v1724, %v1725
      %v1727 = vsel %vm942, %v1676, 0.0
      %v1728 = vadd.f32 %v1726, %v1727
      %v1729 = vsel %vm942, %v1677, 0.0
      %v1730 = vadd.f32 %v1728, %v1729
      %v1731 = vsel %vm942, %v1678, 0.0
      %v1732 = vadd.f32 %v1730, %v1731
      %v1733 = vsel %vm942, %v1679, 0.0
      %v1734 = vadd.f32 %v1732, %v1733
      %v1735 = vsel %vm942, %v1680, 0.0
      %v1736 = vadd.f32 %v1734, %v1735
      %v1737 = vsel %vm942, %v1681, 0.0
      %v1738 = vadd.f32 %v1736, %v1737
      %v1739 = vsel %vm942, %v1682, 0.0
      %v1740 = vadd.f32 %v1738, %v1739
      %v1741 = vsel %vm942, %v1683, 0.0
      %v1742 = vadd.f32 %v1740, %v1741
      %v1743 = vsel %vm942, %v1684, 0.0
      %v1744 = vadd.f32 %v1742, %v1743
      %v1745 = vsel %vm942, %v1685, 0.0
      %v1746 = vadd.f32 %v1744, %v1745
      %v1747 = vsel %vm942, %v1686, 0.0
      %v1748 = vadd.f32 %v1746, %v1747
      %v1749 = vsel %vm942, %v1687, 0.0
      %v1750 = vadd.f32 %v1748, %v1749
      %v1751 = vrot.slane %v1750, 4
      %v1752 = vadd.f32 %v1750, %v1751
      %v1753 = vrot.slane %v1752, 2
      %v1754 = vadd.f32 %v1752, %v1753
      %v1755 = vrot.slane %v1754, 1
      %v1756 = vadd.f32 %v1754, %v1755
      %1757 = vst.msk [vmem:[%s181 + $0x1] sm:$0x1] %vm1654, %v1756
      %p1758 = scmp.lt.s32.totalorder %s15, 1
      %s1759 = scalar_select %p1758, %s15, 1
      %s1760 = smul.addr %s1759, 32
      %s1761 = smul.addr %s1760, 4
      %s1762 = scalar_lea.vmem %s2, %s1761
      %p1763 = scmp.lt.s32.totalorder %s15, 1
      %s1764 = scalar_select %p1763, %s15, 1
      %s1765 = smul.addr %s1764, 2
      %s1766 = scalar_lea.vmem %s3, %s1765
      // Predicated region
      $region29: #{unet_block_forward.3} parent=27 // pred_check
        %p1767 = pneg %p80
      $region30: #{unet_block_forward.3} parent=27 // pred_check_branch
        %1769 = sbr.rel (%p1767) target = $region32
      $region31: #{unet_block_forward.3} parent=27 // pred_region
        _
      $region32: #{unet_block_forward.3} parent=27 // pred_fallthru
        _
      // Predicated region
      $region33: #{unet_block_forward.3} parent=27 // pred_check
        %p1770 = pneg %p106
      $region34: #{unet_block_forward.3} parent=27 // pred_check_branch
        %1772 = sbr.rel (%p1770) target = $region36
      $region35: #{unet_block_forward.3} parent=27 // pred_region
        _
      $region36: #{unet_block_forward.3} parent=27 // pred_fallthru
        _
    $region28: #{unet_block_forward.3} parent=5 // pred_fallthru
      _
    %p1773 = scmp.le.s32.totalorder 2, %s10
    // Predicated region
    $region37: #{unet_block_forward.3} parent=5 // pred_check
      %p1774 = pneg %p1773
    $region38: #{unet_block_forward.3} parent=5 // pred_check_branch
      %1776 = sbr.rel (%p1774) target = $region40
    $region39: #{unet_block_forward.3} parent=5 // pred_region
      %s1777 = ssub.s32 %s10, 2
      // Predicated region
      $region41: #{unet_block_forward.3} parent=39 // pred_check
        %p1778 = pneg %p86
      $region42: #{unet_block_forward.3} parent=39 // pred_check_branch
        %1780 = sbr.rel (%p1778) target = $region44
      $region43: #{unet_block_forward.3} parent=39 // pred_region
        %p1781 = scmp.lt.s32.totalorder %s16, 1
        %s1782 = scalar_select %p1781, %s16, 1
        %s1783 = smul.addr %s1782, 32
        %s1784 = smul.addr %s1783, 4
        %s1785 = scalar_lea.vmem %s2, %s1784
      $region44: #{unet_block_forward.3} parent=39 // pred_fallthru
        _
      // Predicated region
      $region45: #{unet_block_forward.3} parent=39 // pred_check
        %p1786 = pneg %p112
      $region46: #{unet_block_forward.3} parent=39 // pred_check_branch
        %1788 = sbr.rel (%p1786) target = $region48
      $region47: #{unet_block_forward.3} parent=39 // pred_region
        %p1789 = scmp.lt.s32.totalorder %s16, 1
        %s1790 = scalar_select %p1789, %s16, 1
        %s1791 = smul.addr %s1790, 2
        %s1792 = scalar_lea.vmem %s3, %s1791
      $region48: #{unet_block_forward.3} parent=39 // pred_fallthru
        _
    $region40: #{unet_block_forward.3} parent=5 // pred_fallthru
      _
  $region6: #{unet_block_forward.3} parent=0 // loop_footer
    %s14 = sadd.s32 1, %s10
  $region7: #{unet_block_forward.3} parent=0 // loop_footer_branch
    %9 = sbr.rel target = $region3
  $region8: #{unet_block_forward.3} parent=0 // loop_exit
    _

// kernel: unet_block_forward.4
$region0: #{unet_block_forward.4}
  #allocation0 [shape = 'u32[]', space=smem, size = 0x4, offset = 0x4, fixed_abs, tag = 'smem constant byte address 0x4 - core index']
  #allocation1 [shape = 'u32[144,128]{1,0:T(1,128)}', space=vmem, size = 0x12000, scoped, tag = 'internal scratch']
  %s0 = inlined_call_operand.vmem [shape: bf16[2,256,8], index: 0, kind: input, shape index: {}]
  %s1 = inlined_call_operand.vmem [shape: f32[1,1,8], index: 1, kind: input, shape index: {}]
  %s2 = inlined_call_operand.vmem [shape: f32[2,1,8], index: 2, kind: input, shape index: {}]
  %s3 = inlined_call_operand.vmem [shape: bf16[72,8], index: 3, kind: input, shape index: {}]
  %s4 = inlined_call_operand.vmem [shape: bf16[2,256,8], index: 4, kind: output, shape index: {0}]
  %s5 = inlined_call_operand.vmem [shape: f32[2,2,8], index: 5, kind: output, shape index: {1}]
  %6 = xla_tuple %s4, %s5
  %s7 = sld [smem:[#allocation0]]
  $region57: #{unet_block_forward.4} parent=0
    _
  %s9 = ssub.s32 1, %s7
  %s10 = scalar_select 0, %s9, %s7
  loop: start=0, step=1, limit=4
  $region2: #{unet_block_forward.4} parent=0 // loop_pre_header
    _
  $region3: #{unet_block_forward.4} parent=0 // loop_header
    %s12 = sphi 0, %s16
    %p13 = scmp.ge.s32.totalorder %s12, 4
    %s22 = sphi 0, %s24
    %s25 = sphi 0, %s22
    %s26 = sphi 0, %s25
    %s42 = sphi 0, %s26
    %s46 = sphi 0, %s46
    %s48 = sphi 0, %s46
    %s49 = sphi 0, %s48
    %s63 = sphi 0, %s49
    %s69 = sphi 0, %s71
    %s72 = sphi 0, %s69
    %s73 = sphi 0, %s72
    %s89 = sphi 0, %s73
    %s93 = sphi 0, %s93
    %s95 = sphi 0, %s93
    %s96 = sphi 0, %s95
    %s110 = sphi 0, %s96
    %s116 = sphi 0, %s118
    %s119 = sphi 0, %s116
    %s120 = sphi 0, %s119
    %s136 = sphi 0, %s120
    %s142 = sphi 0, %s144
    %s145 = sphi 0, %s142
    %s146 = sphi 0, %s145
    %s162 = sphi 0, %s146
  $region4: #{unet_block_forward.4} parent=0 // loop_header_branch
    %15 = sbr.rel (%p13) target = $region8
  $region5: #{unet_block_forward.4} parent=0 // loop_body
    %s17 = ssub.s32 %s12, 1
    %s18 = ssub.s32 %s12, 2
    %s19 = sadd.s32 %s12, 1
    %s20 = ssub.s32 %s12, %s19
    %p21 = scmp.eq.s32.totalorder %s20, 0
    %s23 = sadd.s32 %s22, 1
    %s24 = scalar_select %p21, %s22, %s23
    %p27 = pneg %p21
    %p28 = scmp.eq.s32.totalorder %s12, 1
    %p29 = por %p27, %p28
    %p30 = scmp.ne.s32.totalorder %s22, %s25
    %p31 = scmp.eq.s32.totalorder %s12, 0
    %p32 = por %p30, %p31
    %p33 = scmp.ne.s32.totalorder %s22, %s25
    %p34 = scmp.eq.s32.totalorder %s17, 1
    %p35 = por %p33, %p34
    %p36 = scmp.ne.s32.totalorder %s25, %s26
    %p37 = scmp.eq.s32.totalorder %s17, 0
    %p38 = por %p36, %p37
    %p39 = scmp.ne.s32.totalorder %s25, %s26
    %p40 = scmp.eq.s32.totalorder %s18, 1
    %p41 = por %p39, %p40
    %p43 = scmp.ne.s32.totalorder %s26, %s42
    %p44 = scmp.eq.s32.totalorder %s18, 0
    %p45 = por %p43, %p44
    %s47 = sadd.s32 %s46, 1
    %p50 = scmp.eq.s32.totalorder %s12, 1
    %p51 = scmp.ne.s32.totalorder %s46, %s48
    %p52 = scmp.eq.s32.totalorder %s12, 0
    %p53 = por %p51, %p52
    %p54 = scmp.ne.s32.totalorder %s46, %s48
    %p55 = scmp.eq.s32.totalorder %s17, 1
    %p56 = por %p54, %p55
    %p57 = scmp.ne.s32.totalorder %s48, %s49
    %p58 = scmp.eq.s32.totalorder %s17, 0
    %p59 = por %p57, %p58
    %p60 = scmp.ne.s32.totalorder %s48, %s49
    %p61 = scmp.eq.s32.totalorder %s18, 1
    %p62 = por %p60, %p61
    %p64 = scmp.ne.s32.totalorder %s49, %s63
    %p65 = scmp.eq.s32.totalorder %s18, 0
    %p66 = por %p64, %p65
    %s67 = ssub.s32 %s12, %s19
    %p68 = scmp.eq.s32.totalorder %s67, 0
    %s70 = sadd.s32 %s69, 1
    %s71 = scalar_select %p68, %s69, %s70
    %p74 = pneg %p68
    %p75 = scmp.eq.s32.totalorder %s12, 1
    %p76 = por %p74, %p75
    %p77 = scmp.ne.s32.totalorder %s69, %s72
    %p78 = scmp.eq.s32.totalorder %s12, 0
    %p79 = por %p77, %p78
    %p80 = scmp.ne.s32.totalorder %s69, %s72
    %p81 = scmp.eq.s32.totalorder %s17, 1
    %p82 = por %p80, %p81
    %p83 = scmp.ne.s32.totalorder %s72, %s73
    %p84 = scmp.eq.s32.totalorder %s17, 0
    %p85 = por %p83, %p84
    %p86 = scmp.ne.s32.totalorder %s72, %s73
    %p87 = scmp.eq.s32.totalorder %s18, 1
    %p88 = por %p86, %p87
    %p90 = scmp.ne.s32.totalorder %s73, %s89
    %p91 = scmp.eq.s32.totalorder %s18, 0
    %p92 = por %p90, %p91
    %s94 = sadd.s32 %s93, 1
    %p97 = scmp.eq.s32.totalorder %s12, 1
    %p98 = scmp.ne.s32.totalorder %s93, %s95
    %p99 = scmp.eq.s32.totalorder %s12, 0
    %p100 = por %p98, %p99
    %p101 = scmp.ne.s32.totalorder %s93, %s95
    %p102 = scmp.eq.s32.totalorder %s17, 1
    %p103 = por %p101, %p102
    %p104 = scmp.ne.s32.totalorder %s95, %s96
    %p105 = scmp.eq.s32.totalorder %s17, 0
    %p106 = por %p104, %p105
    %p107 = scmp.ne.s32.totalorder %s95, %s96
    %p108 = scmp.eq.s32.totalorder %s18, 1
    %p109 = por %p107, %p108
    %p111 = scmp.ne.s32.totalorder %s96, %s110
    %p112 = scmp.eq.s32.totalorder %s18, 0
    %p113 = por %p111, %p112
    %s114 = ssub.s32 %s12, %s19
    %p115 = scmp.eq.s32.totalorder %s114, 0
    %s117 = sadd.s32 %s116, 1
    %s118 = scalar_select %p115, %s116, %s117
    %p121 = pneg %p115
    %p122 = scmp.eq.s32.totalorder %s12, 1
    %p123 = por %p121, %p122
    %p124 = scmp.ne.s32.totalorder %s116, %s119
    %p125 = scmp.eq.s32.totalorder %s12, 0
    %p126 = por %p124, %p125
    %p127 = scmp.ne.s32.totalorder %s116, %s119
    %p128 = scmp.eq.s32.totalorder %s17, 1
    %p129 = por %p127, %p128
    %p130 = scmp.ne.s32.totalorder %s119, %s120
    %p131 = scmp.eq.s32.totalorder %s17, 0
    %p132 = por %p130, %p131
    %p133 = scmp.ne.s32.totalorder %s119, %s120
    %p134 = scmp.eq.s32.totalorder %s18, 1
    %p135 = por %p133, %p134
    %p137 = scmp.ne.s32.totalorder %s120, %s136
    %p138 = scmp.eq.s32.totalorder %s18, 0
    %p139 = por %p137, %p138
    %s140 = ssub.s32 %s12, %s19
    %p141 = scmp.eq.s32.totalorder %s140, 0
    %s143 = sadd.s32 %s142, 1
    %s144 = scalar_select %p141, %s142, %s143
    %p147 = pneg %p141
    %p148 = scmp.eq.s32.totalorder %s12, 1
    %p149 = por %p147, %p148
    %p150 = scmp.ne.s32.totalorder %s142, %s145
    %p151 = scmp.eq.s32.totalorder %s12, 0
    %p152 = por %p150, %p151
    %p153 = scmp.ne.s32.totalorder %s142, %s145
    %p154 = scmp.eq.s32.totalorder %s17, 1
    %p155 = por %p153, %p154
    %p156 = scmp.ne.s32.totalorder %s145, %s146
    %p157 = scmp.eq.s32.totalorder %s17, 0
    %p158 = por %p156, %p157
    %p159 = scmp.ne.s32.totalorder %s145, %s146
    %p160 = scmp.eq.s32.totalorder %s18, 1
    %p161 = por %p159, %p160
    %p163 = scmp.ne.s32.totalorder %s146, %s162
    %p164 = scmp.eq.s32.totalorder %s18, 0
    %p165 = por %p163, %p164
    %p166 = scmp.le.s32.totalorder 1, %s12
    %p167 = scmp.lt.s32.totalorder %s12, 3
    %p168 = pnand %p166, %p167
    %p169 = pneg %p168
    // Predicated region
    $region9: #{unet_block_forward.4} parent=5 // pred_check
      _
    $region10: #{unet_block_forward.4} parent=5 // pred_check_branch
      %171 = sbr.rel (%p168) target = $region12
    $region11: #{unet_block_forward.4} parent=5 // pred_region
      %s172 = ssub.s32 %s12, 1
      // Predicated region
      $region13: #{unet_block_forward.4} parent=11 // pred_check
        %p173 = pneg %p59
      $region14: #{unet_block_forward.4} parent=11 // pred_check_branch
        %175 = sbr.rel (%p173) target = $region16
      $region15: #{unet_block_forward.4} parent=11 // pred_region
        _
      $region16: #{unet_block_forward.4} parent=11 // pred_fallthru
        _
      // Predicated region
      $region17: #{unet_block_forward.4} parent=11 // pred_check
        %p176 = pneg %p106
      $region18: #{unet_block_forward.4} parent=11 // pred_check_branch
        %178 = sbr.rel (%p176) target = $region20
      $region19: #{unet_block_forward.4} parent=11 // pred_region
        _
      $region20: #{unet_block_forward.4} parent=11 // pred_fallthru
        _
    $region12: #{unet_block_forward.4} parent=5 // pred_fallthru
      _
    %p179 = scmp.lt.s32.totalorder %s12, 2
    // Predicated region
    $region21: #{unet_block_forward.4} parent=5 // pred_check
      %p180 = pneg %p179
    $region22: #{unet_block_forward.4} parent=5 // pred_check_branch
      %182 = sbr.rel (%p180) target = $region24
    $region23: #{unet_block_forward.4} parent=5 // pred_region
      // Predicated region
      $region25: #{unet_block_forward.4} parent=23 // pred_check
        %p183 = pneg %p32
      $region26: #{unet_block_forward.4} parent=23 // pred_check_branch
        %185 = sbr.rel (%p183) target = $region28
      $region27: #{unet_block_forward.4} parent=23 // pred_region
        %p186 = scmp.lt.s32.totalorder %s12, 1
        %s187 = scalar_select %p186, %s12, 1
        %s188 = smul.addr %s187, 32
        %s189 = smul.addr %s188, 4
        %s190 = scalar_lea.vmem %s0, %s189
      $region28: #{unet_block_forward.4} parent=23 // pred_fallthru
        _
      // Predicated region
      $region29: #{unet_block_forward.4} parent=23 // pred_check
        %p191 = pneg %p79
      $region30: #{unet_block_forward.4} parent=23 // pred_check_branch
        %193 = sbr.rel (%p191) target = $region32
      $region31: #{unet_block_forward.4} parent=23 // pred_region
        %p194 = scmp.lt.s32.totalorder %s12, 1
        %s195 = scalar_select %p194, %s12, 1
        %s196 = scalar_lea.vmem %s2, %s195
      $region32: #{unet_block_forward.4} parent=23 // pred_fallthru
        _
    $region24: #{unet_block_forward.4} parent=5 // pred_fallthru
      _
    %p197 = scmp.le.s32.totalorder 1, %s12
    %p198 = scmp.lt.s32.totalorder %s12, 3
    %p199 = pnand %p197, %p198
    %p200 = pneg %p199
    // Predicated region
    $region33: #{unet_block_forward.4} parent=5 // pred_check
      _
    $region34: #{unet_block_forward.4} parent=5 // pred_check_branch
      %202 = sbr.rel (%p199) target = $region36
    $region35: #{unet_block_forward.4} parent=5 // pred_region
      %s203 = ssub.s32 %s12, 1
      %p204 = scmp.lt.s32.totalorder %s17, 1
      %s205 = scalar_select %p204, %s17, 1
      %s206 = smul.addr %s205, 32
      %s207 = smul.addr %s206, 4
      %s208 = scalar_lea.vmem %s0, %s207
      %p209 = pneg %p38
      %p210 = pneg %p35
      %p211 = pneg %p59
      %p212 = pneg %p56
      %p213 = scmp.lt.s32.totalorder %s17, 1
      %s214 = scalar_select %p213, %s17, 1
      %s215 = scalar_lea.vmem %s2, %s214
      %p216 = pneg %p85
      %p217 = pneg %p82
      %p218 = pneg %p106
      %p219 = pneg %p103
      %p220 = pneg %p132
      %p221 = pneg %p129
      %p222 = scmp.lt.s32.totalorder %s17, 1
      %s223 = scalar_select %p222, %s17, 1
      %s224 = smul.addr %s223, 32
      %s225 = smul.addr %s224, 4
      %s226 = scalar_lea.vmem %s4, %s225
      %p227 = pneg %p158
      %p228 = pneg %p155
      %p229 = scmp.lt.s32.totalorder %s17, 1
      %s230 = scalar_select %p229, %s17, 1
      %s231 = smul.addr %s230, 2
      %s232 = scalar_lea.vmem %s5, %s231
      %p233 = scmp.lt.s32.totalorder %s17, 1
      %s234 = scalar_select %p233, %s17, 1
      %s235 = smul.addr %s234, 32
      %s236 = smul.addr %s235, 4
      %s237 = scalar_lea.vmem %s0, %s236
      %p238 = scmp.lt.s32.totalorder %s17, 1
      %s239 = scalar_select %p238, %s17, 1
      %s240 = scalar_lea.vmem %s2, %s239
      %p241 = scmp.lt.s32.totalorder %s17, 1
      %s242 = scalar_select %p241, %s17, 1
      %s243 = smul.addr %s242, 32
      %s244 = smul.addr %s243, 4
      %s245 = scalar_lea.vmem %s4, %s244
      %p246 = scmp.lt.s32.totalorder %s17, 1
      %s247 = scalar_select %p246, %s17, 1
      %s248 = smul.addr %s247, 2
      %s249 = scalar_lea.vmem %s5, %s248
      %v251 = vld [vmem:[%s237] sm:$0xf]
      %v252 = vld [vmem:[%s237 + $0x4] sm:$0xf]
      %v253 = vld [vmem:[%s237 + $0x8] sm:$0xf]
      %v254 = vld [vmem:[%s237 + $0xc] sm:$0xf]
      %v255 = vld [vmem:[%s237 + $0x10] sm:$0xf]
      %v256 = vld [vmem:[%s237 + $0x14] sm:$0xf]
      %v257 = vld [vmem:[%s237 + $0x18] sm:$0xf]
      %v258 = vld [vmem:[%s237 + $0x1c] sm:$0xf]
      %v259 = vld [vmem:[%s237 + $0x20] sm:$0xf]
      %v260 = vld [vmem:[%s237 + $0x24] sm:$0xf]
      %v261 = vld [vmem:[%s237 + $0x28] sm:$0xf]
      %v262 = vld [vmem:[%s237 + $0x2c] sm:$0xf]
      %v263 = vld [vmem:[%s237 + $0x30] sm:$0xf]
      %v264 = vld [vmem:[%s237 + $0x34] sm:$0xf]
      %v265 = vld [vmem:[%s237 + $0x38] sm:$0xf]
      %v266 = vld [vmem:[%s237 + $0x3c] sm:$0xf]
      %v267 = vld [vmem:[%s237 + $0x40] sm:$0xf]
      %v268 = vld [vmem:[%s237 + $0x44] sm:$0xf]
      %v269 = vld [vmem:[%s237 + $0x48] sm:$0xf]
      %v270 = vld [vmem:[%s237 + $0x4c] sm:$0xf]
      %v271 = vld [vmem:[%s237 + $0x50] sm:$0xf]
      %v272 = vld [vmem:[%s237 + $0x54] sm:$0xf]
      %v273 = vld [vmem:[%s237 + $0x58] sm:$0xf]
      %v274 = vld [vmem:[%s237 + $0x5c] sm:$0xf]
      %v275 = vld [vmem:[%s237 + $0x60] sm:$0xf]
      %v276 = vld [vmem:[%s237 + $0x64] sm:$0xf]
      %v277 = vld [vmem:[%s237 + $0x68] sm:$0xf]
      %v278 = vld [vmem:[%s237 + $0x6c] sm:$0xf]
      %v279 = vld [vmem:[%s237 + $0x70] sm:$0xf]
      %v280 = vld [vmem:[%s237 + $0x74] sm:$0xf]
      %v281 = vld [vmem:[%s237 + $0x78] sm:$0xf]
      %v282 = vld [vmem:[%s237 + $0x7c] sm:$0xf]
      %v283 = vunpack.c.l.bf16 %v251
      %v284 = vunpack.c.l.bf16 %v252
      %v285 = vunpack.c.l.bf16 %v253
      %v286 = vunpack.c.l.bf16 %v254
      %v287 = vunpack.c.l.bf16 %v255
      %v288 = vunpack.c.l.bf16 %v256
      %v289 = vunpack.c.l.bf16 %v257
      %v290 = vunpack.c.l.bf16 %v258
      %v291 = vunpack.c.l.bf16 %v259
      %v292 = vunpack.c.l.bf16 %v260
      %v293 = vunpack.c.l.bf16 %v261
      %v294 = vunpack.c.l.bf16 %v262
      %v295 = vunpack.c.l.bf16 %v263
      %v296 = vunpack.c.l.bf16 %v264
      %v297 = vunpack.c.l.bf16 %v265
      %v298 = vunpack.c.l.bf16 %v266
      %v299 = vunpack.c.l.bf16 %v267
      %v300 = vunpack.c.l.bf16 %v268
      %v301 = vunpack.c.l.bf16 %v269
      %v302 = vunpack.c.l.bf16 %v270
      %v303 = vunpack.c.l.bf16 %v271
      %v304 = vunpack.c.l.bf16 %v272
      %v305 = vunpack.c.l.bf16 %v273
      %v306 = vunpack.c.l.bf16 %v274
      %v307 = vunpack.c.l.bf16 %v275
      %v308 = vunpack.c.l.bf16 %v276
      %v309 = vunpack.c.l.bf16 %v277
      %v310 = vunpack.c.l.bf16 %v278
      %v311 = vunpack.c.l.bf16 %v279
      %v312 = vunpack.c.l.bf16 %v280
      %v313 = vunpack.c.l.bf16 %v281
      %v314 = vunpack.c.l.bf16 %v282
      %v315 = vld [vmem:[%s1] sm:$0x1]
      %v317 = vlaneseq
      %v318 = vshrl.u32 %v317, 7
      %v319 = vsub.s32 0, %v318
      %v320 = vrot.slane %v315, %v319
      %v322 = vmul.f32 %v283, %v320
      %v323 = vmul.f32 %v284, %v320
      %v324 = vmul.f32 %v285, %v320
      %v325 = vmul.f32 %v286, %v320
      %v326 = vmul.f32 %v287, %v320
      %v327 = vmul.f32 %v288, %v320
      %v328 = vmul.f32 %v289, %v320
      %v329 = vmul.f32 %v290, %v320
      %v330 = vmul.f32 %v291, %v320
      %v331 = vmul.f32 %v292, %v320
      %v332 = vmul.f32 %v293, %v320
      %v333 = vmul.f32 %v294, %v320
      %v334 = vmul.f32 %v295, %v320
      %v335 = vmul.f32 %v296, %v320
      %v336 = vmul.f32 %v297, %v320
      %v337 = vmul.f32 %v298, %v320
      %v338 = vmul.f32 %v299, %v320
      %v339 = vmul.f32 %v300, %v320
      %v340 = vmul.f32 %v301, %v320
      %v341 = vmul.f32 %v302, %v320
      %v342 = vmul.f32 %v303, %v320
      %v343 = vmul.f32 %v304, %v320
      %v344 = vmul.f32 %v305, %v320
      %v345 = vmul.f32 %v306, %v320
      %v346 = vmul.f32 %v307, %v320
      %v347 = vmul.f32 %v308, %v320
      %v348 = vmul.f32 %v309, %v320
      %v349 = vmul.f32 %v310, %v320
      %v350 = vmul.f32 %v311, %v320
      %v351 = vmul.f32 %v312, %v320
      %v352 = vmul.f32 %v313, %v320
      %v353 = vmul.f32 %v314, %v320
      %v354 = vld [vmem:[%s240] sm:$0x1]
      %v356 = vlaneseq
      %v357 = vshrl.u32 %v356, 7
      %v358 = vsub.s32 0, %v357
      %v359 = vrot.slane %v354, %v358
      %v361 = vadd.f32 %v322, %v359
      %v362 = vadd.f32 %v323, %v359
      %v363 = vadd.f32 %v324, %v359
      %v364 = vadd.f32 %v325, %v359
      %v365 = vadd.f32 %v326, %v359
      %v366 = vadd.f32 %v327, %v359
      %v367 = vadd.f32 %v328, %v359
      %v368 = vadd.f32 %v329, %v359
      %v369 = vadd.f32 %v330, %v359
      %v370 = vadd.f32 %v331, %v359
      %v371 = vadd.f32 %v332, %v359
      %v372 = vadd.f32 %v333, %v359
      %v373 = vadd.f32 %v334, %v359
      %v374 = vadd.f32 %v335, %v359
      %v375 = vadd.f32 %v336, %v359
      %v376 = vadd.f32 %v337, %v359
      %v377 = vadd.f32 %v338, %v359
      %v378 = vadd.f32 %v339, %v359
      %v379 = vadd.f32 %v340, %v359
      %v380 = vadd.f32 %v341, %v359
      %v381 = vadd.f32 %v342, %v359
      %v382 = vadd.f32 %v343, %v359
      %v383 = vadd.f32 %v344, %v359
      %v384 = vadd.f32 %v345, %v359
      %v385 = vadd.f32 %v346, %v359
      %v386 = vadd.f32 %v347, %v359
      %v387 = vadd.f32 %v348, %v359
      %v388 = vadd.f32 %v349, %v359
      %v389 = vadd.f32 %v350, %v359
      %v390 = vadd.f32 %v351, %v359
      %v391 = vadd.f32 %v352, %v359
      %v392 = vadd.f32 %v353, %v359
      %v393 = vand.u32 2147483647, %v361
      %v394 = vand.u32 2147483647, %v362
      %v395 = vand.u32 2147483647, %v363
      %v396 = vand.u32 2147483647, %v364
      %v397 = vand.u32 2147483647, %v365
      %v398 = vand.u32 2147483647, %v366
      %v399 = vand.u32 2147483647, %v367
      %v400 = vand.u32 2147483647, %v368
      %v401 = vand.u32 2147483647, %v369
      %v402 = vand.u32 2147483647, %v370
      %v403 = vand.u32 2147483647, %v371
      %v404 = vand.u32 2147483647, %v372
      %v405 = vand.u32 2147483647, %v373
      %v406 = vand.u32 2147483647, %v374
      %v407 = vand.u32 2147483647, %v375
      %v408 = vand.u32 2147483647, %v376
      %v409 = vand.u32 2147483647, %v377
      %v410 = vand.u32 2147483647, %v378
      %v411 = vand.u32 2147483647, %v379
      %v412 = vand.u32 2147483647, %v380
      %v413 = vand.u32 2147483647, %v381
      %v414 = vand.u32 2147483647, %v382
      %v415 = vand.u32 2147483647, %v383
      %v416 = vand.u32 2147483647, %v384
      %v417 = vand.u32 2147483647, %v385
      %v418 = vand.u32 2147483647, %v386
      %v419 = vand.u32 2147483647, %v387
      %v420 = vand.u32 2147483647, %v388
      %v421 = vand.u32 2147483647, %v389
      %v422 = vand.u32 2147483647, %v390
      %v423 = vand.u32 2147483647, %v391
      %v424 = vand.u32 2147483647, %v392
      %v425 = vsub.f32 0.0, %v393
      %v426 = vsub.f32 0.0, %v394
      %v427 = vsub.f32 0.0, %v395
      %v428 = vsub.f32 0.0, %v396
      %v429 = vsub.f32 0.0, %v397
      %v430 = vsub.f32 0.0, %v398
      %v431 = vsub.f32 0.0, %v399
      %v432 = vsub.f32 0.0, %v400
      %v433 = vsub.f32 0.0, %v401
      %v434 = vsub.f32 0.0, %v402
      %v435 = vsub.f32 0.0, %v403
      %v436 = vsub.f32 0.0, %v404
      %v437 = vsub.f32 0.0, %v405
      %v438 = vsub.f32 0.0, %v406
      %v439 = vsub.f32 0.0, %v407
      %v440 = vsub.f32 0.0, %v408
      %v441 = vsub.f32 0.0, %v409
      %v442 = vsub.f32 0.0, %v410
      %v443 = vsub.f32 0.0, %v411
      %v444 = vsub.f32 0.0, %v412
      %v445 = vsub.f32 0.0, %v413
      %v446 = vsub.f32 0.0, %v414
      %v447 = vsub.f32 0.0, %v415
      %v448 = vsub.f32 0.0, %v416
      %v449 = vsub.f32 0.0, %v417
      %v450 = vsub.f32 0.0, %v418
      %v451 = vsub.f32 0.0, %v419
      %v452 = vsub.f32 0.0, %v420
      %v453 = vsub.f32 0.0, %v421
      %v454 = vsub.f32 0.0, %v422
      %v455 = vsub.f32 0.0, %v423
      %v456 = vsub.f32 0.0, %v424
      %v457 = vmul.f32 %v425, 1.442695
      %v458 = vpow.pop %v457
      %v459 = vmul.f32 %v426, 1.442695
      %v460 = vpow.pop %v459
      %v461 = vmul.f32 %v427, 1.442695
      %v462 = vpow.pop %v461
      %v463 = vmul.f32 %v428, 1.442695
      %v464 = vpow.pop %v463
      %v465 = vmul.f32 %v429, 1.442695
      %v466 = vpow.pop %v465
      %v467 = vmul.f32 %v430, 1.442695
      %v468 = vpow.pop %v467
      %v469 = vmul.f32 %v431, 1.442695
      %v470 = vpow.pop %v469
      %v471 = vmul.f32 %v432, 1.442695
      %v472 = vpow.pop %v471
      %v473 = vmul.f32 %v433, 1.442695
      %v474 = vpow.pop %v473
      %v475 = vmul.f32 %v434, 1.442695
      %v476 = vpow.pop %v475
      %v477 = vmul.f32 %v435, 1.442695
      %v478 = vpow.pop %v477
      %v479 = vmul.f32 %v436, 1.442695
      %v480 = vpow.pop %v479
      %v481 = vmul.f32 %v437, 1.442695
      %v482 = vpow.pop %v481
      %v483 = vmul.f32 %v438, 1.442695
      %v484 = vpow.pop %v483
      %v485 = vmul.f32 %v439, 1.442695
      %v486 = vpow.pop %v485
      %v487 = vmul.f32 %v440, 1.442695
      %v488 = vpow.pop %v487
      %v489 = vmul.f32 %v441, 1.442695
      %v490 = vpow.pop %v489
      %v491 = vmul.f32 %v442, 1.442695
      %v492 = vpow.pop %v491
      %v493 = vmul.f32 %v443, 1.442695
      %v494 = vpow.pop %v493
      %v495 = vmul.f32 %v444, 1.442695
      %v496 = vpow.pop %v495
      %v497 = vmul.f32 %v445, 1.442695
      %v498 = vpow.pop %v497
      %v499 = vmul.f32 %v446, 1.442695
      %v500 = vpow.pop %v499
      %v501 = vmul.f32 %v447, 1.442695
      %v502 = vpow.pop %v501
      %v503 = vmul.f32 %v448, 1.442695
      %v504 = vpow.pop %v503
      %v505 = vmul.f32 %v449, 1.442695
      %v506 = vpow.pop %v505
      %v507 = vmul.f32 %v450, 1.442695
      %v508 = vpow.pop %v507
      %v509 = vmul.f32 %v451, 1.442695
      %v510 = vpow.pop %v509
      %v511 = vmul.f32 %v452, 1.442695
      %v512 = vpow.pop %v511
      %v513 = vmul.f32 %v453, 1.442695
      %v514 = vpow.pop %v513
      %v515 = vmul.f32 %v454, 1.442695
      %v516 = vpow.pop %v515
      %v517 = vmul.f32 %v455, 1.442695
      %v518 = vpow.pop %v517
      %v519 = vmul.f32 %v456, 1.442695
      %v520 = vpow.pop %v519
      %vm521 = vcmp.ge.f32.partialorder %v361, 0.0
      %vm522 = vcmp.ge.f32.partialorder %v362, 0.0
      %vm523 = vcmp.ge.f32.partialorder %v363, 0.0
      %vm524 = vcmp.ge.f32.partialorder %v364, 0.0
      %vm525 = vcmp.ge.f32.partialorder %v365, 0.0
      %vm526 = vcmp.ge.f32.partialorder %v366, 0.0
      %vm527 = vcmp.ge.f32.partialorder %v367, 0.0
      %vm528 = vcmp.ge.f32.partialorder %v368, 0.0
      %vm529 = vcmp.ge.f32.partialorder %v369, 0.0
      %vm530 = vcmp.ge.f32.partialorder %v370, 0.0
      %vm531 = vcmp.ge.f32.partialorder %v371, 0.0
      %vm532 = vcmp.ge.f32.partialorder %v372, 0.0
      %vm533 = vcmp.ge.f32.partialorder %v373, 0.0
      %vm534 = vcmp.ge.f32.partialorder %v374, 0.0
      %vm535 = vcmp.ge.f32.partialorder %v375, 0.0
      %vm536 = vcmp.ge.f32.partialorder %v376, 0.0
      %vm537 = vcmp.ge.f32.partialorder %v377, 0.0
      %vm538 = vcmp.ge.f32.partialorder %v378, 0.0
      %vm539 = vcmp.ge.f32.partialorder %v379, 0.0
      %vm540 = vcmp.ge.f32.partialorder %v380, 0.0
      %vm541 = vcmp.ge.f32.partialorder %v381, 0.0
      %vm542 = vcmp.ge.f32.partialorder %v382, 0.0
      %vm543 = vcmp.ge.f32.partialorder %v383, 0.0
      %vm544 = vcmp.ge.f32.partialorder %v384, 0.0
      %vm545 = vcmp.ge.f32.partialorder %v385, 0.0
      %vm546 = vcmp.ge.f32.partialorder %v386, 0.0
      %vm547 = vcmp.ge.f32.partialorder %v387, 0.0
      %vm548 = vcmp.ge.f32.partialorder %v388, 0.0
      %vm549 = vcmp.ge.f32.partialorder %v389, 0.0
      %vm550 = vcmp.ge.f32.partialorder %v390, 0.0
      %vm551 = vcmp.ge.f32.partialorder %v391, 0.0
      %vm552 = vcmp.ge.f32.partialorder %v392, 0.0
      %v553 = vsel %vm521, 1.0, %v458
      %v554 = vsel %vm522, 1.0, %v460
      %v555 = vsel %vm523, 1.0, %v462
      %v556 = vsel %vm524, 1.0, %v464
      %v557 = vsel %vm525, 1.0, %v466
      %v558 = vsel %vm526, 1.0, %v468
      %v559 = vsel %vm527, 1.0, %v470
      %v560 = vsel %vm528, 1.0, %v472
      %v561 = vsel %vm529, 1.0, %v474
      %v562 = vsel %vm530, 1.0, %v476
      %v563 = vsel %vm531, 1.0, %v478
      %v564 = vsel %vm532, 1.0, %v480
      %v565 = vsel %vm533, 1.0, %v482
      %v566 = vsel %vm534, 1.0, %v484
      %v567 = vsel %vm535, 1.0, %v486
      %v568 = vsel %vm536, 1.0, %v488
      %v569 = vsel %vm537, 1.0, %v490
      %v570 = vsel %vm538, 1.0, %v492
      %v571 = vsel %vm539, 1.0, %v494
      %v572 = vsel %vm540, 1.0, %v496
      %v573 = vsel %vm541, 1.0, %v498
      %v574 = vsel %vm542, 1.0, %v500
      %v575 = vsel %vm543, 1.0, %v502
      %v576 = vsel %vm544, 1.0, %v504
      %v577 = vsel %vm545, 1.0, %v506
      %v578 = vsel %vm546, 1.0, %v508
      %v579 = vsel %vm547, 1.0, %v510
      %v580 = vsel %vm548, 1.0, %v512
      %v581 = vsel %vm549, 1.0, %v514
      %v582 = vsel %vm550, 1.0, %v516
      %v583 = vsel %vm551, 1.0, %v518
      %v584 = vsel %vm552, 1.0, %v520
      %v585 = vadd.f32 %v458, 1.0
      %v586 = vadd.f32 %v460, 1.0
      %v587 = vadd.f32 %v462, 1.0
      %v588 = vadd.f32 %v464, 1.0
      %v589 = vadd.f32 %v466, 1.0
      %v590 = vadd.f32 %v468, 1.0
      %v591 = vadd.f32 %v470, 1.0
      %v592 = vadd.f32 %v472, 1.0
      %v593 = vadd.f32 %v474, 1.0
      %v594 = vadd.f32 %v476, 1.0
      %v595 = vadd.f32 %v478, 1.0
      %v596 = vadd.f32 %v480, 1.0
      %v597 = vadd.f32 %v482, 1.0
      %v598 = vadd.f32 %v484, 1.0
      %v599 = vadd.f32 %v486, 1.0
      %v600 = vadd.f32 %v488, 1.0
      %v601 = vadd.f32 %v490, 1.0
      %v602 = vadd.f32 %v492, 1.0
      %v603 = vadd.f32 %v494, 1.0
      %v604 = vadd.f32 %v496, 1.0
      %v605 = vadd.f32 %v498, 1.0
      %v606 = vadd.f32 %v500, 1.0
      %v607 = vadd.f32 %v502, 1.0
      %v608 = vadd.f32 %v504, 1.0
      %v609 = vadd.f32 %v506, 1.0
      %v610 = vadd.f32 %v508, 1.0
      %v611 = vadd.f32 %v510, 1.0
      %v612 = vadd.f32 %v512, 1.0
      %v613 = vadd.f32 %v514, 1.0
      %v614 = vadd.f32 %v516, 1.0
      %v615 = vadd.f32 %v518, 1.0
      %v616 = vadd.f32 %v520, 1.0
      %v617 = vrcp.pop %v585
      %v618 = vrcp.pop %v586
      %v619 = vrcp.pop %v587
      %v620 = vrcp.pop %v588
      %v621 = vrcp.pop %v589
      %v622 = vrcp.pop %v590
      %v623 = vrcp.pop %v591
      %v624 = vrcp.pop %v592
      %v625 = vrcp.pop %v593
      %v626 = vrcp.pop %v594
      %v627 = vrcp.pop %v595
      %v628 = vrcp.pop %v596
      %v629 = vrcp.pop %v597
      %v630 = vrcp.pop %v598
      %v631 = vrcp.pop %v599
      %v632 = vrcp.pop %v600
      %v633 = vrcp.pop %v601
      %v634 = vrcp.pop %v602
      %v635 = vrcp.pop %v603
      %v636 = vrcp.pop %v604
      %v637 = vrcp.pop %v605
      %v638 = vrcp.pop %v606
      %v639 = vrcp.pop %v607
      %v640 = vrcp.pop %v608
      %v641 = vrcp.pop %v609
      %v642 = vrcp.pop %v610
      %v643 = vrcp.pop %v611
      %v644 = vrcp.pop %v612
      %v645 = vrcp.pop %v613
      %v646 = vrcp.pop %v614
      %v647 = vrcp.pop %v615
      %v648 = vrcp.pop %v616
      %v649 = vmul.f32 %v553, %v617
      %v650 = vmul.f32 %v554, %v618
      %v651 = vmul.f32 %v555, %v619
      %v652 = vmul.f32 %v556, %v620
      %v653 = vmul.f32 %v557, %v621
      %v654 = vmul.f32 %v558, %v622
      %v655 = vmul.f32 %v559, %v623
      %v656 = vmul.f32 %v560, %v624
      %v657 = vmul.f32 %v561, %v625
      %v658 = vmul.f32 %v562, %v626
      %v659 = vmul.f32 %v563, %v627
      %v660 = vmul.f32 %v564, %v628
      %v661 = vmul.f32 %v565, %v629
      %v662 = vmul.f32 %v566, %v630
      %v663 = vmul.f32 %v567, %v631
      %v664 = vmul.f32 %v568, %v632
      %v665 = vmul.f32 %v569, %v633
      %v666 = vmul.f32 %v570, %v634
      %v667 = vmul.f32 %v571, %v635
      %v668 = vmul.f32 %v572, %v636
      %v669 = vmul.f32 %v573, %v637
      %v670 = vmul.f32 %v574, %v638
      %v671 = vmul.f32 %v575, %v639
      %v672 = vmul.f32 %v576, %v640
      %v673 = vmul.f32 %v577, %v641
      %v674 = vmul.f32 %v578, %v642
      %v675 = vmul.f32 %v579, %v643
      %v676 = vmul.f32 %v580, %v644
      %v677 = vmul.f32 %v581, %v645
      %v678 = vmul.f32 %v582, %v646
      %v679 = vmul.f32 %v583, %v647
      %v680 = vmul.f32 %v584, %v648
      %v681 = vmul.f32 %v361, %v649
      %v682 = vmul.f32 %v362, %v650
      %v683 = vmul.f32 %v363, %v651
      %v684 = vmul.f32 %v364, %v652
      %v685 = vmul.f32 %v365, %v653
      %v686 = vmul.f32 %v366, %v654
      %v687 = vmul.f32 %v367, %v655
      %v688 = vmul.f32 %v368, %v656
      %v689 = vmul.f32 %v369, %v657
      %v690 = vmul.f32 %v370, %v658
      %v691 = vmul.f32 %v371, %v659
      %v692 = vmul.f32 %v372, %v660
      %v693 = vmul.f32 %v373, %v661
      %v694 = vmul.f32 %v374, %v662
      %v695 = vmul.f32 %v375, %v663
      %v696 = vmul.f32 %v376, %v664
      %v697 = vmul.f32 %v377, %v665
      %v698 = vmul.f32 %v378, %v666
      %v699 = vmul.f32 %v379, %v667
      %v700 = vmul.f32 %v380, %v668
      %v701 = vmul.f32 %v381, %v669
      %v702 = vmul.f32 %v382, %v670
      %v703 = vmul.f32 %v383, %v671
      %v704 = vmul.f32 %v384, %v672
      %v705 = vmul.f32 %v385, %v673
      %v706 = vmul.f32 %v386, %v674
      %v707 = vmul.f32 %v387, %v675
      %v708 = vmul.f32 %v388, %v676
      %v709 = vmul.f32 %v389, %v677
      %v710 = vmul.f32 %v390, %v678
      %v711 = vmul.f32 %v391, %v679
      %v712 = vmul.f32 %v392, %v680
      %v713 = vpack.c.bf16 %v682, %v681
      %v714 = vpack.c.bf16 %v684, %v683
      %v715 = vpack.c.bf16 %v686, %v685
      %v716 = vpack.c.bf16 %v688, %v687
      %v717 = vpack.c.bf16 %v690, %v689
      %v718 = vpack.c.bf16 %v692, %v691
      %v719 = vpack.c.bf16 %v694, %v693
      %v720 = vpack.c.bf16 %v696, %v695
      %v721 = vpack.c.bf16 %v698, %v697
      %v722 = vpack.c.bf16 %v700, %v699
      %v723 = vpack.c.bf16 %v702, %v701
      %v724 = vpack.c.bf16 %v704, %v703
      %v725 = vpack.c.bf16 %v706, %v705
      %v726 = vpack.c.bf16 %v708, %v707
      %v727 = vpack.c.bf16 %v710, %v709
      %v728 = vpack.c.bf16 %v712, %v711
      %v730 = vshrl.u32 0, 16
      %v732 = vrot.slane %v730, 7
      %v733 = vshll.u32 0, 16
      %v735 = vor.u32 %v732, %v733
      %v737 = vshrl.u32 %v713, 16
      %v739 = vrot.slane %v737, 7
      %v740 = vshll.u32 %v713, 16
      %v742 = vor.u32 %v739, %v740
      %v744 = vshrl.u32 %v714, 16
      %v746 = vrot.slane %v744, 7
      %v747 = vshll.u32 %v714, 16
      %v749 = vor.u32 %v746, %v747
      %v751 = vshrl.u32 %v715, 16
      %v753 = vrot.slane %v751, 7
      %v754 = vshll.u32 %v715, 16
      %v756 = vor.u32 %v753, %v754
      %v758 = vshrl.u32 %v716, 16
      %v760 = vrot.slane %v758, 7
      %v761 = vshll.u32 %v716, 16
      %v763 = vor.u32 %v760, %v761
      %v765 = vshrl.u32 %v717, 16
      %v767 = vrot.slane %v765, 7
      %v768 = vshll.u32 %v717, 16
      %v770 = vor.u32 %v767, %v768
      %v772 = vshrl.u32 %v718, 16
      %v774 = vrot.slane %v772, 7
      %v775 = vshll.u32 %v718, 16
      %v777 = vor.u32 %v774, %v775
      %v779 = vshrl.u32 %v719, 16
      %v781 = vrot.slane %v779, 7
      %v782 = vshll.u32 %v719, 16
      %v784 = vor.u32 %v781, %v782
      %v786 = vshrl.u32 %v720, 16
      %v788 = vrot.slane %v786, 7
      %v789 = vshll.u32 %v720, 16
      %v791 = vor.u32 %v788, %v789
      %v793 = vshrl.u32 %v721, 16
      %v795 = vrot.slane %v793, 7
      %v796 = vshll.u32 %v721, 16
      %v798 = vor.u32 %v795, %v796
      %v800 = vshrl.u32 %v722, 16
      %v802 = vrot.slane %v800, 7
      %v803 = vshll.u32 %v722, 16
      %v805 = vor.u32 %v802, %v803
      %v807 = vshrl.u32 %v723, 16
      %v809 = vrot.slane %v807, 7
      %v810 = vshll.u32 %v723, 16
      %v812 = vor.u32 %v809, %v810
      %v814 = vshrl.u32 %v724, 16
      %v816 = vrot.slane %v814, 7
      %v817 = vshll.u32 %v724, 16
      %v819 = vor.u32 %v816, %v817
      %v821 = vshrl.u32 %v725, 16
      %v823 = vrot.slane %v821, 7
      %v824 = vshll.u32 %v725, 16
      %v826 = vor.u32 %v823, %v824
      %v828 = vshrl.u32 %v726, 16
      %v830 = vrot.slane %v828, 7
      %v831 = vshll.u32 %v726, 16
      %v833 = vor.u32 %v830, %v831
      %v835 = vshrl.u32 %v727, 16
      %v837 = vrot.slane %v835, 7
      %v838 = vshll.u32 %v727, 16
      %v840 = vor.u32 %v837, %v838
      %v842 = vshrl.u32 %v728, 16
      %v844 = vrot.slane %v842, 7
      %v845 = vshll.u32 %v728, 16
      %v847 = vor.u32 %v844, %v845
      %vm882 = vcmask 1040384
      %vm883 = vsmask.f32 256
      %vm884 = vmand %vm882, %vm883
      %v885 = vsel %vm884, 0, %v735
      %v886 = vsel %vm884, 0, %v742
      %v887 = vsel %vm884, 0, %v749
      %v888 = vsel %vm884, 0, %v756
      %v889 = vsel %vm884, 0, %v763
      %v890 = vsel %vm884, 0, %v770
      %v891 = vsel %vm884, 0, %v777
      %v892 = vsel %vm884, 0, %v784
      %v893 = vsel %vm884, 0, %v791
      %v894 = vsel %vm884, 0, %v798
      %v895 = vsel %vm884, 0, %v805
      %v896 = vsel %vm884, 0, %v812
      %v897 = vsel %vm884, 0, %v819
      %v898 = vsel %vm884, 0, %v826
      %v899 = vsel %vm884, 0, %v833
      %v900 = vsel %vm884, 0, %v840
      %v901 = vsel %vm884, 0, %v847
      %v902 = vsel %vm884, %v732, 0
      %v903 = vsel %vm884, %v739, 0
      %v904 = vsel %vm884, %v746, 0
      %v905 = vsel %vm884, %v753, 0
      %v906 = vsel %vm884, %v760, 0
      %v907 = vsel %vm884, %v767, 0
      %v908 = vsel %vm884, %v774, 0
      %v909 = vsel %vm884, %v781, 0
      %v910 = vsel %vm884, %v788, 0
      %v911 = vsel %vm884, %v795, 0
      %v912 = vsel %vm884, %v802, 0
      %v913 = vsel %vm884, %v809, 0
      %v914 = vsel %vm884, %v816, 0
      %v915 = vsel %vm884, %v823, 0
      %v916 = vsel %vm884, %v830, 0
      %v917 = vsel %vm884, %v837, 0
      %v918 = vsel %vm884, %v844, 0
      %vm919 = vsmask.f32 7424
      %v921 = vshrl.u32 %v885, 16
      %v923 = vshll.u32 %v885, 16
      %v925 = vrot.slane %v923, 1
      %v926 = vor.u32 %v921, %v925
      %v928 = vshll.u32 %v902, 16
      %v930 = vrot.slane %v928, 1
      %v931 = vsel %vm919, %v926, %v930
      %v933 = vshrl.u32 %v886, 16
      %v935 = vshll.u32 %v886, 16
      %v937 = vrot.slane %v935, 1
      %v938 = vor.u32 %v933, %v937
      %v940 = vshll.u32 %v903, 16
      %v942 = vrot.slane %v940, 1
      %v943 = vsel %vm919, %v938, %v942
      %v945 = vshrl.u32 %v887, 16
      %v947 = vshll.u32 %v887, 16
      %v949 = vrot.slane %v947, 1
      %v950 = vor.u32 %v945, %v949
      %v952 = vshll.u32 %v904, 16
      %v954 = vrot.slane %v952, 1
      %v955 = vsel %vm919, %v950, %v954
      %v957 = vshrl.u32 %v888, 16
      %v959 = vshll.u32 %v888, 16
      %v961 = vrot.slane %v959, 1
      %v962 = vor.u32 %v957, %v961
      %v964 = vshll.u32 %v905, 16
      %v966 = vrot.slane %v964, 1
      %v967 = vsel %vm919, %v962, %v966
      %v969 = vshrl.u32 %v889, 16
      %v971 = vshll.u32 %v889, 16
      %v973 = vrot.slane %v971, 1
      %v974 = vor.u32 %v969, %v973
      %v976 = vshll.u32 %v906, 16
      %v978 = vrot.slane %v976, 1
      %v979 = vsel %vm919, %v974, %v978
      %v981 = vshrl.u32 %v890, 16
      %v983 = vshll.u32 %v890, 16
      %v985 = vrot.slane %v983, 1
      %v986 = vor.u32 %v981, %v985
      %v988 = vshll.u32 %v907, 16
      %v990 = vrot.slane %v988, 1
      %v991 = vsel %vm919, %v986, %v990
      %v993 = vshrl.u32 %v891, 16
      %v995 = vshll.u32 %v891, 16
      %v997 = vrot.slane %v995, 1
      %v998 = vor.u32 %v993, %v997
      %v1000 = vshll.u32 %v908, 16
      %v1002 = vrot.slane %v1000, 1
      %v1003 = vsel %vm919, %v998, %v1002
      %v1005 = vshrl.u32 %v892, 16
      %v1007 = vshll.u32 %v892, 16
      %v1009 = vrot.slane %v1007, 1
      %v1010 = vor.u32 %v1005, %v1009
      %v1012 = vshll.u32 %v909, 16
      %v1014 = vrot.slane %v1012, 1
      %v1015 = vsel %vm919, %v1010, %v1014
      %v1017 = vshrl.u32 %v893, 16
      %v1019 = vshll.u32 %v893, 16
      %v1021 = vrot.slane %v1019, 1
      %v1022 = vor.u32 %v1017, %v1021
      %v1024 = vshll.u32 %v910, 16
      %v1026 = vrot.slane %v1024, 1
      %v1027 = vsel %vm919, %v1022, %v1026
      %v1029 = vshrl.u32 %v894, 16
      %v1031 = vshll.u32 %v894, 16
      %v1033 = vrot.slane %v1031, 1
      %v1034 = vor.u32 %v1029, %v1033
      %v1036 = vshll.u32 %v911, 16
      %v1038 = vrot.slane %v1036, 1
      %v1039 = vsel %vm919, %v1034, %v1038
      %v1041 = vshrl.u32 %v895, 16
      %v1043 = vshll.u32 %v895, 16
      %v1045 = vrot.slane %v1043, 1
      %v1046 = vor.u32 %v1041, %v1045
      %v1048 = vshll.u32 %v912, 16
      %v1050 = vrot.slane %v1048, 1
      %v1051 = vsel %vm919, %v1046, %v1050
      %v1053 = vshrl.u32 %v896, 16
      %v1055 = vshll.u32 %v896, 16
      %v1057 = vrot.slane %v1055, 1
      %v1058 = vor.u32 %v1053, %v1057
      %v1060 = vshll.u32 %v913, 16
      %v1062 = vrot.slane %v1060, 1
      %v1063 = vsel %vm919, %v1058, %v1062
      %v1065 = vshrl.u32 %v897, 16
      %v1067 = vshll.u32 %v897, 16
      %v1069 = vrot.slane %v1067, 1
      %v1070 = vor.u32 %v1065, %v1069
      %v1072 = vshll.u32 %v914, 16
      %v1074 = vrot.slane %v1072, 1
      %v1075 = vsel %vm919, %v1070, %v1074
      %v1077 = vshrl.u32 %v898, 16
      %v1079 = vshll.u32 %v898, 16
      %v1081 = vrot.slane %v1079, 1
      %v1082 = vor.u32 %v1077, %v1081
      %v1084 = vshll.u32 %v915, 16
      %v1086 = vrot.slane %v1084, 1
      %v1087 = vsel %vm919, %v1082, %v1086
      %v1089 = vshrl.u32 %v899, 16
      %v1091 = vshll.u32 %v899, 16
      %v1093 = vrot.slane %v1091, 1
      %v1094 = vor.u32 %v1089, %v1093
      %v1096 = vshll.u32 %v916, 16
      %v1098 = vrot.slane %v1096, 1
      %v1099 = vsel %vm919, %v1094, %v1098
      %v1101 = vshrl.u32 %v900, 16
      %v1103 = vshll.u32 %v900, 16
      %v1105 = vrot.slane %v1103, 1
      %v1106 = vor.u32 %v1101, %v1105
      %v1108 = vshll.u32 %v917, 16
      %v1110 = vrot.slane %v1108, 1
      %v1111 = vsel %vm919, %v1106, %v1110
      %1112 = vrot.lane.b32.xlu0 %v931, 8
      %v1113 = vpop.permute.xlu0 %1112
      %1114 = vrot.lane.b32.xlu0 %v943, 8
      %v1115 = vpop.permute.xlu0 %1114
      %1116 = vrot.lane.b32.xlu0 %v955, 8
      %v1117 = vpop.permute.xlu0 %1116
      %1118 = vrot.lane.b32.xlu0 %v967, 8
      %v1119 = vpop.permute.xlu0 %1118
      %1120 = vrot.lane.b32.xlu0 %v979, 8
      %v1121 = vpop.permute.xlu0 %1120
      %1122 = vrot.lane.b32.xlu0 %v991, 8
      %v1123 = vpop.permute.xlu0 %1122
      %1124 = vrot.lane.b32.xlu0 %v1003, 8
      %v1125 = vpop.permute.xlu0 %1124
      %1126 = vrot.lane.b32.xlu0 %v1015, 8
      %v1127 = vpop.permute.xlu0 %1126
      %1128 = vrot.lane.b32.xlu0 %v1027, 8
      %v1129 = vpop.permute.xlu0 %1128
      %1130 = vrot.lane.b32.xlu0 %v1039, 8
      %v1131 = vpop.permute.xlu0 %1130
      %1132 = vrot.lane.b32.xlu0 %v1051, 8
      %v1133 = vpop.permute.xlu0 %1132
      %1134 = vrot.lane.b32.xlu0 %v1063, 8
      %v1135 = vpop.permute.xlu0 %1134
      %1136 = vrot.lane.b32.xlu0 %v1075, 8
      %v1137 = vpop.permute.xlu0 %1136
      %1138 = vrot.lane.b32.xlu0 %v1087, 8
      %v1139 = vpop.permute.xlu0 %1138
      %1140 = vrot.lane.b32.xlu0 %v1099, 8
      %v1141 = vpop.permute.xlu0 %1140
      %1142 = vrot.lane.b32.xlu0 %v1111, 8
      %v1143 = vpop.permute.xlu0 %1142
      %vm1176 = vcmask 1046528
      %v1177 = vrot.slane %v885, 1
      %v1178 = vrot.slane %v902, 1
      %v1179 = vsel %vm1176, %v1177, %v1178
      %v1180 = vrot.slane %v886, 1
      %v1181 = vrot.slane %v903, 1
      %v1182 = vsel %vm1176, %v1180, %v1181
      %v1183 = vrot.slane %v887, 1
      %v1184 = vrot.slane %v904, 1
      %v1185 = vsel %vm1176, %v1183, %v1184
      %v1186 = vrot.slane %v888, 1
      %v1187 = vrot.slane %v905, 1
      %v1188 = vsel %vm1176, %v1186, %v1187
      %v1189 = vrot.slane %v889, 1
      %v1190 = vrot.slane %v906, 1
      %v1191 = vsel %vm1176, %v1189, %v1190
      %v1192 = vrot.slane %v890, 1
      %v1193 = vrot.slane %v907, 1
      %v1194 = vsel %vm1176, %v1192, %v1193
      %v1195 = vrot.slane %v891, 1
      %v1196 = vrot.slane %v908, 1
      %v1197 = vsel %vm1176, %v1195, %v1196
      %v1198 = vrot.slane %v892, 1
      %v1199 = vrot.slane %v909, 1
      %v1200 = vsel %vm1176, %v1198, %v1199
      %v1201 = vrot.slane %v893, 1
      %v1202 = vrot.slane %v910, 1
      %v1203 = vsel %vm1176, %v1201, %v1202
      %v1204 = vrot.slane %v894, 1
      %v1205 = vrot.slane %v911, 1
      %v1206 = vsel %vm1176, %v1204, %v1205
      %v1207 = vrot.slane %v895, 1
      %v1208 = vrot.slane %v912, 1
      %v1209 = vsel %vm1176, %v1207, %v1208
      %v1210 = vrot.slane %v896, 1
      %v1211 = vrot.slane %v913, 1
      %v1212 = vsel %vm1176, %v1210, %v1211
      %v1213 = vrot.slane %v897, 1
      %v1214 = vrot.slane %v914, 1
      %v1215 = vsel %vm1176, %v1213, %v1214
      %v1216 = vrot.slane %v898, 1
      %v1217 = vrot.slane %v915, 1
      %v1218 = vsel %vm1176, %v1216, %v1217
      %v1219 = vrot.slane %v899, 1
      %v1220 = vrot.slane %v916, 1
      %v1221 = vsel %vm1176, %v1219, %v1220
      %v1222 = vrot.slane %v900, 1
      %v1223 = vrot.slane %v917, 1
      %v1224 = vsel %vm1176, %v1222, %v1223
      %1225 = vrot.lane.b32.xlu0 %v1179, 16
      %v1226 = vpop.permute.xlu0 %1225
      %1227 = vrot.lane.b32.xlu0 %v1182, 16
      %v1228 = vpop.permute.xlu0 %1227
      %1229 = vrot.lane.b32.xlu0 %v1185, 16
      %v1230 = vpop.permute.xlu0 %1229
      %1231 = vrot.lane.b32.xlu0 %v1188, 16
      %v1232 = vpop.permute.xlu0 %1231
      %1233 = vrot.lane.b32.xlu0 %v1191, 16
      %v1234 = vpop.permute.xlu0 %1233
      %1235 = vrot.lane.b32.xlu0 %v1194, 16
      %v1236 = vpop.permute.xlu0 %1235
      %1237 = vrot.lane.b32.xlu0 %v1197, 16
      %v1238 = vpop.permute.xlu0 %1237
      %1239 = vrot.lane.b32.xlu0 %v1200, 16
      %v1240 = vpop.permute.xlu0 %1239
      %1241 = vrot.lane.b32.xlu0 %v1203, 16
      %v1242 = vpop.permute.xlu0 %1241
      %1243 = vrot.lane.b32.xlu0 %v1206, 16
      %v1244 = vpop.permute.xlu0 %1243
      %1245 = vrot.lane.b32.xlu0 %v1209, 16
      %v1246 = vpop.permute.xlu0 %1245
      %1247 = vrot.lane.b32.xlu0 %v1212, 16
      %v1248 = vpop.permute.xlu0 %1247
      %1249 = vrot.lane.b32.xlu0 %v1215, 16
      %v1250 = vpop.permute.xlu0 %1249
      %1251 = vrot.lane.b32.xlu0 %v1218, 16
      %v1252 = vpop.permute.xlu0 %1251
      %1253 = vrot.lane.b32.xlu0 %v1221, 16
      %v1254 = vpop.permute.xlu0 %1253
      %1255 = vrot.lane.b32.xlu0 %v1224, 16
      %v1256 = vpop.permute.xlu0 %1255
      %1258 = vrot.lane.b32.xlu0 %v886, 24
      %v1259 = vpop.permute.xlu0 %1258
      %1260 = vrot.lane.b32.xlu0 %v887, 24
      %v1261 = vpop.permute.xlu0 %1260
      %1262 = vrot.lane.b32.xlu0 %v888, 24
      %v1263 = vpop.permute.xlu0 %1262
      %1264 = vrot.lane.b32.xlu0 %v889, 24
      %v1265 = vpop.permute.xlu0 %1264
      %1266 = vrot.lane.b32.xlu0 %v890, 24
      %v1267 = vpop.permute.xlu0 %1266
      %1268 = vrot.lane.b32.xlu0 %v891, 24
      %v1269 = vpop.permute.xlu0 %1268
      %1270 = vrot.lane.b32.xlu0 %v892, 24
      %v1271 = vpop.permute.xlu0 %1270
      %1272 = vrot.lane.b32.xlu0 %v893, 24
      %v1273 = vpop.permute.xlu0 %1272
      %1274 = vrot.lane.b32.xlu0 %v894, 24
      %v1275 = vpop.permute.xlu0 %1274
      %1276 = vrot.lane.b32.xlu0 %v895, 24
      %v1277 = vpop.permute.xlu0 %1276
      %1278 = vrot.lane.b32.xlu0 %v896, 24
      %v1279 = vpop.permute.xlu0 %1278
      %1280 = vrot.lane.b32.xlu0 %v897, 24
      %v1281 = vpop.permute.xlu0 %1280
      %1282 = vrot.lane.b32.xlu0 %v898, 24
      %v1283 = vpop.permute.xlu0 %1282
      %1284 = vrot.lane.b32.xlu0 %v899, 24
      %v1285 = vpop.permute.xlu0 %1284
      %1286 = vrot.lane.b32.xlu0 %v900, 24
      %v1287 = vpop.permute.xlu0 %1286
      %1288 = vrot.lane.b32.xlu0 %v901, 24
      %v1289 = vpop.permute.xlu0 %1288
      %v1291 = vshrl.u32 %v901, 16
      %v1293 = vshll.u32 %v901, 16
      %v1295 = vrot.slane %v1293, 1
      %v1296 = vor.u32 %v1291, %v1295
      %v1298 = vshll.u32 %v918, 16
      %v1300 = vrot.slane %v1298, 1
      %v1301 = vsel %vm919, %v1296, %v1300
      %1302 = vrot.lane.b32.xlu0 %v943, 32
      %v1303 = vpop.permute.xlu0 %1302
      %1304 = vrot.lane.b32.xlu0 %v955, 32
      %v1305 = vpop.permute.xlu0 %1304
      %1306 = vrot.lane.b32.xlu0 %v967, 32
      %v1307 = vpop.permute.xlu0 %1306
      %1308 = vrot.lane.b32.xlu0 %v979, 32
      %v1309 = vpop.permute.xlu0 %1308
      %1310 = vrot.lane.b32.xlu0 %v991, 32
      %v1311 = vpop.permute.xlu0 %1310
      %1312 = vrot.lane.b32.xlu0 %v1003, 32
      %v1313 = vpop.permute.xlu0 %1312
      %1314 = vrot.lane.b32.xlu0 %v1015, 32
      %v1315 = vpop.permute.xlu0 %1314
      %1316 = vrot.lane.b32.xlu0 %v1027, 32
      %v1317 = vpop.permute.xlu0 %1316
      %1318 = vrot.lane.b32.xlu0 %v1039, 32
      %v1319 = vpop.permute.xlu0 %1318
      %1320 = vrot.lane.b32.xlu0 %v1051, 32
      %v1321 = vpop.permute.xlu0 %1320
      %1322 = vrot.lane.b32.xlu0 %v1063, 32
      %v1323 = vpop.permute.xlu0 %1322
      %1324 = vrot.lane.b32.xlu0 %v1075, 32
      %v1325 = vpop.permute.xlu0 %1324
      %1326 = vrot.lane.b32.xlu0 %v1087, 32
      %v1327 = vpop.permute.xlu0 %1326
      %1328 = vrot.lane.b32.xlu0 %v1099, 32
      %v1329 = vpop.permute.xlu0 %1328
      %1330 = vrot.lane.b32.xlu0 %v1111, 32
      %v1331 = vpop.permute.xlu0 %1330
      %1332 = vrot.lane.b32.xlu0 %v1301, 32
      %v1333 = vpop.permute.xlu0 %1332
      %v1335 = vrot.slane %v901, 1
      %v1336 = vrot.slane %v918, 1
      %v1337 = vsel %vm1176, %v1335, %v1336
      %1338 = vrot.lane.b32.xlu0 %v1182, 40
      %v1339 = vpop.permute.xlu0 %1338
      %1340 = vrot.lane.b32.xlu0 %v1185, 40
      %v1341 = vpop.permute.xlu0 %1340
      %1342 = vrot.lane.b32.xlu0 %v1188, 40
      %v1343 = vpop.permute.xlu0 %1342
      %1344 = vrot.lane.b32.xlu0 %v1191, 40
      %v1345 = vpop.permute.xlu0 %1344
      %1346 = vrot.lane.b32.xlu0 %v1194, 40
      %v1347 = vpop.permute.xlu0 %1346
      %1348 = vrot.lane.b32.xlu0 %v1197, 40
      %v1349 = vpop.permute.xlu0 %1348
      %1350 = vrot.lane.b32.xlu0 %v1200, 40
      %v1351 = vpop.permute.xlu0 %1350
      %1352 = vrot.lane.b32.xlu0 %v1203, 40
      %v1353 = vpop.permute.xlu0 %1352
      %1354 = vrot.lane.b32.xlu0 %v1206, 40
      %v1355 = vpop.permute.xlu0 %1354
      %1356 = vrot.lane.b32.xlu0 %v1209, 40
      %v1357 = vpop.permute.xlu0 %1356
      %1358 = vrot.lane.b32.xlu0 %v1212, 40
      %v1359 = vpop.permute.xlu0 %1358
      %1360 = vrot.lane.b32.xlu0 %v1215, 40
      %v1361 = vpop.permute.xlu0 %1360
      %1362 = vrot.lane.b32.xlu0 %v1218, 40
      %v1363 = vpop.permute.xlu0 %1362
      %1364 = vrot.lane.b32.xlu0 %v1221, 40
      %v1365 = vpop.permute.xlu0 %1364
      %1366 = vrot.lane.b32.xlu0 %v1224, 40
      %v1367 = vpop.permute.xlu0 %1366
      %1368 = vrot.lane.b32.xlu0 %v1337, 40
      %v1369 = vpop.permute.xlu0 %1368
      %1370 = vrot.lane.b32.xlu0 %v887, 48
      %v1371 = vpop.permute.xlu0 %1370
      %1372 = vrot.lane.b32.xlu0 %v888, 48
      %v1373 = vpop.permute.xlu0 %1372
      %1374 = vrot.lane.b32.xlu0 %v889, 48
      %v1375 = vpop.permute.xlu0 %1374
      %1376 = vrot.lane.b32.xlu0 %v890, 48
      %v1377 = vpop.permute.xlu0 %1376
      %1378 = vrot.lane.b32.xlu0 %v891, 48
      %v1379 = vpop.permute.xlu0 %1378
      %1380 = vrot.lane.b32.xlu0 %v892, 48
      %v1381 = vpop.permute.xlu0 %1380
      %1382 = vrot.lane.b32.xlu0 %v893, 48
      %v1383 = vpop.permute.xlu0 %1382
      %1384 = vrot.lane.b32.xlu0 %v894, 48
      %v1385 = vpop.permute.xlu0 %1384
      %1386 = vrot.lane.b32.xlu0 %v895, 48
      %v1387 = vpop.permute.xlu0 %1386
      %1388 = vrot.lane.b32.xlu0 %v896, 48
      %v1389 = vpop.permute.xlu0 %1388
      %1390 = vrot.lane.b32.xlu0 %v897, 48
      %v1391 = vpop.permute.xlu0 %1390
      %1392 = vrot.lane.b32.xlu0 %v898, 48
      %v1393 = vpop.permute.xlu0 %1392
      %1394 = vrot.lane.b32.xlu0 %v899, 48
      %v1395 = vpop.permute.xlu0 %1394
      %1396 = vrot.lane.b32.xlu0 %v900, 48
      %v1397 = vpop.permute.xlu0 %1396
      %1398 = vrot.lane.b32.xlu0 %v901, 48
      %v1399 = vpop.permute.xlu0 %1398
      %1400 = vrot.lane.b32.xlu0 %v885, 48
      %v1401 = vpop.permute.xlu0 %1400
      %1402 = vrot.lane.b32.xlu0 %v955, 56
      %v1403 = vpop.permute.xlu0 %1402
      %1404 = vrot.lane.b32.xlu0 %v967, 56
      %v1405 = vpop.permute.xlu0 %1404
      %1406 = vrot.lane.b32.xlu0 %v979, 56
      %v1407 = vpop.permute.xlu0 %1406
      %1408 = vrot.lane.b32.xlu0 %v991, 56
      %v1409 = vpop.permute.xlu0 %1408
      %1410 = vrot.lane.b32.xlu0 %v1003, 56
      %v1411 = vpop.permute.xlu0 %1410
      %1412 = vrot.lane.b32.xlu0 %v1015, 56
      %v1413 = vpop.permute.xlu0 %1412
      %1414 = vrot.lane.b32.xlu0 %v1027, 56
      %v1415 = vpop.permute.xlu0 %1414
      %1416 = vrot.lane.b32.xlu0 %v1039, 56
      %v1417 = vpop.permute.xlu0 %1416
      %1418 = vrot.lane.b32.xlu0 %v1051, 56
      %v1419 = vpop.permute.xlu0 %1418
      %1420 = vrot.lane.b32.xlu0 %v1063, 56
      %v1421 = vpop.permute.xlu0 %1420
      %1422 = vrot.lane.b32.xlu0 %v1075, 56
      %v1423 = vpop.permute.xlu0 %1422
      %1424 = vrot.lane.b32.xlu0 %v1087, 56
      %v1425 = vpop.permute.xlu0 %1424
      %1426 = vrot.lane.b32.xlu0 %v1099, 56
      %v1427 = vpop.permute.xlu0 %1426
      %1428 = vrot.lane.b32.xlu0 %v1111, 56
      %v1429 = vpop.permute.xlu0 %1428
      %1430 = vrot.lane.b32.xlu0 %v1301, 56
      %v1431 = vpop.permute.xlu0 %1430
      %1432 = vrot.lane.b32.xlu0 %v931, 56
      %v1433 = vpop.permute.xlu0 %1432
      %1434 = vrot.lane.b32.xlu0 %v1185, 64
      %v1435 = vpop.permute.xlu0 %1434
      %1436 = vrot.lane.b32.xlu0 %v1188, 64
      %v1437 = vpop.permute.xlu0 %1436
      %1438 = vrot.lane.b32.xlu0 %v1191, 64
      %v1439 = vpop.permute.xlu0 %1438
      %1440 = vrot.lane.b32.xlu0 %v1194, 64
      %v1441 = vpop.permute.xlu0 %1440
      %1442 = vrot.lane.b32.xlu0 %v1197, 64
      %v1443 = vpop.permute.xlu0 %1442
      %1444 = vrot.lane.b32.xlu0 %v1200, 64
      %v1445 = vpop.permute.xlu0 %1444
      %1446 = vrot.lane.b32.xlu0 %v1203, 64
      %v1447 = vpop.permute.xlu0 %1446
      %1448 = vrot.lane.b32.xlu0 %v1206, 64
      %v1449 = vpop.permute.xlu0 %1448
      %1450 = vrot.lane.b32.xlu0 %v1209, 64
      %v1451 = vpop.permute.xlu0 %1450
      %1452 = vrot.lane.b32.xlu0 %v1212, 64
      %v1453 = vpop.permute.xlu0 %1452
      %1454 = vrot.lane.b32.xlu0 %v1215, 64
      %v1455 = vpop.permute.xlu0 %1454
      %1456 = vrot.lane.b32.xlu0 %v1218, 64
      %v1457 = vpop.permute.xlu0 %1456
      %1458 = vrot.lane.b32.xlu0 %v1221, 64
      %v1459 = vpop.permute.xlu0 %1458
      %1460 = vrot.lane.b32.xlu0 %v1224, 64
      %v1461 = vpop.permute.xlu0 %1460
      %1462 = vrot.lane.b32.xlu0 %v1337, 64
      %v1463 = vpop.permute.xlu0 %1462
      %1464 = vrot.lane.b32.xlu0 %v1179, 64
      %v1465 = vpop.permute.xlu0 %1464
      %vm1466 = vcmask 64512
      %v1468 = vsel %vm1466, %v885, %v1113
      %v1470 = vsel %vm1466, %v886, %v1115
      %v1472 = vsel %vm1466, %v887, %v1117
      %v1474 = vsel %vm1466, %v888, %v1119
      %v1476 = vsel %vm1466, %v889, %v1121
      %v1478 = vsel %vm1466, %v890, %v1123
      %v1480 = vsel %vm1466, %v891, %v1125
      %v1482 = vsel %vm1466, %v892, %v1127
      %v1484 = vsel %vm1466, %v893, %v1129
      %v1486 = vsel %vm1466, %v894, %v1131
      %v1488 = vsel %vm1466, %v895, %v1133
      %v1490 = vsel %vm1466, %v896, %v1135
      %v1492 = vsel %vm1466, %v897, %v1137
      %v1494 = vsel %vm1466, %v898, %v1139
      %v1496 = vsel %vm1466, %v899, %v1141
      %v1498 = vsel %vm1466, %v900, %v1143
      %vm1499 = vcmask 130048
      %v1501 = vsel %vm1499, %v1468, %v1226
      %v1503 = vsel %vm1499, %v1470, %v1228
      %v1505 = vsel %vm1499, %v1472, %v1230
      %v1507 = vsel %vm1499, %v1474, %v1232
      %v1509 = vsel %vm1499, %v1476, %v1234
      %v1511 = vsel %vm1499, %v1478, %v1236
      %v1513 = vsel %vm1499, %v1480, %v1238
      %v1515 = vsel %vm1499, %v1482, %v1240
      %v1517 = vsel %vm1499, %v1484, %v1242
      %v1519 = vsel %vm1499, %v1486, %v1244
      %v1521 = vsel %vm1499, %v1488, %v1246
      %v1523 = vsel %vm1499, %v1490, %v1248
      %v1525 = vsel %vm1499, %v1492, %v1250
      %v1527 = vsel %vm1499, %v1494, %v1252
      %v1529 = vsel %vm1499, %v1496, %v1254
      %v1531 = vsel %vm1499, %v1498, %v1256
      %vm1532 = vcmask 195584
      %v1534 = vsel %vm1532, %v1501, %v1259
      %v1536 = vsel %vm1532, %v1503, %v1261
      %v1538 = vsel %vm1532, %v1505, %v1263
      %v1540 = vsel %vm1532, %v1507, %v1265
      %v1542 = vsel %vm1532, %v1509, %v1267
      %v1544 = vsel %vm1532, %v1511, %v1269
      %v1546 = vsel %vm1532, %v1513, %v1271
      %v1548 = vsel %vm1532, %v1515, %v1273
      %v1550 = vsel %vm1532, %v1517, %v1275
      %v1552 = vsel %vm1532, %v1519, %v1277
      %v1554 = vsel %vm1532, %v1521, %v1279
      %v1556 = vsel %vm1532, %v1523, %v1281
      %v1558 = vsel %vm1532, %v1525, %v1283
      %v1560 = vsel %vm1532, %v1527, %v1285
      %v1562 = vsel %vm1532, %v1529, %v1287
      %v1564 = vsel %vm1532, %v1531, %v1289
      %vm1565 = vcmask 261120
      %v1567 = vsel %vm1565, %v1534, %v1303
      %v1569 = vsel %vm1565, %v1536, %v1305
      %v1571 = vsel %vm1565, %v1538, %v1307
      %v1573 = vsel %vm1565, %v1540, %v1309
      %v1575 = vsel %vm1565, %v1542, %v1311
      %v1577 = vsel %vm1565, %v1544, %v1313
      %v1579 = vsel %vm1565, %v1546, %v1315
      %v1581 = vsel %vm1565, %v1548, %v1317
      %v1583 = vsel %vm1565, %v1550, %v1319
      %v1585 = vsel %vm1565, %v1552, %v1321
      %v1587 = vsel %vm1565, %v1554, %v1323
      %v1589 = vsel %vm1565, %v1556, %v1325
      %v1591 = vsel %vm1565, %v1558, %v1327
      %v1593 = vsel %vm1565, %v1560, %v1329
      %v1595 = vsel %vm1565, %v1562, %v1331
      %v1597 = vsel %vm1565, %v1564, %v1333
      %vm1598 = vcmask 326656
      %v1600 = vsel %vm1598, %v1567, %v1339
      %v1602 = vsel %vm1598, %v1569, %v1341
      %v1604 = vsel %vm1598, %v1571, %v1343
      %v1606 = vsel %vm1598, %v1573, %v1345
      %v1608 = vsel %vm1598, %v1575, %v1347
      %v1610 = vsel %vm1598, %v1577, %v1349
      %v1612 = vsel %vm1598, %v1579, %v1351
      %v1614 = vsel %vm1598, %v1581, %v1353
      %v1616 = vsel %vm1598, %v1583, %v1355
      %v1618 = vsel %vm1598, %v1585, %v1357
      %v1620 = vsel %vm1598, %v1587, %v1359
      %v1622 = vsel %vm1598, %v1589, %v1361
      %v1624 = vsel %vm1598, %v1591, %v1363
      %v1626 = vsel %vm1598, %v1593, %v1365
      %v1628 = vsel %vm1598, %v1595, %v1367
      %v1630 = vsel %vm1598, %v1597, %v1369
      %vm1631 = vcmask 392192
      %v1633 = vsel %vm1631, %v1600, %v1371
      %v1635 = vsel %vm1631, %v1602, %v1373
      %v1637 = vsel %vm1631, %v1604, %v1375
      %v1639 = vsel %vm1631, %v1606, %v1377
      %v1641 = vsel %vm1631, %v1608, %v1379
      %v1643 = vsel %vm1631, %v1610, %v1381
      %v1645 = vsel %vm1631, %v1612, %v1383
      %v1647 = vsel %vm1631, %v1614, %v1385
      %v1649 = vsel %vm1631, %v1616, %v1387
      %v1651 = vsel %vm1631, %v1618, %v1389
      %v1653 = vsel %vm1631, %v1620, %v1391
      %v1655 = vsel %vm1631, %v1622, %v1393
      %v1657 = vsel %vm1631, %v1624, %v1395
      %v1659 = vsel %vm1631, %v1626, %v1397
      %v1661 = vsel %vm1631, %v1628, %v1399
      %v1663 = vsel %vm1631, %v1630, %v1401
      %vm1664 = vcmask 457728
      %v1666 = vsel %vm1664, %v1633, %v1403
      %v1668 = vsel %vm1664, %v1635, %v1405
      %v1670 = vsel %vm1664, %v1637, %v1407
      %v1672 = vsel %vm1664, %v1639, %v1409
      %v1674 = vsel %vm1664, %v1641, %v1411
      %v1676 = vsel %vm1664, %v1643, %v1413
      %v1678 = vsel %vm1664, %v1645, %v1415
      %v1680 = vsel %vm1664, %v1647, %v1417
      %v1682 = vsel %vm1664, %v1649, %v1419
      %v1684 = vsel %vm1664, %v1651, %v1421
      %v1686 = vsel %vm1664, %v1653, %v1423
      %v1688 = vsel %vm1664, %v1655, %v1425
      %v1690 = vsel %vm1664, %v1657, %v1427
      %v1692 = vsel %vm1664, %v1659, %v1429
      %v1694 = vsel %vm1664, %v1661, %v1431
      %v1696 = vsel %vm1664, %v1663, %v1433
      %vm1697 = vcmask 523264
      %v1699 = vsel %vm1697, %v1666, %v1435
      %v1701 = vsel %vm1697, %v1668, %v1437
      %v1703 = vsel %vm1697, %v1670, %v1439
      %v1705 = vsel %vm1697, %v1672, %v1441
      %v1707 = vsel %vm1697, %v1674, %v1443
      %v1709 = vsel %vm1697, %v1676, %v1445
      %v1711 = vsel %vm1697, %v1678, %v1447
      %v1713 = vsel %vm1697, %v1680, %v1449
      %v1715 = vsel %vm1697, %v1682, %v1451
      %v1717 = vsel %vm1697, %v1684, %v1453
      %v1719 = vsel %vm1697, %v1686, %v1455
      %v1721 = vsel %vm1697, %v1688, %v1457
      %v1723 = vsel %vm1697, %v1690, %v1459
      %v1725 = vsel %vm1697, %v1692, %v1461
      %v1727 = vsel %vm1697, %v1694, %v1463
      %v1729 = vsel %vm1697, %v1696, %v1465
      %v1730 = vld [vmem:[%s3] sm:$0xf]
      %v1731 = vld [vmem:[%s3 + $0x4] sm:$0xf]
      %v1732 = vld [vmem:[%s3 + $0x8] sm:$0xf]
      %v1733 = vld [vmem:[%s3 + $0xc] sm:$0xf]
      %v1734 = vld [vmem:[%s3 + $0x10] sm:$0xf]
      %v1735 = vld [vmem:[%s3 + $0x14] sm:$0xf]
      %v1736 = vld [vmem:[%s3 + $0x18] sm:$0xf]
      %v1737 = vld [vmem:[%s3 + $0x1c] sm:$0xf]
      %v1738 = vld [vmem:[%s3 + $0x20] sm:$0xf]
      %v1748 = vunpack.c.l.b16 %v1730
      %v1749 = vunpack.c.l.b16 %v1731
      %v1750 = vunpack.c.l.b16 %v1732
      %v1751 = vunpack.c.l.b16 %v1733
      %v1752 = vunpack.c.l.b16 %v1734
      %v1753 = vunpack.c.l.b16 %v1735
      %v1754 = vunpack.c.l.b16 %v1736
      %v1755 = vunpack.c.l.b16 %v1737
      %v1756 = vunpack.c.l.b16 %v1738
      %v1757 = vpack.c.b16 %v1749, %v1748
      %v1758 = vpack.c.b16 %v1751, %v1750
      %v1759 = vpack.c.b16 %v1753, %v1752
      %v1760 = vpack.c.b16 %v1755, %v1754
      %v1761 = vpack.c.b16 %v1756, %v1756
      %vm1766 = vcmask 588800
      %v1767 = vsel %vm1766, %v1699, 0
      %v1769 = vsel %vm1766, %v1701, 0
      %v1771 = vsel %vm1766, %v1703, 0
      %v1773 = vsel %vm1766, %v1705, 0
      %v1775 = vsel %vm1766, %v1707, 0
      %v1777 = vsel %vm1766, %v1709, 0
      %v1779 = vsel %vm1766, %v1711, 0
      %v1781 = vsel %vm1766, %v1713, 0
      %v1783 = vsel %vm1766, %v1715, 0
      %v1785 = vsel %vm1766, %v1717, 0
      %v1787 = vsel %vm1766, %v1719, 0
      %v1789 = vsel %vm1766, %v1721, 0
      %v1791 = vsel %vm1766, %v1723, 0
      %v1793 = vsel %vm1766, %v1725, 0
      %v1795 = vsel %vm1766, %v1727, 0
      %v1797 = vsel %vm1766, %v1729, 0
      %vm1799 = vcmask 1043456
      %v1801 = vsel %vm1799, %v1761, 0
      %1803 = vmatprep.subr.bf16.mxu0 0
      %1804 = vmatpush1.bf16.msra.mxu0 %v1757
      %1805 = vmatprep.subr.bf16.mxu0 0
      %1806 = vmatpush1.bf16.msra.mxu0 %v1758
      %1807 = vmatprep.subr.bf16.mxu0 0
      %1808 = vmatpush1.bf16.msra.mxu0 %v1759
      %1809 = vmatprep.subr.bf16.mxu0 0
      %1810 = vmatpush1.bf16.msra.mxu0 %v1760
      %1811 = vmatprep.subr.bf16.mxu0 0
      %1812 = vmatpush1.bf16.msra.mxu0 %v1801
      %1813 = vmatprep.subr.bf16.mxu0 0
      %1814 = vmatpush1.bf16.msra.mxu0 0
      %1815 = vmatprep.subr.bf16.mxu0 0
      %1816 = vmatpush1.bf16.msra.mxu0 0
      %1817 = vmatprep.subr.bf16.mxu0 0
      %1818 = vmatpush1.bf16.msra.mxu0 0
      %1819 = vmatprep.subr.bf16.mxu0 0
      %1820 = vmatpush1.bf16.msra.mxu0 0
      %1821 = vmatprep.subr.bf16.mxu0 0
      %1822 = vmatpush1.bf16.msra.mxu0 0
      %1823 = vmatprep.subr.bf16.mxu0 0
      %1824 = vmatpush1.bf16.msra.mxu0 0
      %1825 = vmatprep.subr.bf16.mxu0 0
      %1826 = vmatpush1.bf16.msra.mxu0 0
      %1827 = vmatprep.subr.bf16.mxu0 0
      %1828 = vmatpush1.bf16.msra.mxu0 0
      %1829 = vmatprep.subr.bf16.mxu0 0
      %1830 = vmatpush1.bf16.msra.mxu0 0
      %1831 = vmatprep.subr.bf16.mxu0 0
      %1832 = vmatpush1.bf16.msra.mxu0 0
      %1833 = vmatprep.subr.bf16.mxu0 0
      %1834 = vmatpush1.bf16.msra.mxu0 0
      %1835 = vmatprep.mubr.bf16.mxu0 0
      %1836 = vmatmul.mubr.bf16.gmra.mrb[0].mxu0 %v1767
      %v1837 = vpop.f32.mrb[0].mxu0
      %v1838 = vadd.f32 0.0, %v1837
      %v1839 = vpop.f32.mrb[0].mxu0
      %v1840 = vpop.f32.mrb[0].mxu0
      %v1841 = vadd.f32 0.0, %v1840
      %v1842 = vpop.f32.mrb[0].mxu0
      %1843 = vmatprep.mubr.bf16.mxu0 0
      %1844 = vmatmul.mubr.bf16.gmra.mrb[0].mxu0 %v1769
      %v1845 = vpop.f32.mrb[0].mxu0
      %v1846 = vadd.f32 0.0, %v1845
      %v1847 = vpop.f32.mrb[0].mxu0
      %v1848 = vpop.f32.mrb[0].mxu0
      %v1849 = vadd.f32 0.0, %v1848
      %v1850 = vpop.f32.mrb[0].mxu0
      %1851 = vmatprep.mubr.bf16.mxu0 0
      %1852 = vmatmul.mubr.bf16.gmra.mrb[0].mxu0 %v1771
      %v1853 = vpop.f32.mrb[0].mxu0
      %v1854 = vadd.f32 0.0, %v1853
      %v1855 = vpop.f32.mrb[0].mxu0
      %v1856 = vpop.f32.mrb[0].mxu0
      %v1857 = vadd.f32 0.0, %v1856
      %v1858 = vpop.f32.mrb[0].mxu0
      %1859 = vmatprep.mubr.bf16.mxu0 0
      %1860 = vmatmul.mubr.bf16.gmra.mrb[0].mxu0 %v1773
      %v1861 = vpop.f32.mrb[0].mxu0
      %v1862 = vadd.f32 0.0, %v1861
      %v1863 = vpop.f32.mrb[0].mxu0
      %v1864 = vpop.f32.mrb[0].mxu0
      %v1865 = vadd.f32 0.0, %v1864
      %v1866 = vpop.f32.mrb[0].mxu0
      %1867 = vmatprep.mubr.bf16.mxu0 0
      %1868 = vmatmul.mubr.bf16.gmra.mrb[0].mxu0 %v1775
      %v1869 = vpop.f32.mrb[0].mxu0
      %v1870 = vadd.f32 0.0, %v1869
      %v1871 = vpop.f32.mrb[0].mxu0
      %v1872 = vpop.f32.mrb[0].mxu0
      %v1873 = vadd.f32 0.0, %v1872
      %v1874 = vpop.f32.mrb[0].mxu0
      %1875 = vmatprep.mubr.bf16.mxu0 0
      %1876 = vmatmul.mubr.bf16.gmra.mrb[0].mxu0 %v1777
      %v1877 = vpop.f32.mrb[0].mxu0
      %v1878 = vadd.f32 0.0, %v1877
      %v1879 = vpop.f32.mrb[0].mxu0
      %v1880 = vpop.f32.mrb[0].mxu0
      %v1881 = vadd.f32 0.0, %v1880
      %v1882 = vpop.f32.mrb[0].mxu0
      %1883 = vmatprep.mubr.bf16.mxu0 0
      %1884 = vmatmul.mubr.bf16.gmra.mrb[0].mxu0 %v1779
      %v1885 = vpop.f32.mrb[0].mxu0
      %v1886 = vadd.f32 0.0, %v1885
      %v1887 = vpop.f32.mrb[0].mxu0
      %v1888 = vpop.f32.mrb[0].mxu0
      %v1889 = vadd.f32 0.0, %v1888
      %v1890 = vpop.f32.mrb[0].mxu0
      %1891 = vmatprep.mubr.bf16.mxu0 0
      %1892 = vmatmul.mubr.bf16.gmra.mrb[0].mxu0 %v1781
      %v1893 = vpop.f32.mrb[0].mxu0
      %v1894 = vadd.f32 0.0, %v1893
      %v1895 = vpop.f32.mrb[0].mxu0
      %v1896 = vpop.f32.mrb[0].mxu0
      %v1897 = vadd.f32 0.0, %v1896
      %v1898 = vpop.f32.mrb[0].mxu0
      %1899 = vmatprep.mubr.bf16.mxu0 0
      %1900 = vmatmul.mubr.bf16.gmra.mrb[0].mxu0 %v1783
      %v1901 = vpop.f32.mrb[0].mxu0
      %v1902 = vadd.f32 0.0, %v1901
      %v1903 = vpop.f32.mrb[0].mxu0
      %v1904 = vpop.f32.mrb[0].mxu0
      %v1905 = vadd.f32 0.0, %v1904
      %v1906 = vpop.f32.mrb[0].mxu0
      %1907 = vmatprep.mubr.bf16.mxu0 0
      %1908 = vmatmul.mubr.bf16.gmra.mrb[0].mxu0 %v1785
      %v1909 = vpop.f32.mrb[0].mxu0
      %v1910 = vadd.f32 0.0, %v1909
      %v1911 = vpop.f32.mrb[0].mxu0
      %v1912 = vpop.f32.mrb[0].mxu0
      %v1913 = vadd.f32 0.0, %v1912
      %v1914 = vpop.f32.mrb[0].mxu0
      %1915 = vmatprep.mubr.bf16.mxu0 0
      %1916 = vmatmul.mubr.bf16.gmra.mrb[0].mxu0 %v1787
      %v1917 = vpop.f32.mrb[0].mxu0
      %v1918 = vadd.f32 0.0, %v1917
      %v1919 = vpop.f32.mrb[0].mxu0
      %v1920 = vpop.f32.mrb[0].mxu0
      %v1921 = vadd.f32 0.0, %v1920
      %v1922 = vpop.f32.mrb[0].mxu0
      %1923 = vmatprep.mubr.bf16.mxu0 0
      %1924 = vmatmul.mubr.bf16.gmra.mrb[0].mxu0 %v1789
      %v1925 = vpop.f32.mrb[0].mxu0
      %v1926 = vadd.f32 0.0, %v1925
      %v1927 = vpop.f32.mrb[0].mxu0
      %v1928 = vpop.f32.mrb[0].mxu0
      %v1929 = vadd.f32 0.0, %v1928
      %v1930 = vpop.f32.mrb[0].mxu0
      %1931 = vmatprep.mubr.bf16.mxu0 0
      %1932 = vmatmul.mubr.bf16.gmra.mrb[0].mxu0 %v1791
      %v1933 = vpop.f32.mrb[0].mxu0
      %v1934 = vadd.f32 0.0, %v1933
      %v1935 = vpop.f32.mrb[0].mxu0
      %v1936 = vpop.f32.mrb[0].mxu0
      %v1937 = vadd.f32 0.0, %v1936
      %v1938 = vpop.f32.mrb[0].mxu0
      %1939 = vmatprep.mubr.bf16.mxu0 0
      %1940 = vmatmul.mubr.bf16.gmra.mrb[0].mxu0 %v1793
      %v1941 = vpop.f32.mrb[0].mxu0
      %v1942 = vadd.f32 0.0, %v1941
      %v1943 = vpop.f32.mrb[0].mxu0
      %v1944 = vpop.f32.mrb[0].mxu0
      %v1945 = vadd.f32 0.0, %v1944
      %v1946 = vpop.f32.mrb[0].mxu0
      %1947 = vmatprep.mubr.bf16.mxu0 0
      %1948 = vmatmul.mubr.bf16.gmra.mrb[0].mxu0 %v1795
      %v1949 = vpop.f32.mrb[0].mxu0
      %v1950 = vadd.f32 0.0, %v1949
      %v1951 = vpop.f32.mrb[0].mxu0
      %v1952 = vpop.f32.mrb[0].mxu0
      %v1953 = vadd.f32 0.0, %v1952
      %v1954 = vpop.f32.mrb[0].mxu0
      %1955 = vmatprep.mubr.bf16.mxu0 0
      %1956 = vmatmul.mubr.bf16.gmra.mrb[0].mxu0 %v1797
      %v1957 = vpop.f32.mrb[0].mxu0
      %v1958 = vadd.f32 0.0, %v1957
      %v1959 = vpop.f32.mrb[0].mxu0
      %v1960 = vpop.f32.mrb[0].mxu0
      %v1961 = vadd.f32 0.0, %v1960
      %v1962 = vpop.f32.mrb[0].mxu0
      %1963 = vdwg.mxu0
      %v1964 = vpack.c.bf16 %v1841, %v1838
      %v1965 = vpack.c.bf16 %v1849, %v1846
      %v1966 = vpack.c.bf16 %v1857, %v1854
      %v1967 = vpack.c.bf16 %v1865, %v1862
      %v1968 = vpack.c.bf16 %v1873, %v1870
      %v1969 = vpack.c.bf16 %v1881, %v1878
      %v1970 = vpack.c.bf16 %v1889, %v1886
      %v1971 = vpack.c.bf16 %v1897, %v1894
      %v1972 = vpack.c.bf16 %v1905, %v1902
      %v1973 = vpack.c.bf16 %v1913, %v1910
      %v1974 = vpack.c.bf16 %v1921, %v1918
      %v1975 = vpack.c.bf16 %v1929, %v1926
      %v1976 = vpack.c.bf16 %v1937, %v1934
      %v1977 = vpack.c.bf16 %v1945, %v1942
      %v1978 = vpack.c.bf16 %v1953, %v1950
      %v1979 = vpack.c.bf16 %v1961, %v1958
      %v1996 = vunpack.c.l.b16 %v1964
      %v1997 = vunpack.c.h.b16 %v1964
      %v1998 = vunpack.c.l.b16 %v1965
      %v1999 = vunpack.c.h.b16 %v1965
      %v2000 = vunpack.c.l.b16 %v1966
      %v2001 = vunpack.c.h.b16 %v1966
      %v2002 = vunpack.c.l.b16 %v1967
      %v2003 = vunpack.c.h.b16 %v1967
      %v2004 = vunpack.c.l.b16 %v1968
      %v2005 = vunpack.c.h.b16 %v1968
      %v2006 = vunpack.c.l.b16 %v1969
      %v2007 = vunpack.c.h.b16 %v1969
      %v2008 = vunpack.c.l.b16 %v1970
      %v2009 = vunpack.c.h.b16 %v1970
      %v2010 = vunpack.c.l.b16 %v1971
      %v2011 = vunpack.c.h.b16 %v1971
      %v2012 = vunpack.c.l.b16 %v1972
      %v2013 = vunpack.c.h.b16 %v1972
      %v2014 = vunpack.c.l.b16 %v1973
      %v2015 = vunpack.c.h.b16 %v1973
      %v2016 = vunpack.c.l.b16 %v1974
      %v2017 = vunpack.c.h.b16 %v1974
      %v2018 = vunpack.c.l.b16 %v1975
      %v2019 = vunpack.c.h.b16 %v1975
      %v2020 = vunpack.c.l.b16 %v1976
      %v2021 = vunpack.c.h.b16 %v1976
      %v2022 = vunpack.c.l.b16 %v1977
      %v2023 = vunpack.c.h.b16 %v1977
      %v2024 = vunpack.c.l.b16 %v1978
      %v2025 = vunpack.c.h.b16 %v1978
      %v2026 = vunpack.c.l.b16 %v1979
      %v2027 = vunpack.c.h.b16 %v1979
      %v2028 = vpack.c.b16 %v1996, %v1996
      %v2029 = vpack.c.b16 %v1997, %v1997
      %v2030 = vpack.c.b16 %v1998, %v1998
      %v2031 = vpack.c.b16 %v1999, %v1999
      %v2032 = vpack.c.b16 %v2000, %v2000
      %v2033 = vpack.c.b16 %v2001, %v2001
      %v2034 = vpack.c.b16 %v2002, %v2002
      %v2035 = vpack.c.b16 %v2003, %v2003
      %v2036 = vpack.c.b16 %v2004, %v2004
      %v2037 = vpack.c.b16 %v2005, %v2005
      %v2038 = vpack.c.b16 %v2006, %v2006
      %v2039 = vpack.c.b16 %v2007, %v2007
      %v2040 = vpack.c.b16 %v2008, %v2008
      %v2041 = vpack.c.b16 %v2009, %v2009
      %v2042 = vpack.c.b16 %v2010, %v2010
      %v2043 = vpack.c.b16 %v2011, %v2011
      %v2044 = vpack.c.b16 %v2012, %v2012
      %v2045 = vpack.c.b16 %v2013, %v2013
      %v2046 = vpack.c.b16 %v2014, %v2014
      %v2047 = vpack.c.b16 %v2015, %v2015
      %v2048 = vpack.c.b16 %v2016, %v2016
      %v2049 = vpack.c.b16 %v2017, %v2017
      %v2050 = vpack.c.b16 %v2018, %v2018
      %v2051 = vpack.c.b16 %v2019, %v2019
      %v2052 = vpack.c.b16 %v2020, %v2020
      %v2053 = vpack.c.b16 %v2021, %v2021
      %v2054 = vpack.c.b16 %v2022, %v2022
      %v2055 = vpack.c.b16 %v2023, %v2023
      %v2056 = vpack.c.b16 %v2024, %v2024
      %v2057 = vpack.c.b16 %v2025, %v2025
      %v2058 = vpack.c.b16 %v2026, %v2026
      %v2059 = vpack.c.b16 %v2027, %v2027
      %vm2092 = vcmask 60416
      %2093 = vst.msk [vmem:[%s245] sm:$0xf] %vm2092, %v2028
      %2094 = vst.msk [vmem:[%s245 + $0x4] sm:$0xf] %vm2092, %v2029
      %2095 = vst.msk [vmem:[%s245 + $0x8] sm:$0xf] %vm2092, %v2030
      %2096 = vst.msk [vmem:[%s245 + $0xc] sm:$0xf] %vm2092, %v2031
      %2097 = vst.msk [vmem:[%s245 + $0x10] sm:$0xf] %vm2092, %v2032
      %2098 = vst.msk [vmem:[%s245 + $0x14] sm:$0xf] %vm2092, %v2033
      %2099 = vst.msk [vmem:[%s245 + $0x18] sm:$0xf] %vm2092, %v2034
      %2100 = vst.msk [vmem:[%s245 + $0x1c] sm:$0xf] %vm2092, %v2035
      %2101 = vst.msk [vmem:[%s245 + $0x20] sm:$0xf] %vm2092, %v2036
      %2102 = vst.msk [vmem:[%s245 + $0x24] sm:$0xf] %vm2092, %v2037
      %2103 = vst.msk [vmem:[%s245 + $0x28] sm:$0xf] %vm2092, %v2038
      %2104 = vst.msk [vmem:[%s245 + $0x2c] sm:$0xf] %vm2092, %v2039
      %2105 = vst.msk [vmem:[%s245 + $0x30] sm:$0xf] %vm2092, %v2040
      %2106 = vst.msk [vmem:[%s245 + $0x34] sm:$0xf] %vm2092, %v2041
      %2107 = vst.msk [vmem:[%s245 + $0x38] sm:$0xf] %vm2092, %v2042
      %2108 = vst.msk [vmem:[%s245 + $0x3c] sm:$0xf] %vm2092, %v2043
      %2109 = vst.msk [vmem:[%s245 + $0x40] sm:$0xf] %vm2092, %v2044
      %2110 = vst.msk [vmem:[%s245 + $0x44] sm:$0xf] %vm2092, %v2045
      %2111 = vst.msk [vmem:[%s245 + $0x48] sm:$0xf] %vm2092, %v2046
      %2112 = vst.msk [vmem:[%s245 + $0x4c] sm:$0xf] %vm2092, %v2047
      %2113 = vst.msk [vmem:[%s245 + $0x50] sm:$0xf] %vm2092, %v2048
      %2114 = vst.msk [vmem:[%s245 + $0x54] sm:$0xf] %vm2092, %v2049
      %2115 = vst.msk [vmem:[%s245 + $0x58] sm:$0xf] %vm2092, %v2050
      %2116 = vst.msk [vmem:[%s245 + $0x5c] sm:$0xf] %vm2092, %v2051
      %2117 = vst.msk [vmem:[%s245 + $0x60] sm:$0xf] %vm2092, %v2052
      %2118 = vst.msk [vmem:[%s245 + $0x64] sm:$0xf] %vm2092, %v2053
      %2119 = vst.msk [vmem:[%s245 + $0x68] sm:$0xf] %vm2092, %v2054
      %2120 = vst.msk [vmem:[%s245 + $0x6c] sm:$0xf] %vm2092, %v2055
      %2121 = vst.msk [vmem:[%s245 + $0x70] sm:$0xf] %vm2092, %v2056
      %2122 = vst.msk [vmem:[%s245 + $0x74] sm:$0xf] %vm2092, %v2057
      %2123 = vst.msk [vmem:[%s245 + $0x78] sm:$0xf] %vm2092, %v2058
      %2124 = vst.msk [vmem:[%s245 + $0x7c] sm:$0xf] %vm2092, %v2059
      %v2125 = vsel %vm1466, %v1838, 0.0
      %v2126 = vsel %vm1466, %v1841, 0.0
      %v2127 = vadd.f32 %v2125, %v2126
      %v2128 = vsel %vm1466, %v1846, 0.0
      %v2129 = vadd.f32 %v2127, %v2128
      %v2130 = vsel %vm1466, %v1849, 0.0
      %v2131 = vadd.f32 %v2129, %v2130
      %v2132 = vsel %vm1466, %v1854, 0.0
      %v2133 = vadd.f32 %v2131, %v2132
      %v2134 = vsel %vm1466, %v1857, 0.0
      %v2135 = vadd.f32 %v2133, %v2134
      %v2136 = vsel %vm1466, %v1862, 0.0
      %v2137 = vadd.f32 %v2135, %v2136
      %v2138 = vsel %vm1466, %v1865, 0.0
      %v2139 = vadd.f32 %v2137, %v2138
      %v2140 = vsel %vm1466, %v1870, 0.0
      %v2141 = vadd.f32 %v2139, %v2140
      %v2142 = vsel %vm1466, %v1873, 0.0
      %v2143 = vadd.f32 %v2141, %v2142
      %v2144 = vsel %vm1466, %v1878, 0.0
      %v2145 = vadd.f32 %v2143, %v2144
      %v2146 = vsel %vm1466, %v1881, 0.0
      %v2147 = vadd.f32 %v2145, %v2146
      %v2148 = vsel %vm1466, %v1886, 0.0
      %v2149 = vadd.f32 %v2147, %v2148
      %v2150 = vsel %vm1466, %v1889, 0.0
      %v2151 = vadd.f32 %v2149, %v2150
      %v2152 = vsel %vm1466, %v1894, 0.0
      %v2153 = vadd.f32 %v2151, %v2152
      %v2154 = vsel %vm1466, %v1897, 0.0
      %v2155 = vadd.f32 %v2153, %v2154
      %v2156 = vsel %vm1466, %v1902, 0.0
      %v2157 = vadd.f32 %v2155, %v2156
      %v2158 = vsel %vm1466, %v1905, 0.0
      %v2159 = vadd.f32 %v2157, %v2158
      %v2160 = vsel %vm1466, %v1910, 0.0
      %v2161 = vadd.f32 %v2159, %v2160
      %v2162 = vsel %vm1466, %v1913, 0.0
      %v2163 = vadd.f32 %v2161, %v2162
      %v2164 = vsel %vm1466, %v1918, 0.0
      %v2165 = vadd.f32 %v2163, %v2164
      %v2166 = vsel %vm1466, %v1921, 0.0
      %v2167 = vadd.f32 %v2165, %v2166
      %v2168 = vsel %vm1466, %v1926, 0.0
      %v2169 = vadd.f32 %v2167, %v2168
      %v2170 = vsel %vm1466, %v1929, 0.0
      %v2171 = vadd.f32 %v2169, %v2170
      %v2172 = vsel %vm1466, %v1934, 0.0
      %v2173 = vadd.f32 %v2171, %v2172
      %v2174 = vsel %vm1466, %v1937, 0.0
      %v2175 = vadd.f32 %v2173, %v2174
      %v2176 = vsel %vm1466, %v1942, 0.0
      %v2177 = vadd.f32 %v2175, %v2176
      %v2178 = vsel %vm1466, %v1945, 0.0
      %v2179 = vadd.f32 %v2177, %v2178
      %v2180 = vsel %vm1466, %v1950, 0.0
      %v2181 = vadd.f32 %v2179, %v2180
      %v2182 = vsel %vm1466, %v1953, 0.0
      %v2183 = vadd.f32 %v2181, %v2182
      %v2184 = vsel %vm1466, %v1958, 0.0
      %v2185 = vadd.f32 %v2183, %v2184
      %v2186 = vsel %vm1466, %v1961, 0.0
      %v2187 = vadd.f32 %v2185, %v2186
      %v2188 = vrot.slane %v2187, 4
      %v2189 = vadd.f32 %v2187, %v2188
      %v2190 = vrot.slane %v2189, 2
      %v2191 = vadd.f32 %v2189, %v2190
      %v2192 = vrot.slane %v2191, 1
      %v2193 = vadd.f32 %v2191, %v2192
      %v2194 = vmul.f32 %v2193, 0.00390625
      %v2195 = vsub.f32 %v1838, %v2194
      %v2196 = vsub.f32 %v1841, %v2194
      %v2197 = vsub.f32 %v1846, %v2194
      %v2198 = vsub.f32 %v1849, %v2194
      %v2199 = vsub.f32 %v1854, %v2194
      %v2200 = vsub.f32 %v1857, %v2194
      %v2201 = vsub.f32 %v1862, %v2194
      %v2202 = vsub.f32 %v1865, %v2194
      %v2203 = vsub.f32 %v1870, %v2194
      %v2204 = vsub.f32 %v1873, %v2194
      %v2205 = vsub.f32 %v1878, %v2194
      %v2206 = vsub.f32 %v1881, %v2194
      %v2207 = vsub.f32 %v1886, %v2194
      %v2208 = vsub.f32 %v1889, %v2194
      %v2209 = vsub.f32 %v1894, %v2194
      %v2210 = vsub.f32 %v1897, %v2194
      %v2211 = vsub.f32 %v1902, %v2194
      %v2212 = vsub.f32 %v1905, %v2194
      %v2213 = vsub.f32 %v1910, %v2194
      %v2214 = vsub.f32 %v1913, %v2194
      %v2215 = vsub.f32 %v1918, %v2194
      %v2216 = vsub.f32 %v1921, %v2194
      %v2217 = vsub.f32 %v1926, %v2194
      %v2218 = vsub.f32 %v1929, %v2194
      %v2219 = vsub.f32 %v1934, %v2194
      %v2220 = vsub.f32 %v1937, %v2194
      %v2221 = vsub.f32 %v1942, %v2194
      %v2222 = vsub.f32 %v1945, %v2194
      %v2223 = vsub.f32 %v1950, %v2194
      %v2224 = vsub.f32 %v1953, %v2194
      %v2225 = vsub.f32 %v1958, %v2194
      %v2226 = vsub.f32 %v1961, %v2194
      %vm2227 = vcmask 57344
      %2228 = vst.msk [vmem:[%s249] sm:$0x1] %vm2227, %v2193
      %v2229 = vmul.f32 %v2195, %v2195
      %v2230 = vmul.f32 %v2196, %v2196
      %v2231 = vmul.f32 %v2197, %v2197
      %v2232 = vmul.f32 %v2198, %v2198
      %v2233 = vmul.f32 %v2199, %v2199
      %v2234 = vmul.f32 %v2200, %v2200
      %v2235 = vmul.f32 %v2201, %v2201
      %v2236 = vmul.f32 %v2202, %v2202
      %v2237 = vmul.f32 %v2203, %v2203
      %v2238 = vmul.f32 %v2204, %v2204
      %v2239 = vmul.f32 %v2205, %v2205
      %v2240 = vmul.f32 %v2206, %v2206
      %v2241 = vmul.f32 %v2207, %v2207
      %v2242 = vmul.f32 %v2208, %v2208
      %v2243 = vmul.f32 %v2209, %v2209
      %v2244 = vmul.f32 %v2210, %v2210
      %v2245 = vmul.f32 %v2211, %v2211
      %v2246 = vmul.f32 %v2212, %v2212
      %v2247 = vmul.f32 %v2213, %v2213
      %v2248 = vmul.f32 %v2214, %v2214
      %v2249 = vmul.f32 %v2215, %v2215
      %v2250 = vmul.f32 %v2216, %v2216
      %v2251 = vmul.f32 %v2217, %v2217
      %v2252 = vmul.f32 %v2218, %v2218
      %v2253 = vmul.f32 %v2219, %v2219
      %v2254 = vmul.f32 %v2220, %v2220
      %v2255 = vmul.f32 %v2221, %v2221
      %v2256 = vmul.f32 %v2222, %v2222
      %v2257 = vmul.f32 %v2223, %v2223
      %v2258 = vmul.f32 %v2224, %v2224
      %v2259 = vmul.f32 %v2225, %v2225
      %v2260 = vmul.f32 %v2226, %v2226
      %v2261 = vsel %vm1466, %v2229, 0.0
      %v2262 = vsel %vm1466, %v2230, 0.0
      %v2263 = vadd.f32 %v2261, %v2262
      %v2264 = vsel %vm1466, %v2231, 0.0
      %v2265 = vadd.f32 %v2263, %v2264
      %v2266 = vsel %vm1466, %v2232, 0.0
      %v2267 = vadd.f32 %v2265, %v2266
      %v2268 = vsel %vm1466, %v2233, 0.0
      %v2269 = vadd.f32 %v2267, %v2268
      %v2270 = vsel %vm1466, %v2234, 0.0
      %v2271 = vadd.f32 %v2269, %v2270
      %v2272 = vsel %vm1466, %v2235, 0.0
      %v2273 = vadd.f32 %v2271, %v2272
      %v2274 = vsel %vm1466, %v2236, 0.0
      %v2275 = vadd.f32 %v2273, %v2274
      %v2276 = vsel %vm1466, %v2237, 0.0
      %v2277 = vadd.f32 %v2275, %v2276
      %v2278 = vsel %vm1466, %v2238, 0.0
      %v2279 = vadd.f32 %v2277, %v2278
      %v2280 = vsel %vm1466, %v2239, 0.0
      %v2281 = vadd.f32 %v2279, %v2280
      %v2282 = vsel %vm1466, %v2240, 0.0
      %v2283 = vadd.f32 %v2281, %v2282
      %v2284 = vsel %vm1466, %v2241, 0.0
      %v2285 = vadd.f32 %v2283, %v2284
      %v2286 = vsel %vm1466, %v2242, 0.0
      %v2287 = vadd.f32 %v2285, %v2286
      %v2288 = vsel %vm1466, %v2243, 0.0
      %v2289 = vadd.f32 %v2287, %v2288
      %v2290 = vsel %vm1466, %v2244, 0.0
      %v2291 = vadd.f32 %v2289, %v2290
      %v2292 = vsel %vm1466, %v2245, 0.0
      %v2293 = vadd.f32 %v2291, %v2292
      %v2294 = vsel %vm1466, %v2246, 0.0
      %v2295 = vadd.f32 %v2293, %v2294
      %v2296 = vsel %vm1466, %v2247, 0.0
      %v2297 = vadd.f32 %v2295, %v2296
      %v2298 = vsel %vm1466, %v2248, 0.0
      %v2299 = vadd.f32 %v2297, %v2298
      %v2300 = vsel %vm1466, %v2249, 0.0
      %v2301 = vadd.f32 %v2299, %v2300
      %v2302 = vsel %vm1466, %v2250, 0.0
      %v2303 = vadd.f32 %v2301, %v2302
      %v2304 = vsel %vm1466, %v2251, 0.0
      %v2305 = vadd.f32 %v2303, %v2304
      %v2306 = vsel %vm1466, %v2252, 0.0
      %v2307 = vadd.f32 %v2305, %v2306
      %v2308 = vsel %vm1466, %v2253, 0.0
      %v2309 = vadd.f32 %v2307, %v2308
      %v2310 = vsel %vm1466, %v2254, 0.0
      %v2311 = vadd.f32 %v2309, %v2310
      %v2312 = vsel %vm1466, %v2255, 0.0
      %v2313 = vadd.f32 %v2311, %v2312
      %v2314 = vsel %vm1466, %v2256, 0.0
      %v2315 = vadd.f32 %v2313, %v2314
      %v2316 = vsel %vm1466, %v2257, 0.0
      %v2317 = vadd.f32 %v2315, %v2316
      %v2318 = vsel %vm1466, %v2258, 0.0
      %v2319 = vadd.f32 %v2317, %v2318
      %v2320 = vsel %vm1466, %v2259, 0.0
      %v2321 = vadd.f32 %v2319, %v2320
      %v2322 = vsel %vm1466, %v2260, 0.0
      %v2323 = vadd.f32 %v2321, %v2322
      %v2324 = vrot.slane %v2323, 4
      %v2325 = vadd.f32 %v2323, %v2324
      %v2326 = vrot.slane %v2325, 2
      %v2327 = vadd.f32 %v2325, %v2326
      %v2328 = vrot.slane %v2327, 1
      %v2329 = vadd.f32 %v2327, %v2328
      %2330 = vst.msk [vmem:[%s249 + $0x1] sm:$0x1] %vm2227, %v2329
      %p2331 = scmp.lt.s32.totalorder %s17, 1
      %s2332 = scalar_select %p2331, %s17, 1
      %s2333 = smul.addr %s2332, 32
      %s2334 = smul.addr %s2333, 4
      %s2335 = scalar_lea.vmem %s4, %s2334
      %p2336 = scmp.lt.s32.totalorder %s17, 1
      %s2337 = scalar_select %p2336, %s17, 1
      %s2338 = smul.addr %s2337, 2
      %s2339 = scalar_lea.vmem %s5, %s2338
      // Predicated region
      $region37: #{unet_block_forward.4} parent=35 // pred_check
        %p2340 = pneg %p129
      $region38: #{unet_block_forward.4} parent=35 // pred_check_branch
        %2342 = sbr.rel (%p2340) target = $region40
      $region39: #{unet_block_forward.4} parent=35 // pred_region
        _
      $region40: #{unet_block_forward.4} parent=35 // pred_fallthru
        _
      // Predicated region
      $region41: #{unet_block_forward.4} parent=35 // pred_check
        %p2343 = pneg %p155
      $region42: #{unet_block_forward.4} parent=35 // pred_check_branch
        %2345 = sbr.rel (%p2343) target = $region44
      $region43: #{unet_block_forward.4} parent=35 // pred_region
        _
      $region44: #{unet_block_forward.4} parent=35 // pred_fallthru
        _
    $region36: #{unet_block_forward.4} parent=5 // pred_fallthru
      _
    %p2346 = scmp.le.s32.totalorder 2, %s12
    // Predicated region
    $region45: #{unet_block_forward.4} parent=5 // pred_check
      %p2347 = pneg %p2346
    $region46: #{unet_block_forward.4} parent=5 // pred_check_branch
      %2349 = sbr.rel (%p2347) target = $region48
    $region47: #{unet_block_forward.4} parent=5 // pred_region
      %s2350 = ssub.s32 %s12, 2
      // Predicated region
      $region49: #{unet_block_forward.4} parent=47 // pred_check
        %p2351 = pneg %p135
      $region50: #{unet_block_forward.4} parent=47 // pred_check_branch
        %2353 = sbr.rel (%p2351) target = $region52
      $region51: #{unet_block_forward.4} parent=47 // pred_region
        %p2354 = scmp.lt.s32.totalorder %s18, 1
        %s2355 = scalar_select %p2354, %s18, 1
        %s2356 = smul.addr %s2355, 32
        %s2357 = smul.addr %s2356, 4
        %s2358 = scalar_lea.vmem %s4, %s2357
      $region52: #{unet_block_forward.4} parent=47 // pred_fallthru
        _
      // Predicated region
      $region53: #{unet_block_forward.4} parent=47 // pred_check
        %p2359 = pneg %p161
      $region54: #{unet_block_forward.4} parent=47 // pred_check_branch
        %2361 = sbr.rel (%p2359) target = $region56
      $region55: #{unet_block_forward.4} parent=47 // pred_region
        %p2362 = scmp.lt.s32.totalorder %s18, 1
        %s2363 = scalar_select %p2362, %s18, 1
        %s2364 = smul.addr %s2363, 2
        %s2365 = scalar_lea.vmem %s5, %s2364
      $region56: #{unet_block_forward.4} parent=47 // pred_fallthru
        _
    $region48: #{unet_block_forward.4} parent=5 // pred_fallthru
      _
  $region6: #{unet_block_forward.4} parent=0 // loop_footer
    %s16 = sadd.s32 1, %s12
  $region7: #{unet_block_forward.4} parent=0 // loop_footer_branch
    %11 = sbr.rel target = $region3
  $region8: #{unet_block_forward.4} parent=0 // loop_exit
    _

</llo_original>
